<compile_context>
chip_gen: v5e
topology: v5e:2x2
jax: 0.10.0
libtpu: 0.0.40
codegen_flags: <defaults>
</compile_context>

<pallas_src>
import functools

import numpy as np
import jax
import jax.numpy as jnp
from jax.experimental import pallas as pl
from jax.experimental.pallas import tpu as pltpu

BN_EPS = 1e-5

# Model hyper-parameters (small but structurally faithful).
NUM_BLOCKS_PER_STAGE = [2, 1, 1, 1]
WIDTH_MULTIPLIERS = [0.25, 0.25, 0.25, 0.25]
NUM_CLASSES = 16


# ----------------------------------------------------------------------------
# Fused Pallas kernel: whole batch, whole network, one invocation.
# ----------------------------------------------------------------------------
def _make_fused_kernel(mo_pads):
    ng = len(mo_pads)          # number of gather-style blocks (all but block 0)
    nb = ng + 1                # total number of MobileOne blocks

    def kernel(*refs):
        p0_ref = refs[0]                                   # (M0, B*27)  bf16
        g_refs = refs[1:1 + ng]                            # (9*Mo_p, Mi) bf16
        w_refs = refs[1 + ng:1 + ng + nb]                  # block-diag weights
        b_refs = refs[1 + ng + nb:1 + ng + 2 * nb]         # (1, B*Cout) f32
        pool_ref = refs[1 + ng + 2 * nb]                   # (M_last_p, 1) f32
        lw_ref = refs[1 + ng + 2 * nb + 1]                 # (B*C, B*NC) bf16
        lb_ref = refs[1 + ng + 2 * nb + 2]                 # (1, B*NC)   f32
        o_ref = refs[-1]                                   # (1, B*NC)   f32

        # Block 0: wrapper-built im2col patches -> one matmul against the
        # batch-block-diagonal folded weight.  Result layout (M0, B*C0).
        x = jnp.dot(p0_ref[...], w_refs[0][...],
                    preferred_element_type=jnp.float32)
        x = jnp.maximum(x + b_refs[0][...], 0.0)

        # Blocks 1..: one stacked 0/1 selection matmul (taps along rows),
        # 9 aligned row-slices -> lane concat -> one deep-K weight matmul.
        for k in range(ng):
            mo_p = mo_pads[k]
            r = jnp.dot(g_refs[k][...], x.astype(jnp.bfloat16),
                        preferred_element_type=jnp.float32)   # (9*Mo_p, B*Cin)
            if mo_p % 16 == 0:
                # Slices stay bf16 sublane-tile aligned -> halve vreg footprint.
                r = r.astype(jnp.bfloat16)
            taps = [r[t * mo_p:(t + 1) * mo_p, :] for t in range(9)]
            patches = jnp.concatenate(taps, axis=-1)          # (Mo_p, 9*B*Cin)
            x = jnp.dot(patches.astype(jnp.bfloat16), w_refs[k + 1][...],
                        preferred_element_type=jnp.float32)   # (Mo_p, B*Cout)
            x = jnp.maximum(x + b_refs[k + 1][...], 0.0)

        # Global average pool as a weighted row-sum (padded rows weigh 0),
        # then the batch-block-diagonal linear head.  Single output store.
        pooled = jnp.sum(x * pool_ref[...], axis=0, keepdims=True)   # (1, B*C)
        logits = jnp.dot(pooled.astype(jnp.bfloat16), lw_ref[...],
                         preferred_element_type=jnp.float32) + lb_ref[...]
        o_ref[...] = logits.astype(o_ref.dtype)

    return kernel


# ----------------------------------------------------------------------------
# Wrapper glue: block-0 im2col, stacked 0/1 selection matrices,
# batch-block-diagonal weight expansion.
# ----------------------------------------------------------------------------
def _im2col_first_block(x_nhwc, stride):
    """im2col of the HBM input; output rows are spatial, lanes are (b, tap, ci)."""
    n, h, w, c = x_nhwc.shape
    ho = (h + 2 - 3) // stride + 1
    wo = (w + 2 - 3) // stride + 1
    xp = jnp.pad(x_nhwc, ((0, 0), (1, 1), (1, 1), (0, 0)))
    cols = []
    for kh in range(3):
        for kw in range(3):
            sl = xp[:, kh:kh + (ho - 1) * stride + 1:stride,
                    kw:kw + (wo - 1) * stride + 1:stride, :]
            cols.append(sl)
    patches = jnp.concatenate(cols, axis=-1)                 # (n, ho, wo, 9c)
    patches = patches.reshape(n, ho * wo, 9 * c)
    patches = jnp.transpose(patches, (1, 0, 2)).reshape(ho * wo, n * 9 * c)
    return patches, ho, wo


def _stacked_selection_np(h_in, w_in, stride, mi_rows):
    """Stacked 0/1 gather matrix G (9*Mo_p, Mi) with zero padding folded in.
    Row block t (= kh*3+kw) gathers tap t of a 3x3/stride-s conv; output rows
    are padded to a multiple of 8 so per-tap slices stay sublane-aligned."""
    ho = (h_in + 2 - 3) // stride + 1
    wo = (w_in + 2 - 3) // stride + 1
    mo = ho * wo
    mo_p = ((mo + 7) // 8) * 8
    g = np.zeros((9 * mo_p, mi_rows), np.float32)
    for kh in range(3):
        for kw in range(3):
            t = kh * 3 + kw
            for i in range(ho):
                r = stride * i + kh - 1
                if r < 0 or r >= h_in:
                    continue
                for j in range(wo):
                    c = stride * j + kw - 1
                    if 0 <= c < w_in:
                        g[t * mo_p + i * wo + j, r * w_in + c] = 1.0
    return g, ho, wo, mo, mo_p


@functools.partial(jax.jit, static_argnums=(2,))
def mobileone_forward(x_nchw, params, cfgs):
    x = jnp.transpose(x_nchw, (0, 2, 3, 1)).astype(jnp.float32)  # NCHW -> NHWC
    n = x.shape[0]
    ncls = params["linear_w_t"].shape[-1]
    feat = params["linear_w_t"].shape[0]
    eye = jnp.eye(n, dtype=jnp.float32)

    # Block 0: wrapper-side im2col (its input lives in HBM anyway).
    p0, ho, wo = _im2col_first_block(x, cfgs[0][2])
    p0 = p0.astype(jnp.bfloat16)

    # Blocks 1..: compile-time stacked selection matrices (0/1, exact in bf16).
    gs, mo_pads = [], []
    mi_rows = ho * wo
    for (_, _, stride) in cfgs[1:]:
        g_np, ho, wo, mo, mo_p = _stacked_selection_np(ho, wo, stride, mi_rows)
        gs.append(jnp.asarray(g_np, dtype=jnp.bfloat16))
        mo_pads.append(mo_p)
        mi_rows = mo_p
    m_last_real = ho * wo
    pool_np = np.zeros((mi_rows, 1), np.float32)
    pool_np[:m_last_real, 0] = 1.0 / m_last_real
    pool = jnp.asarray(pool_np)

    # Batch-block-diagonal weights / batch-tiled biases (batch packed on lanes).
    ws_bd, bs_bd = [], []
    for idx, ((w2, bias), (cin, cout, _)) in enumerate(zip(params["blocks"], cfgs)):
        if idx == 0:
            # p0 lanes are (b, tap, ci) -> rows ordered (b, tap*ci).
            wbd = jnp.einsum("io,bc->bico", w2, eye).reshape(n * 9 * cin, n * cout)
        else:
            # patch lanes are (tap, b, ci) -> rows ordered (tap, b, ci).
            w9 = w2.reshape(9, cin, cout)
            wbd = jnp.einsum("tio,bc->tbico", w9, eye).reshape(9 * n * cin, n * cout)
        ws_bd.append(wbd.astype(jnp.bfloat16))
        bs_bd.append(jnp.tile(bias.reshape(1, cout), (1, n)).astype(jnp.float32))

    lw_bd = jnp.einsum("co,bd->bcdo", params["linear_w_t"], eye)
    lw_bd = lw_bd.reshape(n * feat, n * ncls).astype(jnp.bfloat16)
    lb_bd = jnp.tile(params["linear_b"].reshape(1, ncls), (1, n)).astype(jnp.float32)

    inputs = [p0, *gs, *ws_bd, *bs_bd, pool, lw_bd, lb_bd]

    # Advisory cost estimate for XLA's scheduler.
    flops = 2 * p0.shape[0] * p0.shape[1] * ws_bd[0].shape[1]
    for g, wbd, mo_p in zip(gs, ws_bd[1:], mo_pads):
        flops += 2 * g.shape[0] * g.shape[1] * (wbd.shape[0] // 9)   # gather
        flops += 2 * mo_p * wbd.shape[0] * wbd.shape[1]              # weights
    flops += 2 * lw_bd.shape[0] * lw_bd.shape[1]
    bytes_accessed = sum(int(a.size) * a.dtype.itemsize for a in inputs)
    bytes_accessed += n * ncls * 4

    # Single grid step: whole-array VMEM blocks (total footprint ~1.5 MB),
    # one launch, one lane-contiguous logits store.
    out = pl.pallas_call(
        _make_fused_kernel(tuple(mo_pads)),
        out_shape=jax.ShapeDtypeStruct((1, n * ncls), jnp.float32),
        cost_estimate=pl.CostEstimate(flops=int(flops), transcendentals=0,
                                      bytes_accessed=int(bytes_accessed)),
    )(*inputs)
    return out.reshape(n, ncls)


# ----------------------------------------------------------------------------
# Deterministic parameter construction (structure from MobileOne.__init__)
# ----------------------------------------------------------------------------
def _kaiming_fan_out(key, cout, cin, kh, kw):
    fan_out = cout * kh * kw
    std = (2.0 / fan_out) ** 0.5
    return std * jax.random.normal(key, (cout, cin, kh, kw), dtype=jnp.float32)


def _fold_block_params(key, cin, cout, stride):
    """Fold conv3x3+BN, conv1x1+BN and the BN skip into one 3x3 conv + bias,
    laid out as an im2col weight matrix of shape (9*cin, cout)."""
    k3, k1 = jax.random.split(key)
    bn_scale = jnp.float32(1.0 / np.sqrt(1.0 + BN_EPS))   # gamma=1,var=1,mean=0
    w = _kaiming_fan_out(k3, cout, cin, 3, 3) * bn_scale
    w1 = _kaiming_fan_out(k1, cout, cin, 1, 1) * bn_scale
    w = w.at[:, :, 1, 1].add(w1[:, :, 0, 0])
    if cin == cout and stride == 1:                        # rbr_skip branch
        w = w.at[:, :, 1, 1].add(jnp.eye(cout, dtype=jnp.float32) * bn_scale)
    # OIHW -> (kh, kw, cin, cout) -> (9*cin, cout): tap-major, channel-minor.
    w2 = jnp.transpose(w, (2, 3, 1, 0)).reshape(9 * cin, cout)
    bias = jnp.zeros((1, cout), jnp.float32)
    return w2, bias


def build_block_configs():
    cfgs = []
    in_planes = min(64, int(64 * WIDTH_MULTIPLIERS[0]))
    cfgs.append((3, in_planes, 2))                         # stage0
    stage_planes = [int(64 * WIDTH_MULTIPLIERS[0]), int(128 * WIDTH_MULTIPLIERS[1]),
                    int(256 * WIDTH_MULTIPLIERS[2]), int(512 * WIDTH_MULTIPLIERS[3])]
    for planes, nblocks in zip(stage_planes, NUM_BLOCKS_PER_STAGE):
        strides = [2] + [1] * (nblocks - 1)
        for s in strides:
            cfgs.append((in_planes, planes, s))
            in_planes = planes
    return tuple(cfgs)


# ----------------------------------------------------------------------------
# Pure-JAX reference (numerical validation of the fused Pallas kernel)
# ----------------------------------------------------------------------------
def reference_forward(x_nchw, params, cfgs):
    x = jnp.transpose(x_nchw, (0, 2, 3, 1)).astype(jnp.float32)
    for (w2, b), (cin, cout, s) in zip(params["blocks"], cfgs):
        w_hwio = w2.reshape(3, 3, cin, cout)
        x = jax.lax.conv_general_dilated(
            x, w_hwio, (s, s), ((1, 1), (1, 1)),
            dimension_numbers=("NHWC", "HWIO", "NHWC"),
            precision=jax.lax.Precision.HIGHEST)
        x = jnp.maximum(x + b.reshape(1, 1, 1, cout), 0.0)
    pooled = jnp.mean(x, axis=(1, 2))
    return pooled @ params["linear_w_t"] + params["linear_b"]


if __name__ == "__main__":
    key = jax.random.PRNGKey(0)
    key, xk = jax.random.split(key)
    x = jax.random.normal(xk, (2, 3, 32, 32), dtype=jnp.float32)   # NCHW input

    cfgs = build_block_configs()
    blocks = []
    for (cin, cout, s) in cfgs:
        key, bk = jax.random.split(key)
        blocks.append(_fold_block_params(bk, cin, cout, s))

    key, lk = jax.random.split(key)
    feat = cfgs[-1][1]
    lin_w = 0.01 * jax.random.normal(lk, (NUM_CLASSES, feat), dtype=jnp.float32)
    params = {
        "blocks": blocks,
        "linear_w_t": lin_w.T,                    # (C, NC) so y = x @ W.T + b
        "linear_b": jnp.zeros((NUM_CLASSES,), jnp.float32),
    }

    out = jax.block_until_ready(mobileone_forward(x, params, cfgs))
    assert out.shape == (2, NUM_CLASSES), out.shape

    ref = jax.block_until_ready(reference_forward(x, params, cfgs))
    # bf16 MXU operands with f32 accumulation -> looser tolerance than pure f32.
    assert jnp.allclose(out, ref, atol=3e-2, rtol=3e-2), (
        float(jnp.max(jnp.abs(out - ref))))

    print("KERNEL_OK")
</pallas_src>

<mosaic_0001>
module attributes {stable_mosaic.version = 11 : i64} {
  func.func @kernel(%arg0: memref<256x54xbf16, #tpu.memory_space<vmem>>, %arg1: memref<576x256xbf16, #tpu.memory_space<vmem>>, %arg2: memref<576x64xbf16, #tpu.memory_space<vmem>>, %arg3: memref<144x64xbf16, #tpu.memory_space<vmem>>, %arg4: memref<72x16xbf16, #tpu.memory_space<vmem>>, %arg5: memref<72x8xbf16, #tpu.memory_space<vmem>>, %arg6: memref<54x32xbf16, #tpu.memory_space<vmem>>, %arg7: memref<288x32xbf16, #tpu.memory_space<vmem>>, %arg8: memref<288x32xbf16, #tpu.memory_space<vmem>>, %arg9: memref<288x64xbf16, #tpu.memory_space<vmem>>, %arg10: memref<576x128xbf16, #tpu.memory_space<vmem>>, %arg11: memref<1152x256xbf16, #tpu.memory_space<vmem>>, %arg12: memref<1x32xf32, #tpu.memory_space<vmem>>, %arg13: memref<1x32xf32, #tpu.memory_space<vmem>>, %arg14: memref<1x32xf32, #tpu.memory_space<vmem>>, %arg15: memref<1x64xf32, #tpu.memory_space<vmem>>, %arg16: memref<1x128xf32, #tpu.memory_space<vmem>>, %arg17: memref<1x256xf32, #tpu.memory_space<vmem>>, %arg18: memref<8x1xf32, #tpu.memory_space<vmem>>, %arg19: memref<256x32xbf16, #tpu.memory_space<vmem>>, %arg20: memref<1x32xf32, #tpu.memory_space<vmem>>, %arg21: memref<1x32xf32, #tpu.memory_space<vmem>>) attributes {dimension_semantics = [], scalar_prefetch = 0 : i64, scratch_operands = 0 : i64, tpu.core_type = #tpu.core_type<tc>} {
    %c0 = arith.constant 0 : index
    %c0_0 = arith.constant 0 : index
    %0 = vector.load %arg0[%c0, %c0_0] : memref<256x54xbf16, #tpu.memory_space<vmem>>, vector<256x54xbf16>
    %c0_1 = arith.constant 0 : index
    %c0_2 = arith.constant 0 : index
    %1 = vector.load %arg6[%c0_1, %c0_2] : memref<54x32xbf16, #tpu.memory_space<vmem>>, vector<54x32xbf16>
    %cst = arith.constant dense<0.000000e+00> : vector<256x32xf32>
    %2 = tpu.matmul %0, %1, %cst {dimension_numbers = #tpu.dot_dimension_numbers<[1], [0], [0], [1], [0, 0, 1, 1], [], []>} : vector<256x54xbf16>, vector<54x32xbf16>, vector<256x32xf32> -> vector<256x32xf32>
    %c0_3 = arith.constant 0 : index
    %c0_4 = arith.constant 0 : index
    %3 = vector.load %arg12[%c0_3, %c0_4] : memref<1x32xf32, #tpu.memory_space<vmem>>, vector<1x32xf32>
    %4 = vector.broadcast %3 : vector<1x32xf32> to vector<256x32xf32>
    %5 = arith.addf %2, %4 : vector<256x32xf32>
    %cst_5 = arith.constant 0.000000e+00 : f32
    %6 = vector.broadcast %cst_5 : f32 to vector<256x32xf32>
    %7 = arith.maximumf %5, %6 : vector<256x32xf32>
    %c0_6 = arith.constant 0 : index
    %c0_7 = arith.constant 0 : index
    %8 = vector.load %arg1[%c0_6, %c0_7] : memref<576x256xbf16, #tpu.memory_space<vmem>>, vector<576x256xbf16>
    %9 = arith.truncf %7 : vector<256x32xf32> to vector<256x32xbf16>
    %cst_8 = arith.constant dense<0.000000e+00> : vector<576x32xf32>
    %10 = tpu.matmul %8, %9, %cst_8 {dimension_numbers = #tpu.dot_dimension_numbers<[1], [0], [0], [1], [0, 0, 1, 1], [], []>} : vector<576x256xbf16>, vector<256x32xbf16>, vector<576x32xf32> -> vector<576x32xf32>
    %11 = arith.truncf %10 : vector<576x32xf32> to vector<576x32xbf16>
    %12 = vector.extract_strided_slice %11 {offsets = [0, 0], sizes = [64, 32], strides = [1, 1]} : vector<576x32xbf16> to vector<64x32xbf16>
    %13 = vector.extract_strided_slice %11 {offsets = [64, 0], sizes = [64, 32], strides = [1, 1]} : vector<576x32xbf16> to vector<64x32xbf16>
    %14 = vector.extract_strided_slice %11 {offsets = [128, 0], sizes = [64, 32], strides = [1, 1]} : vector<576x32xbf16> to vector<64x32xbf16>
    %15 = vector.extract_strided_slice %11 {offsets = [192, 0], sizes = [64, 32], strides = [1, 1]} : vector<576x32xbf16> to vector<64x32xbf16>
    %16 = vector.extract_strided_slice %11 {offsets = [256, 0], sizes = [64, 32], strides = [1, 1]} : vector<576x32xbf16> to vector<64x32xbf16>
    %17 = vector.extract_strided_slice %11 {offsets = [320, 0], sizes = [64, 32], strides = [1, 1]} : vector<576x32xbf16> to vector<64x32xbf16>
    %18 = vector.extract_strided_slice %11 {offsets = [384, 0], sizes = [64, 32], strides = [1, 1]} : vector<576x32xbf16> to vector<64x32xbf16>
    %19 = vector.extract_strided_slice %11 {offsets = [448, 0], sizes = [64, 32], strides = [1, 1]} : vector<576x32xbf16> to vector<64x32xbf16>
    %20 = vector.extract_strided_slice %11 {offsets = [512, 0], sizes = [64, 32], strides = [1, 1]} : vector<576x32xbf16> to vector<64x32xbf16>
    %21 = tpu.concatenate %12, %13, %14, %15, %16, %17, %18, %19, %20 in 1 : vector<64x32xbf16>, vector<64x32xbf16>, vector<64x32xbf16>, vector<64x32xbf16>, vector<64x32xbf16>, vector<64x32xbf16>, vector<64x32xbf16>, vector<64x32xbf16>, vector<64x32xbf16> -> vector<64x288xbf16>
    %c0_9 = arith.constant 0 : index
    %c0_10 = arith.constant 0 : index
    %22 = vector.load %arg7[%c0_9, %c0_10] : memref<288x32xbf16, #tpu.memory_space<vmem>>, vector<288x32xbf16>
    %cst_11 = arith.constant dense<0.000000e+00> : vector<64x32xf32>
    %23 = tpu.matmul %21, %22, %cst_11 {dimension_numbers = #tpu.dot_dimension_numbers<[1], [0], [0], [1], [0, 0, 1, 1], [], []>} : vector<64x288xbf16>, vector<288x32xbf16>, vector<64x32xf32> -> vector<64x32xf32>
    %c0_12 = arith.constant 0 : index
    %c0_13 = arith.constant 0 : index
    %24 = vector.load %arg13[%c0_12, %c0_13] : memref<1x32xf32, #tpu.memory_space<vmem>>, vector<1x32xf32>
    %25 = vector.broadcast %24 : vector<1x32xf32> to vector<64x32xf32>
    %26 = arith.addf %23, %25 : vector<64x32xf32>
    %cst_14 = arith.constant 0.000000e+00 : f32
    %27 = vector.broadcast %cst_14 : f32 to vector<64x32xf32>
    %28 = arith.maximumf %26, %27 : vector<64x32xf32>
    %c0_15 = arith.constant 0 : index
    %c0_16 = arith.constant 0 : index
    %29 = vector.load %arg2[%c0_15, %c0_16] : memref<576x64xbf16, #tpu.memory_space<vmem>>, vector<576x64xbf16>
    %30 = arith.truncf %28 : vector<64x32xf32> to vector<64x32xbf16>
    %cst_17 = arith.constant dense<0.000000e+00> : vector<576x32xf32>
    %31 = tpu.matmul %29, %30, %cst_17 {dimension_numbers = #tpu.dot_dimension_numbers<[1], [0], [0], [1], [0, 0, 1, 1], [], []>} : vector<576x64xbf16>, vector<64x32xbf16>, vector<576x32xf32> -> vector<576x32xf32>
    %32 = arith.truncf %31 : vector<576x32xf32> to vector<576x32xbf16>
    %33 = vector.extract_strided_slice %32 {offsets = [0, 0], sizes = [64, 32], strides = [1, 1]} : vector<576x32xbf16> to vector<64x32xbf16>
    %34 = vector.extract_strided_slice %32 {offsets = [64, 0], sizes = [64, 32], strides = [1, 1]} : vector<576x32xbf16> to vector<64x32xbf16>
    %35 = vector.extract_strided_slice %32 {offsets = [128, 0], sizes = [64, 32], strides = [1, 1]} : vector<576x32xbf16> to vector<64x32xbf16>
    %36 = vector.extract_strided_slice %32 {offsets = [192, 0], sizes = [64, 32], strides = [1, 1]} : vector<576x32xbf16> to vector<64x32xbf16>
    %37 = vector.extract_strided_slice %32 {offsets = [256, 0], sizes = [64, 32], strides = [1, 1]} : vector<576x32xbf16> to vector<64x32xbf16>
    %38 = vector.extract_strided_slice %32 {offsets = [320, 0], sizes = [64, 32], strides = [1, 1]} : vector<576x32xbf16> to vector<64x32xbf16>
    %39 = vector.extract_strided_slice %32 {offsets = [384, 0], sizes = [64, 32], strides = [1, 1]} : vector<576x32xbf16> to vector<64x32xbf16>
    %40 = vector.extract_strided_slice %32 {offsets = [448, 0], sizes = [64, 32], strides = [1, 1]} : vector<576x32xbf16> to vector<64x32xbf16>
    %41 = vector.extract_strided_slice %32 {offsets = [512, 0], sizes = [64, 32], strides = [1, 1]} : vector<576x32xbf16> to vector<64x32xbf16>
    %42 = tpu.concatenate %33, %34, %35, %36, %37, %38, %39, %40, %41 in 1 : vector<64x32xbf16>, vector<64x32xbf16>, vector<64x32xbf16>, vector<64x32xbf16>, vector<64x32xbf16>, vector<64x32xbf16>, vector<64x32xbf16>, vector<64x32xbf16>, vector<64x32xbf16> -> vector<64x288xbf16>
    %c0_18 = arith.constant 0 : index
    %c0_19 = arith.constant 0 : index
    %43 = vector.load %arg8[%c0_18, %c0_19] : memref<288x32xbf16, #tpu.memory_space<vmem>>, vector<288x32xbf16>
    %cst_20 = arith.constant dense<0.000000e+00> : vector<64x32xf32>
    %44 = tpu.matmul %42, %43, %cst_20 {dimension_numbers = #tpu.dot_dimension_numbers<[1], [0], [0], [1], [0, 0, 1, 1], [], []>} : vector<64x288xbf16>, vector<288x32xbf16>, vector<64x32xf32> -> vector<64x32xf32>
    %c0_21 = arith.constant 0 : index
    %c0_22 = arith.constant 0 : index
    %45 = vector.load %arg14[%c0_21, %c0_22] : memref<1x32xf32, #tpu.memory_space<vmem>>, vector<1x32xf32>
    %46 = vector.broadcast %45 : vector<1x32xf32> to vector<64x32xf32>
    %47 = arith.addf %44, %46 : vector<64x32xf32>
    %cst_23 = arith.constant 0.000000e+00 : f32
    %48 = vector.broadcast %cst_23 : f32 to vector<64x32xf32>
    %49 = arith.maximumf %47, %48 : vector<64x32xf32>
    %c0_24 = arith.constant 0 : index
    %c0_25 = arith.constant 0 : index
    %50 = vector.load %arg3[%c0_24, %c0_25] : memref<144x64xbf16, #tpu.memory_space<vmem>>, vector<144x64xbf16>
    %51 = arith.truncf %49 : vector<64x32xf32> to vector<64x32xbf16>
    %cst_26 = arith.constant dense<0.000000e+00> : vector<144x32xf32>
    %52 = tpu.matmul %50, %51, %cst_26 {dimension_numbers = #tpu.dot_dimension_numbers<[1], [0], [0], [1], [0, 0, 1, 1], [], []>} : vector<144x64xbf16>, vector<64x32xbf16>, vector<144x32xf32> -> vector<144x32xf32>
    %53 = arith.truncf %52 : vector<144x32xf32> to vector<144x32xbf16>
    %54 = vector.extract_strided_slice %53 {offsets = [0, 0], sizes = [16, 32], strides = [1, 1]} : vector<144x32xbf16> to vector<16x32xbf16>
    %55 = vector.extract_strided_slice %53 {offsets = [16, 0], sizes = [16, 32], strides = [1, 1]} : vector<144x32xbf16> to vector<16x32xbf16>
    %56 = vector.extract_strided_slice %53 {offsets = [32, 0], sizes = [16, 32], strides = [1, 1]} : vector<144x32xbf16> to vector<16x32xbf16>
    %57 = vector.extract_strided_slice %53 {offsets = [48, 0], sizes = [16, 32], strides = [1, 1]} : vector<144x32xbf16> to vector<16x32xbf16>
    %58 = vector.extract_strided_slice %53 {offsets = [64, 0], sizes = [16, 32], strides = [1, 1]} : vector<144x32xbf16> to vector<16x32xbf16>
    %59 = vector.extract_strided_slice %53 {offsets = [80, 0], sizes = [16, 32], strides = [1, 1]} : vector<144x32xbf16> to vector<16x32xbf16>
    %60 = vector.extract_strided_slice %53 {offsets = [96, 0], sizes = [16, 32], strides = [1, 1]} : vector<144x32xbf16> to vector<16x32xbf16>
    %61 = vector.extract_strided_slice %53 {offsets = [112, 0], sizes = [16, 32], strides = [1, 1]} : vector<144x32xbf16> to vector<16x32xbf16>
    %62 = vector.extract_strided_slice %53 {offsets = [128, 0], sizes = [16, 32], strides = [1, 1]} : vector<144x32xbf16> to vector<16x32xbf16>
    %63 = tpu.concatenate %54, %55, %56, %57, %58, %59, %60, %61, %62 in 1 : vector<16x32xbf16>, vector<16x32xbf16>, vector<16x32xbf16>, vector<16x32xbf16>, vector<16x32xbf16>, vector<16x32xbf16>, vector<16x32xbf16>, vector<16x32xbf16>, vector<16x32xbf16> -> vector<16x288xbf16>
    %c0_27 = arith.constant 0 : index
    %c0_28 = arith.constant 0 : index
    %64 = vector.load %arg9[%c0_27, %c0_28] : memref<288x64xbf16, #tpu.memory_space<vmem>>, vector<288x64xbf16>
    %cst_29 = arith.constant dense<0.000000e+00> : vector<16x64xf32>
    %65 = tpu.matmul %63, %64, %cst_29 {dimension_numbers = #tpu.dot_dimension_numbers<[1], [0], [0], [1], [0, 0, 1, 1], [], []>} : vector<16x288xbf16>, vector<288x64xbf16>, vector<16x64xf32> -> vector<16x64xf32>
    %c0_30 = arith.constant 0 : index
    %c0_31 = arith.constant 0 : index
    %66 = vector.load %arg15[%c0_30, %c0_31] : memref<1x64xf32, #tpu.memory_space<vmem>>, vector<1x64xf32>
    %67 = vector.broadcast %66 : vector<1x64xf32> to vector<16x64xf32>
    %68 = arith.addf %65, %67 : vector<16x64xf32>
    %cst_32 = arith.constant 0.000000e+00 : f32
    %69 = vector.broadcast %cst_32 : f32 to vector<16x64xf32>
    %70 = arith.maximumf %68, %69 : vector<16x64xf32>
    %c0_33 = arith.constant 0 : index
    %c0_34 = arith.constant 0 : index
    %71 = vector.load %arg4[%c0_33, %c0_34] : memref<72x16xbf16, #tpu.memory_space<vmem>>, vector<72x16xbf16>
    %72 = arith.truncf %70 : vector<16x64xf32> to vector<16x64xbf16>
    %cst_35 = arith.constant dense<0.000000e+00> : vector<72x64xf32>
    %73 = tpu.matmul %71, %72, %cst_35 {dimension_numbers = #tpu.dot_dimension_numbers<[1], [0], [0], [1], [0, 0, 1, 1], [], []>} : vector<72x16xbf16>, vector<16x64xbf16>, vector<72x64xf32> -> vector<72x64xf32>
    %74 = vector.extract_strided_slice %73 {offsets = [0, 0], sizes = [8, 64], strides = [1, 1]} : vector<72x64xf32> to vector<8x64xf32>
    %75 = vector.extract_strided_slice %73 {offsets = [8, 0], sizes = [8, 64], strides = [1, 1]} : vector<72x64xf32> to vector<8x64xf32>
    %76 = vector.extract_strided_slice %73 {offsets = [16, 0], sizes = [8, 64], strides = [1, 1]} : vector<72x64xf32> to vector<8x64xf32>
    %77 = vector.extract_strided_slice %73 {offsets = [24, 0], sizes = [8, 64], strides = [1, 1]} : vector<72x64xf32> to vector<8x64xf32>
    %78 = vector.extract_strided_slice %73 {offsets = [32, 0], sizes = [8, 64], strides = [1, 1]} : vector<72x64xf32> to vector<8x64xf32>
    %79 = vector.extract_strided_slice %73 {offsets = [40, 0], sizes = [8, 64], strides = [1, 1]} : vector<72x64xf32> to vector<8x64xf32>
    %80 = vector.extract_strided_slice %73 {offsets = [48, 0], sizes = [8, 64], strides = [1, 1]} : vector<72x64xf32> to vector<8x64xf32>
    %81 = vector.extract_strided_slice %73 {offsets = [56, 0], sizes = [8, 64], strides = [1, 1]} : vector<72x64xf32> to vector<8x64xf32>
    %82 = vector.extract_strided_slice %73 {offsets = [64, 0], sizes = [8, 64], strides = [1, 1]} : vector<72x64xf32> to vector<8x64xf32>
    %83 = tpu.concatenate %74, %75, %76, %77, %78, %79, %80, %81, %82 in 1 : vector<8x64xf32>, vector<8x64xf32>, vector<8x64xf32>, vector<8x64xf32>, vector<8x64xf32>, vector<8x64xf32>, vector<8x64xf32>, vector<8x64xf32>, vector<8x64xf32> -> vector<8x576xf32>
    %84 = arith.truncf %83 : vector<8x576xf32> to vector<8x576xbf16>
    %c0_36 = arith.constant 0 : index
    %c0_37 = arith.constant 0 : index
    %85 = vector.load %arg10[%c0_36, %c0_37] : memref<576x128xbf16, #tpu.memory_space<vmem>>, vector<576x128xbf16>
    %cst_38 = arith.constant dense<0.000000e+00> : vector<8x128xf32>
    %86 = tpu.matmul %84, %85, %cst_38 {dimension_numbers = #tpu.dot_dimension_numbers<[1], [0], [0], [1], [0, 0, 1, 1], [], []>} : vector<8x576xbf16>, vector<576x128xbf16>, vector<8x128xf32> -> vector<8x128xf32>
    %c0_39 = arith.constant 0 : index
    %c0_40 = arith.constant 0 : index
    %87 = vector.load %arg16[%c0_39, %c0_40] : memref<1x128xf32, #tpu.memory_space<vmem>>, vector<1x128xf32>
    %88 = vector.broadcast %87 : vector<1x128xf32> to vector<8x128xf32>
    %89 = arith.addf %86, %88 : vector<8x128xf32>
    %cst_41 = arith.constant 0.000000e+00 : f32
    %90 = vector.broadcast %cst_41 : f32 to vector<8x128xf32>
    %91 = arith.maximumf %89, %90 : vector<8x128xf32>
    %c0_42 = arith.constant 0 : index
    %c0_43 = arith.constant 0 : index
    %92 = vector.load %arg5[%c0_42, %c0_43] : memref<72x8xbf16, #tpu.memory_space<vmem>>, vector<72x8xbf16>
    %93 = arith.truncf %91 : vector<8x128xf32> to vector<8x128xbf16>
    %cst_44 = arith.constant dense<0.000000e+00> : vector<72x128xf32>
    %94 = tpu.matmul %92, %93, %cst_44 {dimension_numbers = #tpu.dot_dimension_numbers<[1], [0], [0], [1], [0, 0, 1, 1], [], []>} : vector<72x8xbf16>, vector<8x128xbf16>, vector<72x128xf32> -> vector<72x128xf32>
    %95 = vector.extract_strided_slice %94 {offsets = [0, 0], sizes = [8, 128], strides = [1, 1]} : vector<72x128xf32> to vector<8x128xf32>
    %96 = vector.extract_strided_slice %94 {offsets = [8, 0], sizes = [8, 128], strides = [1, 1]} : vector<72x128xf32> to vector<8x128xf32>
    %97 = vector.extract_strided_slice %94 {offsets = [16, 0], sizes = [8, 128], strides = [1, 1]} : vector<72x128xf32> to vector<8x128xf32>
    %98 = vector.extract_strided_slice %94 {offsets = [24, 0], sizes = [8, 128], strides = [1, 1]} : vector<72x128xf32> to vector<8x128xf32>
    %99 = vector.extract_strided_slice %94 {offsets = [32, 0], sizes = [8, 128], strides = [1, 1]} : vector<72x128xf32> to vector<8x128xf32>
    %100 = vector.extract_strided_slice %94 {offsets = [40, 0], sizes = [8, 128], strides = [1, 1]} : vector<72x128xf32> to vector<8x128xf32>
    %101 = vector.extract_strided_slice %94 {offsets = [48, 0], sizes = [8, 128], strides = [1, 1]} : vector<72x128xf32> to vector<8x128xf32>
    %102 = vector.extract_strided_slice %94 {offsets = [56, 0], sizes = [8, 128], strides = [1, 1]} : vector<72x128xf32> to vector<8x128xf32>
    %103 = vector.extract_strided_slice %94 {offsets = [64, 0], sizes = [8, 128], strides = [1, 1]} : vector<72x128xf32> to vector<8x128xf32>
    %104 = tpu.concatenate %95, %96, %97, %98, %99, %100, %101, %102, %103 in 1 : vector<8x128xf32>, vector<8x128xf32>, vector<8x128xf32>, vector<8x128xf32>, vector<8x128xf32>, vector<8x128xf32>, vector<8x128xf32>, vector<8x128xf32>, vector<8x128xf32> -> vector<8x1152xf32>
    %105 = arith.truncf %104 : vector<8x1152xf32> to vector<8x1152xbf16>
    %c0_45 = arith.constant 0 : index
    %c0_46 = arith.constant 0 : index
    %106 = vector.load %arg11[%c0_45, %c0_46] : memref<1152x256xbf16, #tpu.memory_space<vmem>>, vector<1152x256xbf16>
    %cst_47 = arith.constant dense<0.000000e+00> : vector<8x256xf32>
    %107 = tpu.matmul %105, %106, %cst_47 {dimension_numbers = #tpu.dot_dimension_numbers<[1], [0], [0], [1], [0, 0, 1, 1], [], []>} : vector<8x1152xbf16>, vector<1152x256xbf16>, vector<8x256xf32> -> vector<8x256xf32>
    %c0_48 = arith.constant 0 : index
    %c0_49 = arith.constant 0 : index
    %108 = vector.load %arg17[%c0_48, %c0_49] : memref<1x256xf32, #tpu.memory_space<vmem>>, vector<1x256xf32>
    %109 = vector.broadcast %108 : vector<1x256xf32> to vector<8x256xf32>
    %110 = arith.addf %107, %109 : vector<8x256xf32>
    %cst_50 = arith.constant 0.000000e+00 : f32
    %111 = vector.broadcast %cst_50 : f32 to vector<8x256xf32>
    %112 = arith.maximumf %110, %111 : vector<8x256xf32>
    %c0_51 = arith.constant 0 : index
    %c0_52 = arith.constant 0 : index
    %113 = vector.load %arg18[%c0_51, %c0_52] : memref<8x1xf32, #tpu.memory_space<vmem>>, vector<8x1xf32>
    %114 = vector.broadcast %113 : vector<8x1xf32> to vector<8x256xf32>
    %115 = arith.mulf %112, %114 : vector<8x256xf32>
    %cst_53 = arith.constant dense<0.000000e+00> : vector<256xf32>
    %116 = vector.multi_reduction <add>, %115, %cst_53 [0] : vector<8x256xf32> to vector<256xf32>
    %117 = vector.shape_cast %116 : vector<256xf32> to vector<1x256xf32>
    %118 = arith.truncf %117 : vector<1x256xf32> to vector<1x256xbf16>
    %c0_54 = arith.constant 0 : index
    %c0_55 = arith.constant 0 : index
    %119 = vector.load %arg19[%c0_54, %c0_55] : memref<256x32xbf16, #tpu.memory_space<vmem>>, vector<256x32xbf16>
    %cst_56 = arith.constant dense<0.000000e+00> : vector<1x32xf32>
    %120 = tpu.matmul %118, %119, %cst_56 {dimension_numbers = #tpu.dot_dimension_numbers<[1], [0], [0], [1], [0, 0, 1, 1], [], []>} : vector<1x256xbf16>, vector<256x32xbf16>, vector<1x32xf32> -> vector<1x32xf32>
    %c0_57 = arith.constant 0 : index
    %c0_58 = arith.constant 0 : index
    %121 = vector.load %arg20[%c0_57, %c0_58] : memref<1x32xf32, #tpu.memory_space<vmem>>, vector<1x32xf32>
    %122 = arith.addf %120, %121 : vector<1x32xf32>
    %c0_59 = arith.constant 0 : index
    %c0_60 = arith.constant 0 : index
    %123 = vector.load %arg21[%c0_59, %c0_60] : memref<1x32xf32, #tpu.memory_space<vmem>>, vector<1x32xf32>
    tpu.vector_store %arg21[%c0_59, %c0_60], %122 {strides = array<i32>} : memref<1x32xf32, #tpu.memory_space<vmem>>, vector<1x32xf32>,
    return
  }
}

</mosaic_0001>

<llo_original>
// kernel: mobileone_forward.1
$region0: #{mobileone_forward.1}
  #allocation0 [shape = 'u32[]', space=smem, size = 0x4, offset = 0x4, fixed_abs, tag = 'smem constant byte address 0x4 - core index']
  #allocation1 [shape = 'u32[72,128]{1,0:T(1,128)}', space=vmem, size = 0x9000, scoped, tag = 'internal scratch']
  %s0 = inlined_call_operand.vmem [shape: bf16[256,54], index: 0, kind: input, shape index: {}]
  %s1 = inlined_call_operand.vmem [shape: bf16[576,256], index: 1, kind: input, shape index: {}]
  %s2 = inlined_call_operand.vmem [shape: bf16[576,64], index: 2, kind: input, shape index: {}]
  %s3 = inlined_call_operand.vmem [shape: bf16[144,64], index: 3, kind: input, shape index: {}]
  %s4 = inlined_call_operand.vmem [shape: bf16[72,16], index: 4, kind: input, shape index: {}]
  %s5 = inlined_call_operand.vmem [shape: bf16[72,8], index: 5, kind: input, shape index: {}]
  %s6 = inlined_call_operand.vmem [shape: bf16[54,32], index: 6, kind: input, shape index: {}]
  %s7 = inlined_call_operand.vmem [shape: bf16[288,32], index: 7, kind: input, shape index: {}]
  %s8 = inlined_call_operand.vmem [shape: bf16[288,32], index: 8, kind: input, shape index: {}]
  %s9 = inlined_call_operand.vmem [shape: bf16[288,64], index: 9, kind: input, shape index: {}]
  %s10 = inlined_call_operand.vmem [shape: bf16[576,128], index: 10, kind: input, shape index: {}]
  %s11 = inlined_call_operand.vmem [shape: bf16[1152,256], index: 11, kind: input, shape index: {}]
  %s12 = inlined_call_operand.vmem [shape: f32[1,32], index: 12, kind: input, shape index: {}]
  %s13 = inlined_call_operand.vmem [shape: f32[1,32], index: 13, kind: input, shape index: {}]
  %s14 = inlined_call_operand.vmem [shape: f32[1,32], index: 14, kind: input, shape index: {}]
  %s15 = inlined_call_operand.vmem [shape: f32[1,64], index: 15, kind: input, shape index: {}]
  %s16 = inlined_call_operand.vmem [shape: f32[1,128], index: 16, kind: input, shape index: {}]
  %s17 = inlined_call_operand.vmem [shape: f32[1,256], index: 17, kind: input, shape index: {}]
  %s18 = inlined_call_operand.vmem [shape: f32[8,1], index: 18, kind: input, shape index: {}]
  %s19 = inlined_call_operand.vmem [shape: bf16[256,32], index: 19, kind: input, shape index: {}]
  %s20 = inlined_call_operand.vmem [shape: f32[1,32], index: 20, kind: input, shape index: {}]
  %s21 = inlined_call_operand.vmem [shape: f32[1,32], index: 21, kind: output, shape index: {}]
  %s22 = sld [smem:[#allocation0]]
  $region94: #{mobileone_forward.1} parent=0
    _
  %s24 = ssub.s32 1, %s22
  %s25 = scalar_select 0, %s24, %s22
  // Predicated region
  $region2: #{mobileone_forward.1} parent=0 // pred_check
    _
  $region3: #{mobileone_forward.1} parent=0 // pred_check_branch
    %27 = sbr.rel (0) target = $region5
  $region4: #{mobileone_forward.1} parent=0 // pred_region
    _
  $region5: #{mobileone_forward.1} parent=0 // pred_fallthru
    _
  // Predicated region
  $region6: #{mobileone_forward.1} parent=0 // pred_check
    _
  $region7: #{mobileone_forward.1} parent=0 // pred_check_branch
    %29 = sbr.rel (0) target = $region9
  $region8: #{mobileone_forward.1} parent=0 // pred_region
    _
  $region9: #{mobileone_forward.1} parent=0 // pred_fallthru
    _
  // Predicated region
  $region10: #{mobileone_forward.1} parent=0 // pred_check
    _
  $region11: #{mobileone_forward.1} parent=0 // pred_check_branch
    %31 = sbr.rel (0) target = $region13
  $region12: #{mobileone_forward.1} parent=0 // pred_region
    _
  $region13: #{mobileone_forward.1} parent=0 // pred_fallthru
    _
  // Predicated region
  $region14: #{mobileone_forward.1} parent=0 // pred_check
    _
  $region15: #{mobileone_forward.1} parent=0 // pred_check_branch
    %33 = sbr.rel (0) target = $region17
  $region16: #{mobileone_forward.1} parent=0 // pred_region
    _
  $region17: #{mobileone_forward.1} parent=0 // pred_fallthru
    _
  // Predicated region
  $region18: #{mobileone_forward.1} parent=0 // pred_check
    _
  $region19: #{mobileone_forward.1} parent=0 // pred_check_branch
    %35 = sbr.rel (0) target = $region21
  $region20: #{mobileone_forward.1} parent=0 // pred_region
    _
  $region21: #{mobileone_forward.1} parent=0 // pred_fallthru
    _
  // Predicated region
  $region22: #{mobileone_forward.1} parent=0 // pred_check
    _
  $region23: #{mobileone_forward.1} parent=0 // pred_check_branch
    %37 = sbr.rel (0) target = $region25
  $region24: #{mobileone_forward.1} parent=0 // pred_region
    _
  $region25: #{mobileone_forward.1} parent=0 // pred_fallthru
    _
  // Predicated region
  $region26: #{mobileone_forward.1} parent=0 // pred_check
    _
  $region27: #{mobileone_forward.1} parent=0 // pred_check_branch
    %39 = sbr.rel (0) target = $region29
  $region28: #{mobileone_forward.1} parent=0 // pred_region
    _
  $region29: #{mobileone_forward.1} parent=0 // pred_fallthru
    _
  // Predicated region
  $region30: #{mobileone_forward.1} parent=0 // pred_check
    _
  $region31: #{mobileone_forward.1} parent=0 // pred_check_branch
    %41 = sbr.rel (0) target = $region33
  $region32: #{mobileone_forward.1} parent=0 // pred_region
    _
  $region33: #{mobileone_forward.1} parent=0 // pred_fallthru
    _
  // Predicated region
  $region34: #{mobileone_forward.1} parent=0 // pred_check
    _
  $region35: #{mobileone_forward.1} parent=0 // pred_check_branch
    %43 = sbr.rel (0) target = $region37
  $region36: #{mobileone_forward.1} parent=0 // pred_region
    _
  $region37: #{mobileone_forward.1} parent=0 // pred_fallthru
    _
  // Predicated region
  $region38: #{mobileone_forward.1} parent=0 // pred_check
    _
  $region39: #{mobileone_forward.1} parent=0 // pred_check_branch
    %45 = sbr.rel (0) target = $region41
  $region40: #{mobileone_forward.1} parent=0 // pred_region
    _
  $region41: #{mobileone_forward.1} parent=0 // pred_fallthru
    _
  // Predicated region
  $region42: #{mobileone_forward.1} parent=0 // pred_check
    _
  $region43: #{mobileone_forward.1} parent=0 // pred_check_branch
    %47 = sbr.rel (0) target = $region45
  $region44: #{mobileone_forward.1} parent=0 // pred_region
    _
  $region45: #{mobileone_forward.1} parent=0 // pred_fallthru
    _
  // Predicated region
  $region46: #{mobileone_forward.1} parent=0 // pred_check
    _
  $region47: #{mobileone_forward.1} parent=0 // pred_check_branch
    %49 = sbr.rel (0) target = $region49
  $region48: #{mobileone_forward.1} parent=0 // pred_region
    _
  $region49: #{mobileone_forward.1} parent=0 // pred_fallthru
    _
  // Predicated region
  $region50: #{mobileone_forward.1} parent=0 // pred_check
    _
  $region51: #{mobileone_forward.1} parent=0 // pred_check_branch
    %51 = sbr.rel (0) target = $region53
  $region52: #{mobileone_forward.1} parent=0 // pred_region
    _
  $region53: #{mobileone_forward.1} parent=0 // pred_fallthru
    _
  // Predicated region
  $region54: #{mobileone_forward.1} parent=0 // pred_check
    _
  $region55: #{mobileone_forward.1} parent=0 // pred_check_branch
    %53 = sbr.rel (0) target = $region57
  $region56: #{mobileone_forward.1} parent=0 // pred_region
    _
  $region57: #{mobileone_forward.1} parent=0 // pred_fallthru
    _
  // Predicated region
  $region58: #{mobileone_forward.1} parent=0 // pred_check
    _
  $region59: #{mobileone_forward.1} parent=0 // pred_check_branch
    %55 = sbr.rel (0) target = $region61
  $region60: #{mobileone_forward.1} parent=0 // pred_region
    _
  $region61: #{mobileone_forward.1} parent=0 // pred_fallthru
    _
  // Predicated region
  $region62: #{mobileone_forward.1} parent=0 // pred_check
    _
  $region63: #{mobileone_forward.1} parent=0 // pred_check_branch
    %57 = sbr.rel (0) target = $region65
  $region64: #{mobileone_forward.1} parent=0 // pred_region
    _
  $region65: #{mobileone_forward.1} parent=0 // pred_fallthru
    _
  // Predicated region
  $region66: #{mobileone_forward.1} parent=0 // pred_check
    _
  $region67: #{mobileone_forward.1} parent=0 // pred_check_branch
    %59 = sbr.rel (0) target = $region69
  $region68: #{mobileone_forward.1} parent=0 // pred_region
    _
  $region69: #{mobileone_forward.1} parent=0 // pred_fallthru
    _
  // Predicated region
  $region70: #{mobileone_forward.1} parent=0 // pred_check
    _
  $region71: #{mobileone_forward.1} parent=0 // pred_check_branch
    %61 = sbr.rel (0) target = $region73
  $region72: #{mobileone_forward.1} parent=0 // pred_region
    _
  $region73: #{mobileone_forward.1} parent=0 // pred_fallthru
    _
  // Predicated region
  $region74: #{mobileone_forward.1} parent=0 // pred_check
    _
  $region75: #{mobileone_forward.1} parent=0 // pred_check_branch
    %63 = sbr.rel (0) target = $region77
  $region76: #{mobileone_forward.1} parent=0 // pred_region
    _
  $region77: #{mobileone_forward.1} parent=0 // pred_fallthru
    _
  // Predicated region
  $region78: #{mobileone_forward.1} parent=0 // pred_check
    _
  $region79: #{mobileone_forward.1} parent=0 // pred_check_branch
    %65 = sbr.rel (0) target = $region81
  $region80: #{mobileone_forward.1} parent=0 // pred_region
    _
  $region81: #{mobileone_forward.1} parent=0 // pred_fallthru
    _
  // Predicated region
  $region82: #{mobileone_forward.1} parent=0 // pred_check
    _
  $region83: #{mobileone_forward.1} parent=0 // pred_check_branch
    %67 = sbr.rel (0) target = $region85
  $region84: #{mobileone_forward.1} parent=0 // pred_region
    _
  $region85: #{mobileone_forward.1} parent=0 // pred_fallthru
    _
  %v69 = vld [vmem:[%s0] sm:$0xf]
  %v70 = vld [vmem:[%s0 + $0x4] sm:$0xf]
  %v71 = vld [vmem:[%s0 + $0x8] sm:$0xf]
  %v72 = vld [vmem:[%s0 + $0xc] sm:$0xf]
  %v73 = vld [vmem:[%s0 + $0x10] sm:$0xf]
  %v74 = vld [vmem:[%s0 + $0x14] sm:$0xf]
  %v75 = vld [vmem:[%s0 + $0x18] sm:$0xf]
  %v76 = vld [vmem:[%s0 + $0x1c] sm:$0xf]
  %v77 = vld [vmem:[%s0 + $0x20] sm:$0xf]
  %v78 = vld [vmem:[%s0 + $0x24] sm:$0xf]
  %v79 = vld [vmem:[%s0 + $0x28] sm:$0xf]
  %v80 = vld [vmem:[%s0 + $0x2c] sm:$0xf]
  %v81 = vld [vmem:[%s0 + $0x30] sm:$0xf]
  %v82 = vld [vmem:[%s0 + $0x34] sm:$0xf]
  %v83 = vld [vmem:[%s0 + $0x38] sm:$0xf]
  %v84 = vld [vmem:[%s0 + $0x3c] sm:$0xf]
  %v85 = vld [vmem:[%s0 + $0x40] sm:$0xf]
  %v86 = vld [vmem:[%s0 + $0x44] sm:$0xf]
  %v87 = vld [vmem:[%s0 + $0x48] sm:$0xf]
  %v88 = vld [vmem:[%s0 + $0x4c] sm:$0xf]
  %v89 = vld [vmem:[%s0 + $0x50] sm:$0xf]
  %v90 = vld [vmem:[%s0 + $0x54] sm:$0xf]
  %v91 = vld [vmem:[%s0 + $0x58] sm:$0xf]
  %v92 = vld [vmem:[%s0 + $0x5c] sm:$0xf]
  %v93 = vld [vmem:[%s0 + $0x60] sm:$0xf]
  %v94 = vld [vmem:[%s0 + $0x64] sm:$0xf]
  %v95 = vld [vmem:[%s0 + $0x68] sm:$0xf]
  %v96 = vld [vmem:[%s0 + $0x6c] sm:$0xf]
  %v97 = vld [vmem:[%s0 + $0x70] sm:$0xf]
  %v98 = vld [vmem:[%s0 + $0x74] sm:$0xf]
  %v99 = vld [vmem:[%s0 + $0x78] sm:$0xf]
  %v100 = vld [vmem:[%s0 + $0x7c] sm:$0xf]
  %v101 = vld [vmem:[%s6] sm:$0xf]
  %v102 = vld [vmem:[%s6 + $0x4] sm:$0xf]
  %v103 = vld [vmem:[%s6 + $0x8] sm:$0xf]
  %v104 = vld [vmem:[%s6 + $0xc] sm:$0xf]
  %v105 = vld [vmem:[%s6 + $0x10] sm:$0xf]
  %v106 = vld [vmem:[%s6 + $0x14] sm:$0xf]
  %v107 = vld [vmem:[%s6 + $0x18] sm:$0x7]
  %v108 = vld [vmem:[%s12] sm:$0x1]
  %v110 = vperm.slane %v108, 0
  %v144 = vunpack.c.l.b16 %v69
  %v145 = vunpack.c.l.b16 %v70
  %v146 = vunpack.c.l.b16 %v71
  %v147 = vunpack.c.l.b16 %v72
  %v148 = vunpack.c.l.b16 %v73
  %v149 = vunpack.c.l.b16 %v74
  %v150 = vunpack.c.l.b16 %v75
  %v151 = vunpack.c.l.b16 %v76
  %v152 = vunpack.c.l.b16 %v77
  %v153 = vunpack.c.l.b16 %v78
  %v154 = vunpack.c.l.b16 %v79
  %v155 = vunpack.c.l.b16 %v80
  %v156 = vunpack.c.l.b16 %v81
  %v157 = vunpack.c.l.b16 %v82
  %v158 = vunpack.c.l.b16 %v83
  %v159 = vunpack.c.l.b16 %v84
  %v160 = vunpack.c.l.b16 %v85
  %v161 = vunpack.c.l.b16 %v86
  %v162 = vunpack.c.l.b16 %v87
  %v163 = vunpack.c.l.b16 %v88
  %v164 = vunpack.c.l.b16 %v89
  %v165 = vunpack.c.l.b16 %v90
  %v166 = vunpack.c.l.b16 %v91
  %v167 = vunpack.c.l.b16 %v92
  %v168 = vunpack.c.l.b16 %v93
  %v169 = vunpack.c.l.b16 %v94
  %v170 = vunpack.c.l.b16 %v95
  %v171 = vunpack.c.l.b16 %v96
  %v172 = vunpack.c.l.b16 %v97
  %v173 = vunpack.c.l.b16 %v98
  %v174 = vunpack.c.l.b16 %v99
  %v175 = vunpack.c.l.b16 %v100
  %v176 = vpack.c.b16 %v145, %v144
  %v177 = vpack.c.b16 %v147, %v146
  %v178 = vpack.c.b16 %v149, %v148
  %v179 = vpack.c.b16 %v151, %v150
  %v180 = vpack.c.b16 %v153, %v152
  %v181 = vpack.c.b16 %v155, %v154
  %v182 = vpack.c.b16 %v157, %v156
  %v183 = vpack.c.b16 %v159, %v158
  %v184 = vpack.c.b16 %v161, %v160
  %v185 = vpack.c.b16 %v163, %v162
  %v186 = vpack.c.b16 %v165, %v164
  %v187 = vpack.c.b16 %v167, %v166
  %v188 = vpack.c.b16 %v169, %v168
  %v189 = vpack.c.b16 %v171, %v170
  %v190 = vpack.c.b16 %v173, %v172
  %v191 = vpack.c.b16 %v175, %v174
  %v199 = vunpack.c.l.b16 %v101
  %v200 = vunpack.c.l.b16 %v102
  %v201 = vunpack.c.l.b16 %v103
  %v202 = vunpack.c.l.b16 %v104
  %v203 = vunpack.c.l.b16 %v105
  %v204 = vunpack.c.l.b16 %v106
  %v205 = vunpack.c.l.b16 %v107
  %v206 = vpack.c.b16 %v200, %v199
  %v207 = vpack.c.b16 %v202, %v201
  %v208 = vpack.c.b16 %v204, %v203
  %v209 = vpack.c.b16 %v205, %v205
  %vm213 = vcmask 441344
  %v215 = vsel %vm213, %v176, 0
  %v218 = vsel %vm213, %v177, 0
  %v221 = vsel %vm213, %v178, 0
  %v224 = vsel %vm213, %v179, 0
  %v227 = vsel %vm213, %v180, 0
  %v230 = vsel %vm213, %v181, 0
  %v233 = vsel %vm213, %v182, 0
  %v236 = vsel %vm213, %v183, 0
  %v239 = vsel %vm213, %v184, 0
  %v242 = vsel %vm213, %v185, 0
  %v245 = vsel %vm213, %v186, 0
  %v248 = vsel %vm213, %v187, 0
  %v251 = vsel %vm213, %v188, 0
  %v254 = vsel %vm213, %v189, 0
  %v257 = vsel %vm213, %v190, 0
  %v260 = vsel %vm213, %v191, 0
  %vm262 = vcmask 1042432
  %v264 = vsel %vm262, %v209, 0
  %266 = vmatpush.bf16.msra.mxu0 0
  %267 = vmatpush.bf16.msra.mxu0 0
  %268 = vmatpush.bf16.msra.mxu0 0
  %269 = vmatpush.bf16.msra.mxu0 0
  %270 = vmatpush.bf16.msra.mxu0 %v264
  %271 = vmatpush.bf16.msra.mxu0 %v208
  %272 = vmatpush.bf16.msra.mxu0 %v207
  %273 = vmatpush.bf16.msra.mxu0 %v206
  %274 = vmatmul.bf16.gmra.mxu0 %v215
  %v275 = vpop.f32.mrf.mxu0
  %v276 = vadd.f32 %v110, %v275
  %v277 = vpop.f32.mrf.mxu0
  %v278 = vadd.f32 %v110, %v277
  %279 = vmatmul.bf16.gmra.mxu0 %v218
  %v280 = vpop.f32.mrf.mxu0
  %v281 = vadd.f32 %v110, %v280
  %v282 = vpop.f32.mrf.mxu0
  %v283 = vadd.f32 %v110, %v282
  %284 = vmatmul.bf16.gmra.mxu0 %v221
  %v285 = vpop.f32.mrf.mxu0
  %v286 = vadd.f32 %v110, %v285
  %v287 = vpop.f32.mrf.mxu0
  %v288 = vadd.f32 %v110, %v287
  %289 = vmatmul.bf16.gmra.mxu0 %v224
  %v290 = vpop.f32.mrf.mxu0
  %v291 = vadd.f32 %v110, %v290
  %v292 = vpop.f32.mrf.mxu0
  %v293 = vadd.f32 %v110, %v292
  %294 = vmatmul.bf16.gmra.mxu0 %v227
  %v295 = vpop.f32.mrf.mxu0
  %v296 = vadd.f32 %v110, %v295
  %v297 = vpop.f32.mrf.mxu0
  %v298 = vadd.f32 %v110, %v297
  %299 = vmatmul.bf16.gmra.mxu0 %v230
  %v300 = vpop.f32.mrf.mxu0
  %v301 = vadd.f32 %v110, %v300
  %v302 = vpop.f32.mrf.mxu0
  %v303 = vadd.f32 %v110, %v302
  %304 = vmatmul.bf16.gmra.mxu0 %v233
  %v305 = vpop.f32.mrf.mxu0
  %v306 = vadd.f32 %v110, %v305
  %v307 = vpop.f32.mrf.mxu0
  %v308 = vadd.f32 %v110, %v307
  %309 = vmatmul.bf16.gmra.mxu0 %v236
  %v310 = vpop.f32.mrf.mxu0
  %v311 = vadd.f32 %v110, %v310
  %v312 = vpop.f32.mrf.mxu0
  %v313 = vadd.f32 %v110, %v312
  %314 = vmatmul.bf16.gmra.mxu0 %v239
  %v315 = vpop.f32.mrf.mxu0
  %v316 = vadd.f32 %v110, %v315
  %v317 = vpop.f32.mrf.mxu0
  %v318 = vadd.f32 %v110, %v317
  %319 = vmatmul.bf16.gmra.mxu0 %v242
  %v320 = vpop.f32.mrf.mxu0
  %v321 = vadd.f32 %v110, %v320
  %v322 = vpop.f32.mrf.mxu0
  %v323 = vadd.f32 %v110, %v322
  %324 = vmatmul.bf16.gmra.mxu0 %v245
  %v325 = vpop.f32.mrf.mxu0
  %v326 = vadd.f32 %v110, %v325
  %v327 = vpop.f32.mrf.mxu0
  %v328 = vadd.f32 %v110, %v327
  %329 = vmatmul.bf16.gmra.mxu0 %v248
  %v330 = vpop.f32.mrf.mxu0
  %v331 = vadd.f32 %v110, %v330
  %v332 = vpop.f32.mrf.mxu0
  %v333 = vadd.f32 %v110, %v332
  %334 = vmatmul.bf16.gmra.mxu0 %v251
  %v335 = vpop.f32.mrf.mxu0
  %v336 = vadd.f32 %v110, %v335
  %v337 = vpop.f32.mrf.mxu0
  %v338 = vadd.f32 %v110, %v337
  %339 = vmatmul.bf16.gmra.mxu0 %v254
  %v340 = vpop.f32.mrf.mxu0
  %v341 = vadd.f32 %v110, %v340
  %v342 = vpop.f32.mrf.mxu0
  %v343 = vadd.f32 %v110, %v342
  %344 = vmatmul.bf16.gmra.mxu0 %v257
  %v345 = vpop.f32.mrf.mxu0
  %v346 = vadd.f32 %v110, %v345
  %v347 = vpop.f32.mrf.mxu0
  %v348 = vadd.f32 %v110, %v347
  %349 = vmatmul.bf16.gmra.mxu0 %v260
  %v350 = vpop.f32.mrf.mxu0
  %v351 = vadd.f32 %v110, %v350
  %v352 = vpop.f32.mrf.mxu0
  %v353 = vadd.f32 %v110, %v352
  %354 = vdwg.mxu0
  %v355 = vmax.f32 %v276, 0.0
  %v356 = vmax.f32 %v278, 0.0
  %v357 = vmax.f32 %v281, 0.0
  %v358 = vmax.f32 %v283, 0.0
  %v359 = vmax.f32 %v286, 0.0
  %v360 = vmax.f32 %v288, 0.0
  %v361 = vmax.f32 %v291, 0.0
  %v362 = vmax.f32 %v293, 0.0
  %v363 = vmax.f32 %v296, 0.0
  %v364 = vmax.f32 %v298, 0.0
  %v365 = vmax.f32 %v301, 0.0
  %v366 = vmax.f32 %v303, 0.0
  %v367 = vmax.f32 %v306, 0.0
  %v368 = vmax.f32 %v308, 0.0
  %v369 = vmax.f32 %v311, 0.0
  %v370 = vmax.f32 %v313, 0.0
  %v371 = vmax.f32 %v316, 0.0
  %v372 = vmax.f32 %v318, 0.0
  %v373 = vmax.f32 %v321, 0.0
  %v374 = vmax.f32 %v323, 0.0
  %v375 = vmax.f32 %v326, 0.0
  %v376 = vmax.f32 %v328, 0.0
  %v377 = vmax.f32 %v331, 0.0
  %v378 = vmax.f32 %v333, 0.0
  %v379 = vmax.f32 %v336, 0.0
  %v380 = vmax.f32 %v338, 0.0
  %v381 = vmax.f32 %v341, 0.0
  %v382 = vmax.f32 %v343, 0.0
  %v383 = vmax.f32 %v346, 0.0
  %v384 = vmax.f32 %v348, 0.0
  %v385 = vmax.f32 %v351, 0.0
  %v386 = vmax.f32 %v353, 0.0
  %v387 = vld [vmem:[%s1] sm:$0xff]
  %v388 = vld [vmem:[%s1 + $0x8] sm:$0xff]
  %v389 = vld [vmem:[%s1 + $0x10] sm:$0xff]
  %v390 = vld [vmem:[%s1 + $0x18] sm:$0xff]
  %v391 = vld [vmem:[%s1 + $0x20] sm:$0xff]
  %v392 = vld [vmem:[%s1 + $0x28] sm:$0xff]
  %v393 = vld [vmem:[%s1 + $0x30] sm:$0xff]
  %v394 = vld [vmem:[%s1 + $0x38] sm:$0xff]
  %v395 = vld [vmem:[%s1 + $0x40] sm:$0xff]
  %v396 = vld [vmem:[%s1 + $0x48] sm:$0xff]
  %v397 = vld [vmem:[%s1 + $0x50] sm:$0xff]
  %v398 = vld [vmem:[%s1 + $0x58] sm:$0xff]
  %v399 = vld [vmem:[%s1 + $0x60] sm:$0xff]
  %v400 = vld [vmem:[%s1 + $0x68] sm:$0xff]
  %v401 = vld [vmem:[%s1 + $0x70] sm:$0xff]
  %v402 = vld [vmem:[%s1 + $0x78] sm:$0xff]
  %v403 = vld [vmem:[%s1 + $0x80] sm:$0xff]
  %v404 = vld [vmem:[%s1 + $0x88] sm:$0xff]
  %v405 = vld [vmem:[%s1 + $0x90] sm:$0xff]
  %v406 = vld [vmem:[%s1 + $0x98] sm:$0xff]
  %v407 = vld [vmem:[%s1 + $0xa0] sm:$0xff]
  %v408 = vld [vmem:[%s1 + $0xa8] sm:$0xff]
  %v409 = vld [vmem:[%s1 + $0xb0] sm:$0xff]
  %v410 = vld [vmem:[%s1 + $0xb8] sm:$0xff]
  %v411 = vld [vmem:[%s1 + $0xc0] sm:$0xff]
  %v412 = vld [vmem:[%s1 + $0xc8] sm:$0xff]
  %v413 = vld [vmem:[%s1 + $0xd0] sm:$0xff]
  %v414 = vld [vmem:[%s1 + $0xd8] sm:$0xff]
  %v415 = vld [vmem:[%s1 + $0xe0] sm:$0xff]
  %v416 = vld [vmem:[%s1 + $0xe8] sm:$0xff]
  %v417 = vld [vmem:[%s1 + $0xf0] sm:$0xff]
  %v418 = vld [vmem:[%s1 + $0xf8] sm:$0xff]
  %v419 = vld [vmem:[%s1 + $0x100] sm:$0xff]
  %v420 = vld [vmem:[%s1 + $0x108] sm:$0xff]
  %v421 = vld [vmem:[%s1 + $0x110] sm:$0xff]
  %v422 = vld [vmem:[%s1 + $0x118] sm:$0xff]
  %v423 = vld [vmem:[%s1 + $0x120] sm:$0xff]
  %v424 = vld [vmem:[%s1 + $0x128] sm:$0xff]
  %v425 = vld [vmem:[%s1 + $0x130] sm:$0xff]
  %v426 = vld [vmem:[%s1 + $0x138] sm:$0xff]
  %v427 = vld [vmem:[%s1 + $0x140] sm:$0xff]
  %v428 = vld [vmem:[%s1 + $0x148] sm:$0xff]
  %v429 = vld [vmem:[%s1 + $0x150] sm:$0xff]
  %v430 = vld [vmem:[%s1 + $0x158] sm:$0xff]
  %v431 = vld [vmem:[%s1 + $0x160] sm:$0xff]
  %v432 = vld [vmem:[%s1 + $0x168] sm:$0xff]
  %v433 = vld [vmem:[%s1 + $0x170] sm:$0xff]
  %v434 = vld [vmem:[%s1 + $0x178] sm:$0xff]
  %v435 = vld [vmem:[%s1 + $0x180] sm:$0xff]
  %v436 = vld [vmem:[%s1 + $0x188] sm:$0xff]
  %v437 = vld [vmem:[%s1 + $0x190] sm:$0xff]
  %v438 = vld [vmem:[%s1 + $0x198] sm:$0xff]
  %v439 = vld [vmem:[%s1 + $0x1a0] sm:$0xff]
  %v440 = vld [vmem:[%s1 + $0x1a8] sm:$0xff]
  %v441 = vld [vmem:[%s1 + $0x1b0] sm:$0xff]
  %v442 = vld [vmem:[%s1 + $0x1b8] sm:$0xff]
  %v443 = vld [vmem:[%s1 + $0x1c0] sm:$0xff]
  %v444 = vld [vmem:[%s1 + $0x1c8] sm:$0xff]
  %v445 = vld [vmem:[%s1 + $0x1d0] sm:$0xff]
  %v446 = vld [vmem:[%s1 + $0x1d8] sm:$0xff]
  %v447 = vld [vmem:[%s1 + $0x1e0] sm:$0xff]
  %v448 = vld [vmem:[%s1 + $0x1e8] sm:$0xff]
  %v449 = vld [vmem:[%s1 + $0x1f0] sm:$0xff]
  %v450 = vld [vmem:[%s1 + $0x1f8] sm:$0xff]
  %v451 = vld [vmem:[%s1 + $0x200] sm:$0xff]
  %v452 = vld [vmem:[%s1 + $0x208] sm:$0xff]
  %v453 = vld [vmem:[%s1 + $0x210] sm:$0xff]
  %v454 = vld [vmem:[%s1 + $0x218] sm:$0xff]
  %v455 = vld [vmem:[%s1 + $0x220] sm:$0xff]
  %v456 = vld [vmem:[%s1 + $0x228] sm:$0xff]
  %v457 = vld [vmem:[%s1 + $0x230] sm:$0xff]
  %v458 = vld [vmem:[%s1 + $0x238] sm:$0xff]
  %v459 = vpack.c.bf16 %v356, %v355
  %v460 = vpack.c.bf16 %v358, %v357
  %v461 = vpack.c.bf16 %v360, %v359
  %v462 = vpack.c.bf16 %v362, %v361
  %v463 = vpack.c.bf16 %v364, %v363
  %v464 = vpack.c.bf16 %v366, %v365
  %v465 = vpack.c.bf16 %v368, %v367
  %v466 = vpack.c.bf16 %v370, %v369
  %v467 = vpack.c.bf16 %v372, %v371
  %v468 = vpack.c.bf16 %v374, %v373
  %v469 = vpack.c.bf16 %v376, %v375
  %v470 = vpack.c.bf16 %v378, %v377
  %v471 = vpack.c.bf16 %v380, %v379
  %v472 = vpack.c.bf16 %v382, %v381
  %v473 = vpack.c.bf16 %v384, %v383
  %v474 = vpack.c.bf16 %v386, %v385
  %v547 = vunpack.c.l.b16 %v387
  %v548 = vunpack.c.h.b16 %v387
  %v549 = vunpack.c.l.b16 %v388
  %v550 = vunpack.c.h.b16 %v388
  %v551 = vunpack.c.l.b16 %v389
  %v552 = vunpack.c.h.b16 %v389
  %v553 = vunpack.c.l.b16 %v390
  %v554 = vunpack.c.h.b16 %v390
  %v555 = vunpack.c.l.b16 %v391
  %v556 = vunpack.c.h.b16 %v391
  %v557 = vunpack.c.l.b16 %v392
  %v558 = vunpack.c.h.b16 %v392
  %v559 = vunpack.c.l.b16 %v393
  %v560 = vunpack.c.h.b16 %v393
  %v561 = vunpack.c.l.b16 %v394
  %v562 = vunpack.c.h.b16 %v394
  %v563 = vunpack.c.l.b16 %v395
  %v564 = vunpack.c.h.b16 %v395
  %v565 = vunpack.c.l.b16 %v396
  %v566 = vunpack.c.h.b16 %v396
  %v567 = vunpack.c.l.b16 %v397
  %v568 = vunpack.c.h.b16 %v397
  %v569 = vunpack.c.l.b16 %v398
  %v570 = vunpack.c.h.b16 %v398
  %v571 = vunpack.c.l.b16 %v399
  %v572 = vunpack.c.h.b16 %v399
  %v573 = vunpack.c.l.b16 %v400
  %v574 = vunpack.c.h.b16 %v400
  %v575 = vunpack.c.l.b16 %v401
  %v576 = vunpack.c.h.b16 %v401
  %v577 = vunpack.c.l.b16 %v402
  %v578 = vunpack.c.h.b16 %v402
  %v579 = vunpack.c.l.b16 %v403
  %v580 = vunpack.c.h.b16 %v403
  %v581 = vunpack.c.l.b16 %v404
  %v582 = vunpack.c.h.b16 %v404
  %v583 = vunpack.c.l.b16 %v405
  %v584 = vunpack.c.h.b16 %v405
  %v585 = vunpack.c.l.b16 %v406
  %v586 = vunpack.c.h.b16 %v406
  %v587 = vunpack.c.l.b16 %v407
  %v588 = vunpack.c.h.b16 %v407
  %v589 = vunpack.c.l.b16 %v408
  %v590 = vunpack.c.h.b16 %v408
  %v591 = vunpack.c.l.b16 %v409
  %v592 = vunpack.c.h.b16 %v409
  %v593 = vunpack.c.l.b16 %v410
  %v594 = vunpack.c.h.b16 %v410
  %v595 = vunpack.c.l.b16 %v411
  %v596 = vunpack.c.h.b16 %v411
  %v597 = vunpack.c.l.b16 %v412
  %v598 = vunpack.c.h.b16 %v412
  %v599 = vunpack.c.l.b16 %v413
  %v600 = vunpack.c.h.b16 %v413
  %v601 = vunpack.c.l.b16 %v414
  %v602 = vunpack.c.h.b16 %v414
  %v603 = vunpack.c.l.b16 %v415
  %v604 = vunpack.c.h.b16 %v415
  %v605 = vunpack.c.l.b16 %v416
  %v606 = vunpack.c.h.b16 %v416
  %v607 = vunpack.c.l.b16 %v417
  %v608 = vunpack.c.h.b16 %v417
  %v609 = vunpack.c.l.b16 %v418
  %v610 = vunpack.c.h.b16 %v418
  %v611 = vunpack.c.l.b16 %v419
  %v612 = vunpack.c.h.b16 %v419
  %v613 = vunpack.c.l.b16 %v420
  %v614 = vunpack.c.h.b16 %v420
  %v615 = vunpack.c.l.b16 %v421
  %v616 = vunpack.c.h.b16 %v421
  %v617 = vunpack.c.l.b16 %v422
  %v618 = vunpack.c.h.b16 %v422
  %v619 = vunpack.c.l.b16 %v423
  %v620 = vunpack.c.h.b16 %v423
  %v621 = vunpack.c.l.b16 %v424
  %v622 = vunpack.c.h.b16 %v424
  %v623 = vunpack.c.l.b16 %v425
  %v624 = vunpack.c.h.b16 %v425
  %v625 = vunpack.c.l.b16 %v426
  %v626 = vunpack.c.h.b16 %v426
  %v627 = vunpack.c.l.b16 %v427
  %v628 = vunpack.c.h.b16 %v427
  %v629 = vunpack.c.l.b16 %v428
  %v630 = vunpack.c.h.b16 %v428
  %v631 = vunpack.c.l.b16 %v429
  %v632 = vunpack.c.h.b16 %v429
  %v633 = vunpack.c.l.b16 %v430
  %v634 = vunpack.c.h.b16 %v430
  %v635 = vunpack.c.l.b16 %v431
  %v636 = vunpack.c.h.b16 %v431
  %v637 = vunpack.c.l.b16 %v432
  %v638 = vunpack.c.h.b16 %v432
  %v639 = vunpack.c.l.b16 %v433
  %v640 = vunpack.c.h.b16 %v433
  %v641 = vunpack.c.l.b16 %v434
  %v642 = vunpack.c.h.b16 %v434
  %v643 = vunpack.c.l.b16 %v435
  %v644 = vunpack.c.h.b16 %v435
  %v645 = vunpack.c.l.b16 %v436
  %v646 = vunpack.c.h.b16 %v436
  %v647 = vunpack.c.l.b16 %v437
  %v648 = vunpack.c.h.b16 %v437
  %v649 = vunpack.c.l.b16 %v438
  %v650 = vunpack.c.h.b16 %v438
  %v651 = vunpack.c.l.b16 %v439
  %v652 = vunpack.c.h.b16 %v439
  %v653 = vunpack.c.l.b16 %v440
  %v654 = vunpack.c.h.b16 %v440
  %v655 = vunpack.c.l.b16 %v441
  %v656 = vunpack.c.h.b16 %v441
  %v657 = vunpack.c.l.b16 %v442
  %v658 = vunpack.c.h.b16 %v442
  %v659 = vunpack.c.l.b16 %v443
  %v660 = vunpack.c.h.b16 %v443
  %v661 = vunpack.c.l.b16 %v444
  %v662 = vunpack.c.h.b16 %v444
  %v663 = vunpack.c.l.b16 %v445
  %v664 = vunpack.c.h.b16 %v445
  %v665 = vunpack.c.l.b16 %v446
  %v666 = vunpack.c.h.b16 %v446
  %v667 = vunpack.c.l.b16 %v447
  %v668 = vunpack.c.h.b16 %v447
  %v669 = vunpack.c.l.b16 %v448
  %v670 = vunpack.c.h.b16 %v448
  %v671 = vunpack.c.l.b16 %v449
  %v672 = vunpack.c.h.b16 %v449
  %v673 = vunpack.c.l.b16 %v450
  %v674 = vunpack.c.h.b16 %v450
  %v675 = vunpack.c.l.b16 %v451
  %v676 = vunpack.c.h.b16 %v451
  %v677 = vunpack.c.l.b16 %v452
  %v678 = vunpack.c.h.b16 %v452
  %v679 = vunpack.c.l.b16 %v453
  %v680 = vunpack.c.h.b16 %v453
  %v681 = vunpack.c.l.b16 %v454
  %v682 = vunpack.c.h.b16 %v454
  %v683 = vunpack.c.l.b16 %v455
  %v684 = vunpack.c.h.b16 %v455
  %v685 = vunpack.c.l.b16 %v456
  %v686 = vunpack.c.h.b16 %v456
  %v687 = vunpack.c.l.b16 %v457
  %v688 = vunpack.c.h.b16 %v457
  %v689 = vunpack.c.l.b16 %v458
  %v690 = vunpack.c.h.b16 %v458
  %v691 = vpack.c.b16 %v549, %v547
  %v692 = vpack.c.b16 %v550, %v548
  %v693 = vpack.c.b16 %v553, %v551
  %v694 = vpack.c.b16 %v554, %v552
  %v695 = vpack.c.b16 %v557, %v555
  %v696 = vpack.c.b16 %v558, %v556
  %v697 = vpack.c.b16 %v561, %v559
  %v698 = vpack.c.b16 %v562, %v560
  %v699 = vpack.c.b16 %v565, %v563
  %v700 = vpack.c.b16 %v566, %v564
  %v701 = vpack.c.b16 %v569, %v567
  %v702 = vpack.c.b16 %v570, %v568
  %v703 = vpack.c.b16 %v573, %v571
  %v704 = vpack.c.b16 %v574, %v572
  %v705 = vpack.c.b16 %v577, %v575
  %v706 = vpack.c.b16 %v578, %v576
  %v707 = vpack.c.b16 %v581, %v579
  %v708 = vpack.c.b16 %v582, %v580
  %v709 = vpack.c.b16 %v585, %v583
  %v710 = vpack.c.b16 %v586, %v584
  %v711 = vpack.c.b16 %v589, %v587
  %v712 = vpack.c.b16 %v590, %v588
  %v713 = vpack.c.b16 %v593, %v591
  %v714 = vpack.c.b16 %v594, %v592
  %v715 = vpack.c.b16 %v597, %v595
  %v716 = vpack.c.b16 %v598, %v596
  %v717 = vpack.c.b16 %v601, %v599
  %v718 = vpack.c.b16 %v602, %v600
  %v719 = vpack.c.b16 %v605, %v603
  %v720 = vpack.c.b16 %v606, %v604
  %v721 = vpack.c.b16 %v609, %v607
  %v722 = vpack.c.b16 %v610, %v608
  %v723 = vpack.c.b16 %v613, %v611
  %v724 = vpack.c.b16 %v614, %v612
  %v725 = vpack.c.b16 %v617, %v615
  %v726 = vpack.c.b16 %v618, %v616
  %v727 = vpack.c.b16 %v621, %v619
  %v728 = vpack.c.b16 %v622, %v620
  %v729 = vpack.c.b16 %v625, %v623
  %v730 = vpack.c.b16 %v626, %v624
  %v731 = vpack.c.b16 %v629, %v627
  %v732 = vpack.c.b16 %v630, %v628
  %v733 = vpack.c.b16 %v633, %v631
  %v734 = vpack.c.b16 %v634, %v632
  %v735 = vpack.c.b16 %v637, %v635
  %v736 = vpack.c.b16 %v638, %v636
  %v737 = vpack.c.b16 %v641, %v639
  %v738 = vpack.c.b16 %v642, %v640
  %v739 = vpack.c.b16 %v645, %v643
  %v740 = vpack.c.b16 %v646, %v644
  %v741 = vpack.c.b16 %v649, %v647
  %v742 = vpack.c.b16 %v650, %v648
  %v743 = vpack.c.b16 %v653, %v651
  %v744 = vpack.c.b16 %v654, %v652
  %v745 = vpack.c.b16 %v657, %v655
  %v746 = vpack.c.b16 %v658, %v656
  %v747 = vpack.c.b16 %v661, %v659
  %v748 = vpack.c.b16 %v662, %v660
  %v749 = vpack.c.b16 %v665, %v663
  %v750 = vpack.c.b16 %v666, %v664
  %v751 = vpack.c.b16 %v669, %v667
  %v752 = vpack.c.b16 %v670, %v668
  %v753 = vpack.c.b16 %v673, %v671
  %v754 = vpack.c.b16 %v674, %v672
  %v755 = vpack.c.b16 %v677, %v675
  %v756 = vpack.c.b16 %v678, %v676
  %v757 = vpack.c.b16 %v681, %v679
  %v758 = vpack.c.b16 %v682, %v680
  %v759 = vpack.c.b16 %v685, %v683
  %v760 = vpack.c.b16 %v686, %v684
  %v761 = vpack.c.b16 %v689, %v687
  %v762 = vpack.c.b16 %v690, %v688
  %835 = vmatpush.bf16.msra.mxu0 %v466
  %836 = vmatpush.bf16.msra.mxu0 %v465
  %837 = vmatpush.bf16.msra.mxu0 %v464
  %838 = vmatpush.bf16.msra.mxu0 %v463
  %839 = vmatpush.bf16.msra.mxu0 %v462
  %840 = vmatpush.bf16.msra.mxu0 %v461
  %841 = vmatpush.bf16.msra.mxu0 %v460
  %842 = vmatpush.bf16.msra.mxu0 %v459
  %843 = vmatmul.bf16.gmra.mxu0 %v691
  %v844 = vpop.f32.mrf.mxu0
  %v845 = vadd.f32 0.0, %v844
  %v846 = vpop.f32.mrf.mxu0
  %v847 = vadd.f32 0.0, %v846
  %848 = vmatmul.bf16.gmra.mxu0 %v693
  %v849 = vpop.f32.mrf.mxu0
  %v850 = vadd.f32 0.0, %v849
  %v851 = vpop.f32.mrf.mxu0
  %v852 = vadd.f32 0.0, %v851
  %853 = vmatmul.bf16.gmra.mxu0 %v695
  %v854 = vpop.f32.mrf.mxu0
  %v855 = vadd.f32 0.0, %v854
  %v856 = vpop.f32.mrf.mxu0
  %v857 = vadd.f32 0.0, %v856
  %858 = vmatmul.bf16.gmra.mxu0 %v697
  %v859 = vpop.f32.mrf.mxu0
  %v860 = vadd.f32 0.0, %v859
  %v861 = vpop.f32.mrf.mxu0
  %v862 = vadd.f32 0.0, %v861
  %863 = vmatmul.bf16.gmra.mxu0 %v699
  %v864 = vpop.f32.mrf.mxu0
  %v865 = vadd.f32 0.0, %v864
  %v866 = vpop.f32.mrf.mxu0
  %v867 = vadd.f32 0.0, %v866
  %868 = vmatmul.bf16.gmra.mxu0 %v701
  %v869 = vpop.f32.mrf.mxu0
  %v870 = vadd.f32 0.0, %v869
  %v871 = vpop.f32.mrf.mxu0
  %v872 = vadd.f32 0.0, %v871
  %873 = vmatmul.bf16.gmra.mxu0 %v703
  %v874 = vpop.f32.mrf.mxu0
  %v875 = vadd.f32 0.0, %v874
  %v876 = vpop.f32.mrf.mxu0
  %v877 = vadd.f32 0.0, %v876
  %878 = vmatmul.bf16.gmra.mxu0 %v705
  %v879 = vpop.f32.mrf.mxu0
  %v880 = vadd.f32 0.0, %v879
  %v881 = vpop.f32.mrf.mxu0
  %v882 = vadd.f32 0.0, %v881
  %883 = vmatmul.bf16.gmra.mxu0 %v707
  %v884 = vpop.f32.mrf.mxu0
  %v885 = vadd.f32 0.0, %v884
  %v886 = vpop.f32.mrf.mxu0
  %v887 = vadd.f32 0.0, %v886
  %888 = vmatmul.bf16.gmra.mxu0 %v709
  %v889 = vpop.f32.mrf.mxu0
  %v890 = vadd.f32 0.0, %v889
  %v891 = vpop.f32.mrf.mxu0
  %v892 = vadd.f32 0.0, %v891
  %893 = vmatmul.bf16.gmra.mxu0 %v711
  %v894 = vpop.f32.mrf.mxu0
  %v895 = vadd.f32 0.0, %v894
  %v896 = vpop.f32.mrf.mxu0
  %v897 = vadd.f32 0.0, %v896
  %898 = vmatmul.bf16.gmra.mxu0 %v713
  %v899 = vpop.f32.mrf.mxu0
  %v900 = vadd.f32 0.0, %v899
  %v901 = vpop.f32.mrf.mxu0
  %v902 = vadd.f32 0.0, %v901
  %903 = vmatmul.bf16.gmra.mxu0 %v715
  %v904 = vpop.f32.mrf.mxu0
  %v905 = vadd.f32 0.0, %v904
  %v906 = vpop.f32.mrf.mxu0
  %v907 = vadd.f32 0.0, %v906
  %908 = vmatmul.bf16.gmra.mxu0 %v717
  %v909 = vpop.f32.mrf.mxu0
  %v910 = vadd.f32 0.0, %v909
  %v911 = vpop.f32.mrf.mxu0
  %v912 = vadd.f32 0.0, %v911
  %913 = vmatmul.bf16.gmra.mxu0 %v719
  %v914 = vpop.f32.mrf.mxu0
  %v915 = vadd.f32 0.0, %v914
  %v916 = vpop.f32.mrf.mxu0
  %v917 = vadd.f32 0.0, %v916
  %918 = vmatmul.bf16.gmra.mxu0 %v721
  %v919 = vpop.f32.mrf.mxu0
  %v920 = vadd.f32 0.0, %v919
  %v921 = vpop.f32.mrf.mxu0
  %v922 = vadd.f32 0.0, %v921
  %923 = vmatmul.bf16.gmra.mxu0 %v723
  %v924 = vpop.f32.mrf.mxu0
  %v925 = vadd.f32 0.0, %v924
  %v926 = vpop.f32.mrf.mxu0
  %v927 = vadd.f32 0.0, %v926
  %928 = vmatmul.bf16.gmra.mxu0 %v725
  %v929 = vpop.f32.mrf.mxu0
  %v930 = vadd.f32 0.0, %v929
  %v931 = vpop.f32.mrf.mxu0
  %v932 = vadd.f32 0.0, %v931
  %933 = vmatmul.bf16.gmra.mxu0 %v727
  %v934 = vpop.f32.mrf.mxu0
  %v935 = vadd.f32 0.0, %v934
  %v936 = vpop.f32.mrf.mxu0
  %v937 = vadd.f32 0.0, %v936
  %938 = vmatmul.bf16.gmra.mxu0 %v729
  %v939 = vpop.f32.mrf.mxu0
  %v940 = vadd.f32 0.0, %v939
  %v941 = vpop.f32.mrf.mxu0
  %v942 = vadd.f32 0.0, %v941
  %943 = vmatmul.bf16.gmra.mxu0 %v731
  %v944 = vpop.f32.mrf.mxu0
  %v945 = vadd.f32 0.0, %v944
  %v946 = vpop.f32.mrf.mxu0
  %v947 = vadd.f32 0.0, %v946
  %948 = vmatmul.bf16.gmra.mxu0 %v733
  %v949 = vpop.f32.mrf.mxu0
  %v950 = vadd.f32 0.0, %v949
  %v951 = vpop.f32.mrf.mxu0
  %v952 = vadd.f32 0.0, %v951
  %953 = vmatmul.bf16.gmra.mxu0 %v735
  %v954 = vpop.f32.mrf.mxu0
  %v955 = vadd.f32 0.0, %v954
  %v956 = vpop.f32.mrf.mxu0
  %v957 = vadd.f32 0.0, %v956
  %958 = vmatmul.bf16.gmra.mxu0 %v737
  %v959 = vpop.f32.mrf.mxu0
  %v960 = vadd.f32 0.0, %v959
  %v961 = vpop.f32.mrf.mxu0
  %v962 = vadd.f32 0.0, %v961
  %963 = vmatmul.bf16.gmra.mxu0 %v739
  %v964 = vpop.f32.mrf.mxu0
  %v965 = vadd.f32 0.0, %v964
  %v966 = vpop.f32.mrf.mxu0
  %v967 = vadd.f32 0.0, %v966
  %968 = vmatmul.bf16.gmra.mxu0 %v741
  %v969 = vpop.f32.mrf.mxu0
  %v970 = vadd.f32 0.0, %v969
  %v971 = vpop.f32.mrf.mxu0
  %v972 = vadd.f32 0.0, %v971
  %973 = vmatmul.bf16.gmra.mxu0 %v743
  %v974 = vpop.f32.mrf.mxu0
  %v975 = vadd.f32 0.0, %v974
  %v976 = vpop.f32.mrf.mxu0
  %v977 = vadd.f32 0.0, %v976
  %978 = vmatmul.bf16.gmra.mxu0 %v745
  %v979 = vpop.f32.mrf.mxu0
  %v980 = vadd.f32 0.0, %v979
  %v981 = vpop.f32.mrf.mxu0
  %v982 = vadd.f32 0.0, %v981
  %983 = vmatmul.bf16.gmra.mxu0 %v747
  %v984 = vpop.f32.mrf.mxu0
  %v985 = vadd.f32 0.0, %v984
  %v986 = vpop.f32.mrf.mxu0
  %v987 = vadd.f32 0.0, %v986
  %988 = vmatmul.bf16.gmra.mxu0 %v749
  %v989 = vpop.f32.mrf.mxu0
  %v990 = vadd.f32 0.0, %v989
  %v991 = vpop.f32.mrf.mxu0
  %v992 = vadd.f32 0.0, %v991
  %993 = vmatmul.bf16.gmra.mxu0 %v751
  %v994 = vpop.f32.mrf.mxu0
  %v995 = vadd.f32 0.0, %v994
  %v996 = vpop.f32.mrf.mxu0
  %v997 = vadd.f32 0.0, %v996
  %998 = vmatmul.bf16.gmra.mxu0 %v753
  %v999 = vpop.f32.mrf.mxu0
  %v1000 = vadd.f32 0.0, %v999
  %v1001 = vpop.f32.mrf.mxu0
  %v1002 = vadd.f32 0.0, %v1001
  %1003 = vmatmul.bf16.gmra.mxu0 %v755
  %v1004 = vpop.f32.mrf.mxu0
  %v1005 = vadd.f32 0.0, %v1004
  %v1006 = vpop.f32.mrf.mxu0
  %v1007 = vadd.f32 0.0, %v1006
  %1008 = vmatmul.bf16.gmra.mxu0 %v757
  %v1009 = vpop.f32.mrf.mxu0
  %v1010 = vadd.f32 0.0, %v1009
  %v1011 = vpop.f32.mrf.mxu0
  %v1012 = vadd.f32 0.0, %v1011
  %1013 = vmatmul.bf16.gmra.mxu0 %v759
  %v1014 = vpop.f32.mrf.mxu0
  %v1015 = vadd.f32 0.0, %v1014
  %v1016 = vpop.f32.mrf.mxu0
  %v1017 = vadd.f32 0.0, %v1016
  %1018 = vmatmul.bf16.gmra.mxu0 %v761
  %v1019 = vpop.f32.mrf.mxu0
  %v1020 = vadd.f32 0.0, %v1019
  %v1021 = vpop.f32.mrf.mxu0
  %v1022 = vadd.f32 0.0, %v1021
  %1023 = vdwg.mxu0
  %1024 = vmatpush.bf16.msra.mxu0 %v474
  %1025 = vmatpush.bf16.msra.mxu0 %v473
  %1026 = vmatpush.bf16.msra.mxu0 %v472
  %1027 = vmatpush.bf16.msra.mxu0 %v471
  %1028 = vmatpush.bf16.msra.mxu0 %v470
  %1029 = vmatpush.bf16.msra.mxu0 %v469
  %1030 = vmatpush.bf16.msra.mxu0 %v468
  %1031 = vmatpush.bf16.msra.mxu0 %v467
  %1032 = vmatmul.bf16.gmra.mxu0 %v692
  %v1033 = vpop.f32.mrf.mxu0
  %v1034 = vadd.f32 %v845, %v1033
  %v1035 = vpop.f32.mrf.mxu0
  %v1036 = vadd.f32 %v847, %v1035
  %1037 = vmatmul.bf16.gmra.mxu0 %v694
  %v1038 = vpop.f32.mrf.mxu0
  %v1039 = vadd.f32 %v850, %v1038
  %v1040 = vpop.f32.mrf.mxu0
  %v1041 = vadd.f32 %v852, %v1040
  %1042 = vmatmul.bf16.gmra.mxu0 %v696
  %v1043 = vpop.f32.mrf.mxu0
  %v1044 = vadd.f32 %v855, %v1043
  %v1045 = vpop.f32.mrf.mxu0
  %v1046 = vadd.f32 %v857, %v1045
  %1047 = vmatmul.bf16.gmra.mxu0 %v698
  %v1048 = vpop.f32.mrf.mxu0
  %v1049 = vadd.f32 %v860, %v1048
  %v1050 = vpop.f32.mrf.mxu0
  %v1051 = vadd.f32 %v862, %v1050
  %1052 = vmatmul.bf16.gmra.mxu0 %v700
  %v1053 = vpop.f32.mrf.mxu0
  %v1054 = vadd.f32 %v865, %v1053
  %v1055 = vpop.f32.mrf.mxu0
  %v1056 = vadd.f32 %v867, %v1055
  %1057 = vmatmul.bf16.gmra.mxu0 %v702
  %v1058 = vpop.f32.mrf.mxu0
  %v1059 = vadd.f32 %v870, %v1058
  %v1060 = vpop.f32.mrf.mxu0
  %v1061 = vadd.f32 %v872, %v1060
  %1062 = vmatmul.bf16.gmra.mxu0 %v704
  %v1063 = vpop.f32.mrf.mxu0
  %v1064 = vadd.f32 %v875, %v1063
  %v1065 = vpop.f32.mrf.mxu0
  %v1066 = vadd.f32 %v877, %v1065
  %1067 = vmatmul.bf16.gmra.mxu0 %v706
  %v1068 = vpop.f32.mrf.mxu0
  %v1069 = vadd.f32 %v880, %v1068
  %v1070 = vpop.f32.mrf.mxu0
  %v1071 = vadd.f32 %v882, %v1070
  %1072 = vmatmul.bf16.gmra.mxu0 %v708
  %v1073 = vpop.f32.mrf.mxu0
  %v1074 = vadd.f32 %v885, %v1073
  %v1075 = vpop.f32.mrf.mxu0
  %v1076 = vadd.f32 %v887, %v1075
  %1077 = vmatmul.bf16.gmra.mxu0 %v710
  %v1078 = vpop.f32.mrf.mxu0
  %v1079 = vadd.f32 %v890, %v1078
  %v1080 = vpop.f32.mrf.mxu0
  %v1081 = vadd.f32 %v892, %v1080
  %1082 = vmatmul.bf16.gmra.mxu0 %v712
  %v1083 = vpop.f32.mrf.mxu0
  %v1084 = vadd.f32 %v895, %v1083
  %v1085 = vpop.f32.mrf.mxu0
  %v1086 = vadd.f32 %v897, %v1085
  %1087 = vmatmul.bf16.gmra.mxu0 %v714
  %v1088 = vpop.f32.mrf.mxu0
  %v1089 = vadd.f32 %v900, %v1088
  %v1090 = vpop.f32.mrf.mxu0
  %v1091 = vadd.f32 %v902, %v1090
  %1092 = vmatmul.bf16.gmra.mxu0 %v716
  %v1093 = vpop.f32.mrf.mxu0
  %v1094 = vadd.f32 %v905, %v1093
  %v1095 = vpop.f32.mrf.mxu0
  %v1096 = vadd.f32 %v907, %v1095
  %1097 = vmatmul.bf16.gmra.mxu0 %v718
  %v1098 = vpop.f32.mrf.mxu0
  %v1099 = vadd.f32 %v910, %v1098
  %v1100 = vpop.f32.mrf.mxu0
  %v1101 = vadd.f32 %v912, %v1100
  %1102 = vmatmul.bf16.gmra.mxu0 %v720
  %v1103 = vpop.f32.mrf.mxu0
  %v1104 = vadd.f32 %v915, %v1103
  %v1105 = vpop.f32.mrf.mxu0
  %v1106 = vadd.f32 %v917, %v1105
  %1107 = vmatmul.bf16.gmra.mxu0 %v722
  %v1108 = vpop.f32.mrf.mxu0
  %v1109 = vadd.f32 %v920, %v1108
  %v1110 = vpop.f32.mrf.mxu0
  %v1111 = vadd.f32 %v922, %v1110
  %1112 = vmatmul.bf16.gmra.mxu0 %v724
  %v1113 = vpop.f32.mrf.mxu0
  %v1114 = vadd.f32 %v925, %v1113
  %v1115 = vpop.f32.mrf.mxu0
  %v1116 = vadd.f32 %v927, %v1115
  %1117 = vmatmul.bf16.gmra.mxu0 %v726
  %v1118 = vpop.f32.mrf.mxu0
  %v1119 = vadd.f32 %v930, %v1118
  %v1120 = vpop.f32.mrf.mxu0
  %v1121 = vadd.f32 %v932, %v1120
  %1122 = vmatmul.bf16.gmra.mxu0 %v728
  %v1123 = vpop.f32.mrf.mxu0
  %v1124 = vadd.f32 %v935, %v1123
  %v1125 = vpop.f32.mrf.mxu0
  %v1126 = vadd.f32 %v937, %v1125
  %1127 = vmatmul.bf16.gmra.mxu0 %v730
  %v1128 = vpop.f32.mrf.mxu0
  %v1129 = vadd.f32 %v940, %v1128
  %v1130 = vpop.f32.mrf.mxu0
  %v1131 = vadd.f32 %v942, %v1130
  %1132 = vmatmul.bf16.gmra.mxu0 %v732
  %v1133 = vpop.f32.mrf.mxu0
  %v1134 = vadd.f32 %v945, %v1133
  %v1135 = vpop.f32.mrf.mxu0
  %v1136 = vadd.f32 %v947, %v1135
  %1137 = vmatmul.bf16.gmra.mxu0 %v734
  %v1138 = vpop.f32.mrf.mxu0
  %v1139 = vadd.f32 %v950, %v1138
  %v1140 = vpop.f32.mrf.mxu0
  %v1141 = vadd.f32 %v952, %v1140
  %1142 = vmatmul.bf16.gmra.mxu0 %v736
  %v1143 = vpop.f32.mrf.mxu0
  %v1144 = vadd.f32 %v955, %v1143
  %v1145 = vpop.f32.mrf.mxu0
  %v1146 = vadd.f32 %v957, %v1145
  %1147 = vmatmul.bf16.gmra.mxu0 %v738
  %v1148 = vpop.f32.mrf.mxu0
  %v1149 = vadd.f32 %v960, %v1148
  %v1150 = vpop.f32.mrf.mxu0
  %v1151 = vadd.f32 %v962, %v1150
  %1152 = vmatmul.bf16.gmra.mxu0 %v740
  %v1153 = vpop.f32.mrf.mxu0
  %v1154 = vadd.f32 %v965, %v1153
  %v1155 = vpop.f32.mrf.mxu0
  %v1156 = vadd.f32 %v967, %v1155
  %1157 = vmatmul.bf16.gmra.mxu0 %v742
  %v1158 = vpop.f32.mrf.mxu0
  %v1159 = vadd.f32 %v970, %v1158
  %v1160 = vpop.f32.mrf.mxu0
  %v1161 = vadd.f32 %v972, %v1160
  %1162 = vmatmul.bf16.gmra.mxu0 %v744
  %v1163 = vpop.f32.mrf.mxu0
  %v1164 = vadd.f32 %v975, %v1163
  %v1165 = vpop.f32.mrf.mxu0
  %v1166 = vadd.f32 %v977, %v1165
  %1167 = vmatmul.bf16.gmra.mxu0 %v746
  %v1168 = vpop.f32.mrf.mxu0
  %v1169 = vadd.f32 %v980, %v1168
  %v1170 = vpop.f32.mrf.mxu0
  %v1171 = vadd.f32 %v982, %v1170
  %1172 = vmatmul.bf16.gmra.mxu0 %v748
  %v1173 = vpop.f32.mrf.mxu0
  %v1174 = vadd.f32 %v985, %v1173
  %v1175 = vpop.f32.mrf.mxu0
  %v1176 = vadd.f32 %v987, %v1175
  %1177 = vmatmul.bf16.gmra.mxu0 %v750
  %v1178 = vpop.f32.mrf.mxu0
  %v1179 = vadd.f32 %v990, %v1178
  %v1180 = vpop.f32.mrf.mxu0
  %v1181 = vadd.f32 %v992, %v1180
  %1182 = vmatmul.bf16.gmra.mxu0 %v752
  %v1183 = vpop.f32.mrf.mxu0
  %v1184 = vadd.f32 %v995, %v1183
  %v1185 = vpop.f32.mrf.mxu0
  %v1186 = vadd.f32 %v997, %v1185
  %1187 = vmatmul.bf16.gmra.mxu0 %v754
  %v1188 = vpop.f32.mrf.mxu0
  %v1189 = vadd.f32 %v1000, %v1188
  %v1190 = vpop.f32.mrf.mxu0
  %v1191 = vadd.f32 %v1002, %v1190
  %1192 = vmatmul.bf16.gmra.mxu0 %v756
  %v1193 = vpop.f32.mrf.mxu0
  %v1194 = vadd.f32 %v1005, %v1193
  %v1195 = vpop.f32.mrf.mxu0
  %v1196 = vadd.f32 %v1007, %v1195
  %1197 = vmatmul.bf16.gmra.mxu0 %v758
  %v1198 = vpop.f32.mrf.mxu0
  %v1199 = vadd.f32 %v1010, %v1198
  %v1200 = vpop.f32.mrf.mxu0
  %v1201 = vadd.f32 %v1012, %v1200
  %1202 = vmatmul.bf16.gmra.mxu0 %v760
  %v1203 = vpop.f32.mrf.mxu0
  %v1204 = vadd.f32 %v1015, %v1203
  %v1205 = vpop.f32.mrf.mxu0
  %v1206 = vadd.f32 %v1017, %v1205
  %1207 = vmatmul.bf16.gmra.mxu0 %v762
  %v1208 = vpop.f32.mrf.mxu0
  %v1209 = vadd.f32 %v1020, %v1208
  %v1210 = vpop.f32.mrf.mxu0
  %v1211 = vadd.f32 %v1022, %v1210
  %1212 = vdwg.mxu0
  %v1213 = vpack.c.bf16 %v1034, %v1034
  %v1214 = vpack.c.bf16 %v1036, %v1036
  %v1215 = vpack.c.bf16 %v1039, %v1039
  %v1216 = vpack.c.bf16 %v1041, %v1041
  %v1217 = vpack.c.bf16 %v1044, %v1044
  %v1218 = vpack.c.bf16 %v1046, %v1046
  %v1219 = vpack.c.bf16 %v1049, %v1049
  %v1220 = vpack.c.bf16 %v1051, %v1051
  %v1221 = vpack.c.bf16 %v1054, %v1054
  %v1222 = vpack.c.bf16 %v1056, %v1056
  %v1223 = vpack.c.bf16 %v1059, %v1059
  %v1224 = vpack.c.bf16 %v1061, %v1061
  %v1225 = vpack.c.bf16 %v1064, %v1064
  %v1226 = vpack.c.bf16 %v1066, %v1066
  %v1227 = vpack.c.bf16 %v1069, %v1069
  %v1228 = vpack.c.bf16 %v1071, %v1071
  %v1229 = vpack.c.bf16 %v1074, %v1074
  %v1230 = vpack.c.bf16 %v1076, %v1076
  %v1231 = vpack.c.bf16 %v1079, %v1079
  %v1232 = vpack.c.bf16 %v1081, %v1081
  %v1233 = vpack.c.bf16 %v1084, %v1084
  %v1234 = vpack.c.bf16 %v1086, %v1086
  %v1235 = vpack.c.bf16 %v1089, %v1089
  %v1236 = vpack.c.bf16 %v1091, %v1091
  %v1237 = vpack.c.bf16 %v1094, %v1094
  %v1238 = vpack.c.bf16 %v1096, %v1096
  %v1239 = vpack.c.bf16 %v1099, %v1099
  %v1240 = vpack.c.bf16 %v1101, %v1101
  %v1241 = vpack.c.bf16 %v1104, %v1104
  %v1242 = vpack.c.bf16 %v1106, %v1106
  %v1243 = vpack.c.bf16 %v1109, %v1109
  %v1244 = vpack.c.bf16 %v1111, %v1111
  %v1245 = vpack.c.bf16 %v1114, %v1114
  %v1246 = vpack.c.bf16 %v1116, %v1116
  %v1247 = vpack.c.bf16 %v1119, %v1119
  %v1248 = vpack.c.bf16 %v1121, %v1121
  %v1249 = vpack.c.bf16 %v1124, %v1124
  %v1250 = vpack.c.bf16 %v1126, %v1126
  %v1251 = vpack.c.bf16 %v1129, %v1129
  %v1252 = vpack.c.bf16 %v1131, %v1131
  %v1253 = vpack.c.bf16 %v1134, %v1134
  %v1254 = vpack.c.bf16 %v1136, %v1136
  %v1255 = vpack.c.bf16 %v1139, %v1139
  %v1256 = vpack.c.bf16 %v1141, %v1141
  %v1257 = vpack.c.bf16 %v1144, %v1144
  %v1258 = vpack.c.bf16 %v1146, %v1146
  %v1259 = vpack.c.bf16 %v1149, %v1149
  %v1260 = vpack.c.bf16 %v1151, %v1151
  %v1261 = vpack.c.bf16 %v1154, %v1154
  %v1262 = vpack.c.bf16 %v1156, %v1156
  %v1263 = vpack.c.bf16 %v1159, %v1159
  %v1264 = vpack.c.bf16 %v1161, %v1161
  %v1265 = vpack.c.bf16 %v1164, %v1164
  %v1266 = vpack.c.bf16 %v1166, %v1166
  %v1267 = vpack.c.bf16 %v1169, %v1169
  %v1268 = vpack.c.bf16 %v1171, %v1171
  %v1269 = vpack.c.bf16 %v1174, %v1174
  %v1270 = vpack.c.bf16 %v1176, %v1176
  %v1271 = vpack.c.bf16 %v1179, %v1179
  %v1272 = vpack.c.bf16 %v1181, %v1181
  %v1273 = vpack.c.bf16 %v1184, %v1184
  %v1274 = vpack.c.bf16 %v1186, %v1186
  %v1275 = vpack.c.bf16 %v1189, %v1189
  %v1276 = vpack.c.bf16 %v1191, %v1191
  %v1277 = vpack.c.bf16 %v1194, %v1194
  %v1278 = vpack.c.bf16 %v1196, %v1196
  %v1279 = vpack.c.bf16 %v1199, %v1199
  %v1280 = vpack.c.bf16 %v1201, %v1201
  %v1281 = vpack.c.bf16 %v1204, %v1204
  %v1282 = vpack.c.bf16 %v1206, %v1206
  %v1283 = vpack.c.bf16 %v1209, %v1209
  %v1284 = vpack.c.bf16 %v1211, %v1211
  %v1293 = vunpack.c.l.b16 %v1213
  %v1294 = vunpack.c.l.b16 %v1214
  %v1295 = vunpack.c.l.b16 %v1215
  %v1296 = vunpack.c.l.b16 %v1216
  %v1297 = vunpack.c.l.b16 %v1217
  %v1298 = vunpack.c.l.b16 %v1218
  %v1299 = vunpack.c.l.b16 %v1219
  %v1300 = vunpack.c.l.b16 %v1220
  %v1301 = vpack.c.b16 %v1294, %v1293
  %v1302 = vpack.c.b16 %v1296, %v1295
  %v1303 = vpack.c.b16 %v1298, %v1297
  %v1304 = vpack.c.b16 %v1300, %v1299
  %v1313 = vunpack.c.l.b16 %v1221
  %v1314 = vunpack.c.l.b16 %v1222
  %v1315 = vunpack.c.l.b16 %v1223
  %v1316 = vunpack.c.l.b16 %v1224
  %v1317 = vunpack.c.l.b16 %v1225
  %v1318 = vunpack.c.l.b16 %v1226
  %v1319 = vunpack.c.l.b16 %v1227
  %v1320 = vunpack.c.l.b16 %v1228
  %v1321 = vpack.c.b16 %v1314, %v1313
  %v1322 = vpack.c.b16 %v1316, %v1315
  %v1323 = vpack.c.b16 %v1318, %v1317
  %v1324 = vpack.c.b16 %v1320, %v1319
  %1325 = vrot.lane.b32.xlu0 %v1321, 32
  %v1326 = vpop.permute.xlu0 %1325
  %1327 = vrot.lane.b32.xlu0 %v1322, 32
  %v1328 = vpop.permute.xlu0 %1327
  %1329 = vrot.lane.b32.xlu0 %v1323, 32
  %v1330 = vpop.permute.xlu0 %1329
  %1331 = vrot.lane.b32.xlu0 %v1324, 32
  %v1332 = vpop.permute.xlu0 %1331
  %v1341 = vunpack.c.l.b16 %v1229
  %v1342 = vunpack.c.l.b16 %v1230
  %v1343 = vunpack.c.l.b16 %v1231
  %v1344 = vunpack.c.l.b16 %v1232
  %v1345 = vunpack.c.l.b16 %v1233
  %v1346 = vunpack.c.l.b16 %v1234
  %v1347 = vunpack.c.l.b16 %v1235
  %v1348 = vunpack.c.l.b16 %v1236
  %v1349 = vpack.c.b16 %v1342, %v1341
  %v1350 = vpack.c.b16 %v1344, %v1343
  %v1351 = vpack.c.b16 %v1346, %v1345
  %v1352 = vpack.c.b16 %v1348, %v1347
  %1353 = vrot.lane.b32.xlu0 %v1349, 64
  %v1354 = vpop.permute.xlu0 %1353
  %1355 = vrot.lane.b32.xlu0 %v1350, 64
  %v1356 = vpop.permute.xlu0 %1355
  %1357 = vrot.lane.b32.xlu0 %v1351, 64
  %v1358 = vpop.permute.xlu0 %1357
  %1359 = vrot.lane.b32.xlu0 %v1352, 64
  %v1360 = vpop.permute.xlu0 %1359
  %v1369 = vunpack.c.l.b16 %v1237
  %v1370 = vunpack.c.l.b16 %v1238
  %v1371 = vunpack.c.l.b16 %v1239
  %v1372 = vunpack.c.l.b16 %v1240
  %v1373 = vunpack.c.l.b16 %v1241
  %v1374 = vunpack.c.l.b16 %v1242
  %v1375 = vunpack.c.l.b16 %v1243
  %v1376 = vunpack.c.l.b16 %v1244
  %v1377 = vpack.c.b16 %v1370, %v1369
  %v1378 = vpack.c.b16 %v1372, %v1371
  %v1379 = vpack.c.b16 %v1374, %v1373
  %v1380 = vpack.c.b16 %v1376, %v1375
  %1381 = vrot.lane.b32.xlu0 %v1377, 96
  %v1382 = vpop.permute.xlu0 %1381
  %1383 = vrot.lane.b32.xlu0 %v1378, 96
  %v1384 = vpop.permute.xlu0 %1383
  %1385 = vrot.lane.b32.xlu0 %v1379, 96
  %v1386 = vpop.permute.xlu0 %1385
  %1387 = vrot.lane.b32.xlu0 %v1380, 96
  %v1388 = vpop.permute.xlu0 %1387
  %v1397 = vunpack.c.l.b16 %v1245
  %v1398 = vunpack.c.l.b16 %v1246
  %v1399 = vunpack.c.l.b16 %v1247
  %v1400 = vunpack.c.l.b16 %v1248
  %v1401 = vunpack.c.l.b16 %v1249
  %v1402 = vunpack.c.l.b16 %v1250
  %v1403 = vunpack.c.l.b16 %v1251
  %v1404 = vunpack.c.l.b16 %v1252
  %v1405 = vpack.c.b16 %v1398, %v1397
  %v1406 = vpack.c.b16 %v1400, %v1399
  %v1407 = vpack.c.b16 %v1402, %v1401
  %v1408 = vpack.c.b16 %v1404, %v1403
  %v1417 = vunpack.c.l.b16 %v1253
  %v1418 = vunpack.c.l.b16 %v1254
  %v1419 = vunpack.c.l.b16 %v1255
  %v1420 = vunpack.c.l.b16 %v1256
  %v1421 = vunpack.c.l.b16 %v1257
  %v1422 = vunpack.c.l.b16 %v1258
  %v1423 = vunpack.c.l.b16 %v1259
  %v1424 = vunpack.c.l.b16 %v1260
  %v1425 = vpack.c.b16 %v1418, %v1417
  %v1426 = vpack.c.b16 %v1420, %v1419
  %v1427 = vpack.c.b16 %v1422, %v1421
  %v1428 = vpack.c.b16 %v1424, %v1423
  %1429 = vrot.lane.b32.xlu0 %v1425, 32
  %v1430 = vpop.permute.xlu0 %1429
  %1431 = vrot.lane.b32.xlu0 %v1426, 32
  %v1432 = vpop.permute.xlu0 %1431
  %1433 = vrot.lane.b32.xlu0 %v1427, 32
  %v1434 = vpop.permute.xlu0 %1433
  %1435 = vrot.lane.b32.xlu0 %v1428, 32
  %v1436 = vpop.permute.xlu0 %1435
  %v1445 = vunpack.c.l.b16 %v1261
  %v1446 = vunpack.c.l.b16 %v1262
  %v1447 = vunpack.c.l.b16 %v1263
  %v1448 = vunpack.c.l.b16 %v1264
  %v1449 = vunpack.c.l.b16 %v1265
  %v1450 = vunpack.c.l.b16 %v1266
  %v1451 = vunpack.c.l.b16 %v1267
  %v1452 = vunpack.c.l.b16 %v1268
  %v1453 = vpack.c.b16 %v1446, %v1445
  %v1454 = vpack.c.b16 %v1448, %v1447
  %v1455 = vpack.c.b16 %v1450, %v1449
  %v1456 = vpack.c.b16 %v1452, %v1451
  %1457 = vrot.lane.b32.xlu0 %v1453, 64
  %v1458 = vpop.permute.xlu0 %1457
  %1459 = vrot.lane.b32.xlu0 %v1454, 64
  %v1460 = vpop.permute.xlu0 %1459
  %1461 = vrot.lane.b32.xlu0 %v1455, 64
  %v1462 = vpop.permute.xlu0 %1461
  %1463 = vrot.lane.b32.xlu0 %v1456, 64
  %v1464 = vpop.permute.xlu0 %1463
  %v1473 = vunpack.c.l.b16 %v1269
  %v1474 = vunpack.c.l.b16 %v1270
  %v1475 = vunpack.c.l.b16 %v1271
  %v1476 = vunpack.c.l.b16 %v1272
  %v1477 = vunpack.c.l.b16 %v1273
  %v1478 = vunpack.c.l.b16 %v1274
  %v1479 = vunpack.c.l.b16 %v1275
  %v1480 = vunpack.c.l.b16 %v1276
  %v1481 = vpack.c.b16 %v1474, %v1473
  %v1482 = vpack.c.b16 %v1476, %v1475
  %v1483 = vpack.c.b16 %v1478, %v1477
  %v1484 = vpack.c.b16 %v1480, %v1479
  %1485 = vrot.lane.b32.xlu0 %v1481, 96
  %v1486 = vpop.permute.xlu0 %1485
  %1487 = vrot.lane.b32.xlu0 %v1482, 96
  %v1488 = vpop.permute.xlu0 %1487
  %1489 = vrot.lane.b32.xlu0 %v1483, 96
  %v1490 = vpop.permute.xlu0 %1489
  %1491 = vrot.lane.b32.xlu0 %v1484, 96
  %v1492 = vpop.permute.xlu0 %1491
  %v1501 = vunpack.c.l.b16 %v1277
  %v1502 = vunpack.c.l.b16 %v1278
  %v1503 = vunpack.c.l.b16 %v1279
  %v1504 = vunpack.c.l.b16 %v1280
  %v1505 = vunpack.c.l.b16 %v1281
  %v1506 = vunpack.c.l.b16 %v1282
  %v1507 = vunpack.c.l.b16 %v1283
  %v1508 = vunpack.c.l.b16 %v1284
  %v1509 = vpack.c.b16 %v1502, %v1501
  %v1510 = vpack.c.b16 %v1504, %v1503
  %v1511 = vpack.c.b16 %v1506, %v1505
  %v1512 = vpack.c.b16 %v1508, %v1507
  %vm1513 = vcmask 261120
  %v1516 = vsel %vm1513, %v1301, %v1326
  %v1519 = vsel %vm1513, %v1302, %v1328
  %v1522 = vsel %vm1513, %v1303, %v1330
  %v1525 = vsel %vm1513, %v1304, %v1332
  %vm1526 = vcmask 523264
  %v1528 = vsel %vm1526, %v1516, %v1354
  %v1530 = vsel %vm1526, %v1519, %v1356
  %v1532 = vsel %vm1526, %v1522, %v1358
  %v1534 = vsel %vm1526, %v1525, %v1360
  %vm1535 = vcmask 785408
  %v1537 = vsel %vm1535, %v1528, %v1382
  %v1540 = vsel %vm1535, %v1530, %v1384
  %v1543 = vsel %vm1535, %v1532, %v1386
  %v1546 = vsel %vm1535, %v1534, %v1388
  %v1550 = vsel %vm1513, %v1405, %v1430
  %v1553 = vsel %vm1513, %v1406, %v1432
  %v1556 = vsel %vm1513, %v1407, %v1434
  %v1559 = vsel %vm1513, %v1408, %v1436
  %v1561 = vsel %vm1526, %v1550, %v1458
  %v1563 = vsel %vm1526, %v1553, %v1460
  %v1565 = vsel %vm1526, %v1556, %v1462
  %v1567 = vsel %vm1526, %v1559, %v1464
  %v1569 = vsel %vm1535, %v1561, %v1486
  %v1572 = vsel %vm1535, %v1563, %v1488
  %v1575 = vsel %vm1535, %v1565, %v1490
  %v1578 = vsel %vm1535, %v1567, %v1492
  %v1580 = vld [vmem:[%s7] sm:$0xf]
  %v1581 = vld [vmem:[%s7 + $0x4] sm:$0xf]
  %v1582 = vld [vmem:[%s7 + $0x8] sm:$0xf]
  %v1583 = vld [vmem:[%s7 + $0xc] sm:$0xf]
  %v1584 = vld [vmem:[%s7 + $0x10] sm:$0xf]
  %v1585 = vld [vmem:[%s7 + $0x14] sm:$0xf]
  %v1586 = vld [vmem:[%s7 + $0x18] sm:$0xf]
  %v1587 = vld [vmem:[%s7 + $0x1c] sm:$0xf]
  %v1588 = vld [vmem:[%s7 + $0x20] sm:$0xf]
  %v1589 = vld [vmem:[%s7 + $0x24] sm:$0xf]
  %v1590 = vld [vmem:[%s7 + $0x28] sm:$0xf]
  %v1591 = vld [vmem:[%s7 + $0x2c] sm:$0xf]
  %v1592 = vld [vmem:[%s7 + $0x30] sm:$0xf]
  %v1593 = vld [vmem:[%s7 + $0x34] sm:$0xf]
  %v1594 = vld [vmem:[%s7 + $0x38] sm:$0xf]
  %v1595 = vld [vmem:[%s7 + $0x3c] sm:$0xf]
  %v1596 = vld [vmem:[%s7 + $0x40] sm:$0xf]
  %v1597 = vld [vmem:[%s7 + $0x44] sm:$0xf]
  %v1598 = vld [vmem:[%s7 + $0x48] sm:$0xf]
  %v1599 = vld [vmem:[%s7 + $0x4c] sm:$0xf]
  %v1600 = vld [vmem:[%s7 + $0x50] sm:$0xf]
  %v1601 = vld [vmem:[%s7 + $0x54] sm:$0xf]
  %v1602 = vld [vmem:[%s7 + $0x58] sm:$0xf]
  %v1603 = vld [vmem:[%s7 + $0x5c] sm:$0xf]
  %v1604 = vld [vmem:[%s7 + $0x60] sm:$0xf]
  %v1605 = vld [vmem:[%s7 + $0x64] sm:$0xf]
  %v1606 = vld [vmem:[%s7 + $0x68] sm:$0xf]
  %v1607 = vld [vmem:[%s7 + $0x6c] sm:$0xf]
  %v1608 = vld [vmem:[%s7 + $0x70] sm:$0xf]
  %v1609 = vld [vmem:[%s7 + $0x74] sm:$0xf]
  %v1610 = vld [vmem:[%s7 + $0x78] sm:$0xf]
  %v1611 = vld [vmem:[%s7 + $0x7c] sm:$0xf]
  %v1612 = vld [vmem:[%s7 + $0x80] sm:$0xf]
  %v1613 = vld [vmem:[%s7 + $0x84] sm:$0xf]
  %v1614 = vld [vmem:[%s7 + $0x88] sm:$0xf]
  %v1615 = vld [vmem:[%s7 + $0x8c] sm:$0xf]
  %v1616 = vld [vmem:[%s13] sm:$0x1]
  %v1618 = vperm.slane %v1616, 0
  %v1656 = vunpack.c.l.b16 %v1580
  %v1657 = vunpack.c.l.b16 %v1581
  %v1658 = vunpack.c.l.b16 %v1582
  %v1659 = vunpack.c.l.b16 %v1583
  %v1660 = vunpack.c.l.b16 %v1584
  %v1661 = vunpack.c.l.b16 %v1585
  %v1662 = vunpack.c.l.b16 %v1586
  %v1663 = vunpack.c.l.b16 %v1587
  %v1664 = vunpack.c.l.b16 %v1588
  %v1665 = vunpack.c.l.b16 %v1589
  %v1666 = vunpack.c.l.b16 %v1590
  %v1667 = vunpack.c.l.b16 %v1591
  %v1668 = vunpack.c.l.b16 %v1592
  %v1669 = vunpack.c.l.b16 %v1593
  %v1670 = vunpack.c.l.b16 %v1594
  %v1671 = vunpack.c.l.b16 %v1595
  %v1672 = vunpack.c.l.b16 %v1596
  %v1673 = vunpack.c.l.b16 %v1597
  %v1674 = vunpack.c.l.b16 %v1598
  %v1675 = vunpack.c.l.b16 %v1599
  %v1676 = vunpack.c.l.b16 %v1600
  %v1677 = vunpack.c.l.b16 %v1601
  %v1678 = vunpack.c.l.b16 %v1602
  %v1679 = vunpack.c.l.b16 %v1603
  %v1680 = vunpack.c.l.b16 %v1604
  %v1681 = vunpack.c.l.b16 %v1605
  %v1682 = vunpack.c.l.b16 %v1606
  %v1683 = vunpack.c.l.b16 %v1607
  %v1684 = vunpack.c.l.b16 %v1608
  %v1685 = vunpack.c.l.b16 %v1609
  %v1686 = vunpack.c.l.b16 %v1610
  %v1687 = vunpack.c.l.b16 %v1611
  %v1688 = vunpack.c.l.b16 %v1612
  %v1689 = vunpack.c.l.b16 %v1613
  %v1690 = vunpack.c.l.b16 %v1614
  %v1691 = vunpack.c.l.b16 %v1615
  %v1692 = vpack.c.b16 %v1657, %v1656
  %v1693 = vpack.c.b16 %v1659, %v1658
  %v1694 = vpack.c.b16 %v1661, %v1660
  %v1695 = vpack.c.b16 %v1663, %v1662
  %v1696 = vpack.c.b16 %v1665, %v1664
  %v1697 = vpack.c.b16 %v1667, %v1666
  %v1698 = vpack.c.b16 %v1669, %v1668
  %v1699 = vpack.c.b16 %v1671, %v1670
  %v1700 = vpack.c.b16 %v1673, %v1672
  %v1701 = vpack.c.b16 %v1675, %v1674
  %v1702 = vpack.c.b16 %v1677, %v1676
  %v1703 = vpack.c.b16 %v1679, %v1678
  %v1704 = vpack.c.b16 %v1681, %v1680
  %v1705 = vpack.c.b16 %v1683, %v1682
  %v1706 = vpack.c.b16 %v1685, %v1684
  %v1707 = vpack.c.b16 %v1687, %v1686
  %v1708 = vpack.c.b16 %v1689, %v1688
  %v1709 = vpack.c.b16 %v1691, %v1690
  %v1729 = vsel %vm1513, %v1509, 0
  %v1732 = vsel %vm1513, %v1510, 0
  %v1735 = vsel %vm1513, %v1511, 0
  %v1738 = vsel %vm1513, %v1512, 0
  %1740 = vmatpush.bf16.msra.mxu0 %v1699
  %1741 = vmatpush.bf16.msra.mxu0 %v1698
  %1742 = vmatpush.bf16.msra.mxu0 %v1697
  %1743 = vmatpush.bf16.msra.mxu0 %v1696
  %1744 = vmatpush.bf16.msra.mxu0 %v1695
  %1745 = vmatpush.bf16.msra.mxu0 %v1694
  %1746 = vmatpush.bf16.msra.mxu0 %v1693
  %1747 = vmatpush.bf16.msra.mxu0 %v1692
  %1748 = vmatmul.bf16.gmra.mxu0 %v1537
  %v1749 = vpop.f32.mrf.mxu0
  %v1750 = vadd.f32 %v1618, %v1749
  %v1751 = vpop.f32.mrf.mxu0
  %v1752 = vadd.f32 %v1618, %v1751
  %1753 = vmatmul.bf16.gmra.mxu0 %v1540
  %v1754 = vpop.f32.mrf.mxu0
  %v1755 = vadd.f32 %v1618, %v1754
  %v1756 = vpop.f32.mrf.mxu0
  %v1757 = vadd.f32 %v1618, %v1756
  %1758 = vmatmul.bf16.gmra.mxu0 %v1543
  %v1759 = vpop.f32.mrf.mxu0
  %v1760 = vadd.f32 %v1618, %v1759
  %v1761 = vpop.f32.mrf.mxu0
  %v1762 = vadd.f32 %v1618, %v1761
  %1763 = vmatmul.bf16.gmra.mxu0 %v1546
  %v1764 = vpop.f32.mrf.mxu0
  %v1765 = vadd.f32 %v1618, %v1764
  %v1766 = vpop.f32.mrf.mxu0
  %v1767 = vadd.f32 %v1618, %v1766
  %1768 = vdwg.mxu0
  %1769 = vmatpush.bf16.msra.mxu0 %v1707
  %1770 = vmatpush.bf16.msra.mxu0 %v1706
  %1771 = vmatpush.bf16.msra.mxu0 %v1705
  %1772 = vmatpush.bf16.msra.mxu0 %v1704
  %1773 = vmatpush.bf16.msra.mxu0 %v1703
  %1774 = vmatpush.bf16.msra.mxu0 %v1702
  %1775 = vmatpush.bf16.msra.mxu0 %v1701
  %1776 = vmatpush.bf16.msra.mxu0 %v1700
  %1777 = vmatmul.bf16.gmra.mxu0 %v1569
  %v1778 = vpop.f32.mrf.mxu0
  %v1779 = vadd.f32 %v1750, %v1778
  %v1780 = vpop.f32.mrf.mxu0
  %v1781 = vadd.f32 %v1752, %v1780
  %1782 = vmatmul.bf16.gmra.mxu0 %v1572
  %v1783 = vpop.f32.mrf.mxu0
  %v1784 = vadd.f32 %v1755, %v1783
  %v1785 = vpop.f32.mrf.mxu0
  %v1786 = vadd.f32 %v1757, %v1785
  %1787 = vmatmul.bf16.gmra.mxu0 %v1575
  %v1788 = vpop.f32.mrf.mxu0
  %v1789 = vadd.f32 %v1760, %v1788
  %v1790 = vpop.f32.mrf.mxu0
  %v1791 = vadd.f32 %v1762, %v1790
  %1792 = vmatmul.bf16.gmra.mxu0 %v1578
  %v1793 = vpop.f32.mrf.mxu0
  %v1794 = vadd.f32 %v1765, %v1793
  %v1795 = vpop.f32.mrf.mxu0
  %v1796 = vadd.f32 %v1767, %v1795
  %1797 = vdwg.mxu0
  %1798 = vmatpush.bf16.msra.mxu0 0
  %1799 = vmatpush.bf16.msra.mxu0 0
  %1800 = vmatpush.bf16.msra.mxu0 0
  %1801 = vmatpush.bf16.msra.mxu0 0
  %1802 = vmatpush.bf16.msra.mxu0 0
  %1803 = vmatpush.bf16.msra.mxu0 0
  %1804 = vmatpush.bf16.msra.mxu0 %v1709
  %1805 = vmatpush.bf16.msra.mxu0 %v1708
  %1806 = vmatmul.bf16.gmra.mxu0 %v1729
  %v1807 = vpop.f32.mrf.mxu0
  %v1808 = vadd.f32 %v1779, %v1807
  %v1809 = vpop.f32.mrf.mxu0
  %v1810 = vadd.f32 %v1781, %v1809
  %1811 = vmatmul.bf16.gmra.mxu0 %v1732
  %v1812 = vpop.f32.mrf.mxu0
  %v1813 = vadd.f32 %v1784, %v1812
  %v1814 = vpop.f32.mrf.mxu0
  %v1815 = vadd.f32 %v1786, %v1814
  %1816 = vmatmul.bf16.gmra.mxu0 %v1735
  %v1817 = vpop.f32.mrf.mxu0
  %v1818 = vadd.f32 %v1789, %v1817
  %v1819 = vpop.f32.mrf.mxu0
  %v1820 = vadd.f32 %v1791, %v1819
  %1821 = vmatmul.bf16.gmra.mxu0 %v1738
  %v1822 = vpop.f32.mrf.mxu0
  %v1823 = vadd.f32 %v1794, %v1822
  %v1824 = vpop.f32.mrf.mxu0
  %v1825 = vadd.f32 %v1796, %v1824
  %1826 = vdwg.mxu0
  %v1827 = vmax.f32 %v1808, 0.0
  %v1828 = vmax.f32 %v1810, 0.0
  %v1829 = vmax.f32 %v1813, 0.0
  %v1830 = vmax.f32 %v1815, 0.0
  %v1831 = vmax.f32 %v1818, 0.0
  %v1832 = vmax.f32 %v1820, 0.0
  %v1833 = vmax.f32 %v1823, 0.0
  %v1834 = vmax.f32 %v1825, 0.0
  %v1835 = vld [vmem:[%s2] sm:$0xf]
  %v1836 = vld [vmem:[%s2 + $0x4] sm:$0xf]
  %v1837 = vld [vmem:[%s2 + $0x8] sm:$0xf]
  %v1838 = vld [vmem:[%s2 + $0xc] sm:$0xf]
  %v1839 = vld [vmem:[%s2 + $0x10] sm:$0xf]
  %v1840 = vld [vmem:[%s2 + $0x14] sm:$0xf]
  %v1841 = vld [vmem:[%s2 + $0x18] sm:$0xf]
  %v1842 = vld [vmem:[%s2 + $0x1c] sm:$0xf]
  %v1843 = vld [vmem:[%s2 + $0x20] sm:$0xf]
  %v1844 = vld [vmem:[%s2 + $0x24] sm:$0xf]
  %v1845 = vld [vmem:[%s2 + $0x28] sm:$0xf]
  %v1846 = vld [vmem:[%s2 + $0x2c] sm:$0xf]
  %v1847 = vld [vmem:[%s2 + $0x30] sm:$0xf]
  %v1848 = vld [vmem:[%s2 + $0x34] sm:$0xf]
  %v1849 = vld [vmem:[%s2 + $0x38] sm:$0xf]
  %v1850 = vld [vmem:[%s2 + $0x3c] sm:$0xf]
  %v1851 = vld [vmem:[%s2 + $0x40] sm:$0xf]
  %v1852 = vld [vmem:[%s2 + $0x44] sm:$0xf]
  %v1853 = vld [vmem:[%s2 + $0x48] sm:$0xf]
  %v1854 = vld [vmem:[%s2 + $0x4c] sm:$0xf]
  %v1855 = vld [vmem:[%s2 + $0x50] sm:$0xf]
  %v1856 = vld [vmem:[%s2 + $0x54] sm:$0xf]
  %v1857 = vld [vmem:[%s2 + $0x58] sm:$0xf]
  %v1858 = vld [vmem:[%s2 + $0x5c] sm:$0xf]
  %v1859 = vld [vmem:[%s2 + $0x60] sm:$0xf]
  %v1860 = vld [vmem:[%s2 + $0x64] sm:$0xf]
  %v1861 = vld [vmem:[%s2 + $0x68] sm:$0xf]
  %v1862 = vld [vmem:[%s2 + $0x6c] sm:$0xf]
  %v1863 = vld [vmem:[%s2 + $0x70] sm:$0xf]
  %v1864 = vld [vmem:[%s2 + $0x74] sm:$0xf]
  %v1865 = vld [vmem:[%s2 + $0x78] sm:$0xf]
  %v1866 = vld [vmem:[%s2 + $0x7c] sm:$0xf]
  %v1867 = vld [vmem:[%s2 + $0x80] sm:$0xf]
  %v1868 = vld [vmem:[%s2 + $0x84] sm:$0xf]
  %v1869 = vld [vmem:[%s2 + $0x88] sm:$0xf]
  %v1870 = vld [vmem:[%s2 + $0x8c] sm:$0xf]
  %v1871 = vld [vmem:[%s2 + $0x90] sm:$0xf]
  %v1872 = vld [vmem:[%s2 + $0x94] sm:$0xf]
  %v1873 = vld [vmem:[%s2 + $0x98] sm:$0xf]
  %v1874 = vld [vmem:[%s2 + $0x9c] sm:$0xf]
  %v1875 = vld [vmem:[%s2 + $0xa0] sm:$0xf]
  %v1876 = vld [vmem:[%s2 + $0xa4] sm:$0xf]
  %v1877 = vld [vmem:[%s2 + $0xa8] sm:$0xf]
  %v1878 = vld [vmem:[%s2 + $0xac] sm:$0xf]
  %v1879 = vld [vmem:[%s2 + $0xb0] sm:$0xf]
  %v1880 = vld [vmem:[%s2 + $0xb4] sm:$0xf]
  %v1881 = vld [vmem:[%s2 + $0xb8] sm:$0xf]
  %v1882 = vld [vmem:[%s2 + $0xbc] sm:$0xf]
  %v1883 = vld [vmem:[%s2 + $0xc0] sm:$0xf]
  %v1884 = vld [vmem:[%s2 + $0xc4] sm:$0xf]
  %v1885 = vld [vmem:[%s2 + $0xc8] sm:$0xf]
  %v1886 = vld [vmem:[%s2 + $0xcc] sm:$0xf]
  %v1887 = vld [vmem:[%s2 + $0xd0] sm:$0xf]
  %v1888 = vld [vmem:[%s2 + $0xd4] sm:$0xf]
  %v1889 = vld [vmem:[%s2 + $0xd8] sm:$0xf]
  %v1890 = vld [vmem:[%s2 + $0xdc] sm:$0xf]
  %v1891 = vld [vmem:[%s2 + $0xe0] sm:$0xf]
  %v1892 = vld [vmem:[%s2 + $0xe4] sm:$0xf]
  %v1893 = vld [vmem:[%s2 + $0xe8] sm:$0xf]
  %v1894 = vld [vmem:[%s2 + $0xec] sm:$0xf]
  %v1895 = vld [vmem:[%s2 + $0xf0] sm:$0xf]
  %v1896 = vld [vmem:[%s2 + $0xf4] sm:$0xf]
  %v1897 = vld [vmem:[%s2 + $0xf8] sm:$0xf]
  %v1898 = vld [vmem:[%s2 + $0xfc] sm:$0xf]
  %v1899 = vld [vmem:[%s2 + $0x100] sm:$0xf]
  %v1900 = vld [vmem:[%s2 + $0x104] sm:$0xf]
  %v1901 = vld [vmem:[%s2 + $0x108] sm:$0xf]
  %v1902 = vld [vmem:[%s2 + $0x10c] sm:$0xf]
  %v1903 = vld [vmem:[%s2 + $0x110] sm:$0xf]
  %v1904 = vld [vmem:[%s2 + $0x114] sm:$0xf]
  %v1905 = vld [vmem:[%s2 + $0x118] sm:$0xf]
  %v1906 = vld [vmem:[%s2 + $0x11c] sm:$0xf]
  %v1907 = vpack.c.bf16 %v1828, %v1827
  %v1908 = vpack.c.bf16 %v1830, %v1829
  %v1909 = vpack.c.bf16 %v1832, %v1831
  %v1910 = vpack.c.bf16 %v1834, %v1833
  %v1983 = vunpack.c.l.b16 %v1835
  %v1984 = vunpack.c.l.b16 %v1836
  %v1985 = vunpack.c.l.b16 %v1837
  %v1986 = vunpack.c.l.b16 %v1838
  %v1987 = vunpack.c.l.b16 %v1839
  %v1988 = vunpack.c.l.b16 %v1840
  %v1989 = vunpack.c.l.b16 %v1841
  %v1990 = vunpack.c.l.b16 %v1842
  %v1991 = vunpack.c.l.b16 %v1843
  %v1992 = vunpack.c.l.b16 %v1844
  %v1993 = vunpack.c.l.b16 %v1845
  %v1994 = vunpack.c.l.b16 %v1846
  %v1995 = vunpack.c.l.b16 %v1847
  %v1996 = vunpack.c.l.b16 %v1848
  %v1997 = vunpack.c.l.b16 %v1849
  %v1998 = vunpack.c.l.b16 %v1850
  %v1999 = vunpack.c.l.b16 %v1851
  %v2000 = vunpack.c.l.b16 %v1852
  %v2001 = vunpack.c.l.b16 %v1853
  %v2002 = vunpack.c.l.b16 %v1854
  %v2003 = vunpack.c.l.b16 %v1855
  %v2004 = vunpack.c.l.b16 %v1856
  %v2005 = vunpack.c.l.b16 %v1857
  %v2006 = vunpack.c.l.b16 %v1858
  %v2007 = vunpack.c.l.b16 %v1859
  %v2008 = vunpack.c.l.b16 %v1860
  %v2009 = vunpack.c.l.b16 %v1861
  %v2010 = vunpack.c.l.b16 %v1862
  %v2011 = vunpack.c.l.b16 %v1863
  %v2012 = vunpack.c.l.b16 %v1864
  %v2013 = vunpack.c.l.b16 %v1865
  %v2014 = vunpack.c.l.b16 %v1866
  %v2015 = vunpack.c.l.b16 %v1867
  %v2016 = vunpack.c.l.b16 %v1868
  %v2017 = vunpack.c.l.b16 %v1869
  %v2018 = vunpack.c.l.b16 %v1870
  %v2019 = vunpack.c.l.b16 %v1871
  %v2020 = vunpack.c.l.b16 %v1872
  %v2021 = vunpack.c.l.b16 %v1873
  %v2022 = vunpack.c.l.b16 %v1874
  %v2023 = vunpack.c.l.b16 %v1875
  %v2024 = vunpack.c.l.b16 %v1876
  %v2025 = vunpack.c.l.b16 %v1877
  %v2026 = vunpack.c.l.b16 %v1878
  %v2027 = vunpack.c.l.b16 %v1879
  %v2028 = vunpack.c.l.b16 %v1880
  %v2029 = vunpack.c.l.b16 %v1881
  %v2030 = vunpack.c.l.b16 %v1882
  %v2031 = vunpack.c.l.b16 %v1883
  %v2032 = vunpack.c.l.b16 %v1884
  %v2033 = vunpack.c.l.b16 %v1885
  %v2034 = vunpack.c.l.b16 %v1886
  %v2035 = vunpack.c.l.b16 %v1887
  %v2036 = vunpack.c.l.b16 %v1888
  %v2037 = vunpack.c.l.b16 %v1889
  %v2038 = vunpack.c.l.b16 %v1890
  %v2039 = vunpack.c.l.b16 %v1891
  %v2040 = vunpack.c.l.b16 %v1892
  %v2041 = vunpack.c.l.b16 %v1893
  %v2042 = vunpack.c.l.b16 %v1894
  %v2043 = vunpack.c.l.b16 %v1895
  %v2044 = vunpack.c.l.b16 %v1896
  %v2045 = vunpack.c.l.b16 %v1897
  %v2046 = vunpack.c.l.b16 %v1898
  %v2047 = vunpack.c.l.b16 %v1899
  %v2048 = vunpack.c.l.b16 %v1900
  %v2049 = vunpack.c.l.b16 %v1901
  %v2050 = vunpack.c.l.b16 %v1902
  %v2051 = vunpack.c.l.b16 %v1903
  %v2052 = vunpack.c.l.b16 %v1904
  %v2053 = vunpack.c.l.b16 %v1905
  %v2054 = vunpack.c.l.b16 %v1906
  %v2055 = vpack.c.b16 %v1984, %v1983
  %v2056 = vpack.c.b16 %v1986, %v1985
  %v2057 = vpack.c.b16 %v1988, %v1987
  %v2058 = vpack.c.b16 %v1990, %v1989
  %v2059 = vpack.c.b16 %v1992, %v1991
  %v2060 = vpack.c.b16 %v1994, %v1993
  %v2061 = vpack.c.b16 %v1996, %v1995
  %v2062 = vpack.c.b16 %v1998, %v1997
  %v2063 = vpack.c.b16 %v2000, %v1999
  %v2064 = vpack.c.b16 %v2002, %v2001
  %v2065 = vpack.c.b16 %v2004, %v2003
  %v2066 = vpack.c.b16 %v2006, %v2005
  %v2067 = vpack.c.b16 %v2008, %v2007
  %v2068 = vpack.c.b16 %v2010, %v2009
  %v2069 = vpack.c.b16 %v2012, %v2011
  %v2070 = vpack.c.b16 %v2014, %v2013
  %v2071 = vpack.c.b16 %v2016, %v2015
  %v2072 = vpack.c.b16 %v2018, %v2017
  %v2073 = vpack.c.b16 %v2020, %v2019
  %v2074 = vpack.c.b16 %v2022, %v2021
  %v2075 = vpack.c.b16 %v2024, %v2023
  %v2076 = vpack.c.b16 %v2026, %v2025
  %v2077 = vpack.c.b16 %v2028, %v2027
  %v2078 = vpack.c.b16 %v2030, %v2029
  %v2079 = vpack.c.b16 %v2032, %v2031
  %v2080 = vpack.c.b16 %v2034, %v2033
  %v2081 = vpack.c.b16 %v2036, %v2035
  %v2082 = vpack.c.b16 %v2038, %v2037
  %v2083 = vpack.c.b16 %v2040, %v2039
  %v2084 = vpack.c.b16 %v2042, %v2041
  %v2085 = vpack.c.b16 %v2044, %v2043
  %v2086 = vpack.c.b16 %v2046, %v2045
  %v2087 = vpack.c.b16 %v2048, %v2047
  %v2088 = vpack.c.b16 %v2050, %v2049
  %v2089 = vpack.c.b16 %v2052, %v2051
  %v2090 = vpack.c.b16 %v2054, %v2053
  %v2092 = vsel %vm1526, %v2055, 0
  %v2095 = vsel %vm1526, %v2056, 0
  %v2098 = vsel %vm1526, %v2057, 0
  %v2101 = vsel %vm1526, %v2058, 0
  %v2104 = vsel %vm1526, %v2059, 0
  %v2107 = vsel %vm1526, %v2060, 0
  %v2110 = vsel %vm1526, %v2061, 0
  %v2113 = vsel %vm1526, %v2062, 0
  %v2116 = vsel %vm1526, %v2063, 0
  %v2119 = vsel %vm1526, %v2064, 0
  %v2122 = vsel %vm1526, %v2065, 0
  %v2125 = vsel %vm1526, %v2066, 0
  %v2128 = vsel %vm1526, %v2067, 0
  %v2131 = vsel %vm1526, %v2068, 0
  %v2134 = vsel %vm1526, %v2069, 0
  %v2137 = vsel %vm1526, %v2070, 0
  %v2140 = vsel %vm1526, %v2071, 0
  %v2143 = vsel %vm1526, %v2072, 0
  %v2146 = vsel %vm1526, %v2073, 0
  %v2149 = vsel %vm1526, %v2074, 0
  %v2152 = vsel %vm1526, %v2075, 0
  %v2155 = vsel %vm1526, %v2076, 0
  %v2158 = vsel %vm1526, %v2077, 0
  %v2161 = vsel %vm1526, %v2078, 0
  %v2164 = vsel %vm1526, %v2079, 0
  %v2167 = vsel %vm1526, %v2080, 0
  %v2170 = vsel %vm1526, %v2081, 0
  %v2173 = vsel %vm1526, %v2082, 0
  %v2176 = vsel %vm1526, %v2083, 0
  %v2179 = vsel %vm1526, %v2084, 0
  %v2182 = vsel %vm1526, %v2085, 0
  %v2185 = vsel %vm1526, %v2086, 0
  %v2188 = vsel %vm1526, %v2087, 0
  %v2191 = vsel %vm1526, %v2088, 0
  %v2194 = vsel %vm1526, %v2089, 0
  %v2197 = vsel %vm1526, %v2090, 0
  %2199 = vmatpush.bf16.msra.mxu0 0
  %2200 = vmatpush.bf16.msra.mxu0 0
  %2201 = vmatpush.bf16.msra.mxu0 0
  %2202 = vmatpush.bf16.msra.mxu0 0
  %2203 = vmatpush.bf16.msra.mxu0 %v1910
  %2204 = vmatpush.bf16.msra.mxu0 %v1909
  %2205 = vmatpush.bf16.msra.mxu0 %v1908
  %2206 = vmatpush.bf16.msra.mxu0 %v1907
  %2207 = vmatmul.bf16.gmra.mxu0 %v2092
  %v2208 = vpop.f32.mrf.mxu0
  %v2209 = vadd.f32 0.0, %v2208
  %v2210 = vpop.f32.mrf.mxu0
  %v2211 = vadd.f32 0.0, %v2210
  %2212 = vmatmul.bf16.gmra.mxu0 %v2095
  %v2213 = vpop.f32.mrf.mxu0
  %v2214 = vadd.f32 0.0, %v2213
  %v2215 = vpop.f32.mrf.mxu0
  %v2216 = vadd.f32 0.0, %v2215
  %2217 = vmatmul.bf16.gmra.mxu0 %v2098
  %v2218 = vpop.f32.mrf.mxu0
  %v2219 = vadd.f32 0.0, %v2218
  %v2220 = vpop.f32.mrf.mxu0
  %v2221 = vadd.f32 0.0, %v2220
  %2222 = vmatmul.bf16.gmra.mxu0 %v2101
  %v2223 = vpop.f32.mrf.mxu0
  %v2224 = vadd.f32 0.0, %v2223
  %v2225 = vpop.f32.mrf.mxu0
  %v2226 = vadd.f32 0.0, %v2225
  %2227 = vmatmul.bf16.gmra.mxu0 %v2104
  %v2228 = vpop.f32.mrf.mxu0
  %v2229 = vadd.f32 0.0, %v2228
  %v2230 = vpop.f32.mrf.mxu0
  %v2231 = vadd.f32 0.0, %v2230
  %2232 = vmatmul.bf16.gmra.mxu0 %v2107
  %v2233 = vpop.f32.mrf.mxu0
  %v2234 = vadd.f32 0.0, %v2233
  %v2235 = vpop.f32.mrf.mxu0
  %v2236 = vadd.f32 0.0, %v2235
  %2237 = vmatmul.bf16.gmra.mxu0 %v2110
  %v2238 = vpop.f32.mrf.mxu0
  %v2239 = vadd.f32 0.0, %v2238
  %v2240 = vpop.f32.mrf.mxu0
  %v2241 = vadd.f32 0.0, %v2240
  %2242 = vmatmul.bf16.gmra.mxu0 %v2113
  %v2243 = vpop.f32.mrf.mxu0
  %v2244 = vadd.f32 0.0, %v2243
  %v2245 = vpop.f32.mrf.mxu0
  %v2246 = vadd.f32 0.0, %v2245
  %2247 = vmatmul.bf16.gmra.mxu0 %v2116
  %v2248 = vpop.f32.mrf.mxu0
  %v2249 = vadd.f32 0.0, %v2248
  %v2250 = vpop.f32.mrf.mxu0
  %v2251 = vadd.f32 0.0, %v2250
  %2252 = vmatmul.bf16.gmra.mxu0 %v2119
  %v2253 = vpop.f32.mrf.mxu0
  %v2254 = vadd.f32 0.0, %v2253
  %v2255 = vpop.f32.mrf.mxu0
  %v2256 = vadd.f32 0.0, %v2255
  %2257 = vmatmul.bf16.gmra.mxu0 %v2122
  %v2258 = vpop.f32.mrf.mxu0
  %v2259 = vadd.f32 0.0, %v2258
  %v2260 = vpop.f32.mrf.mxu0
  %v2261 = vadd.f32 0.0, %v2260
  %2262 = vmatmul.bf16.gmra.mxu0 %v2125
  %v2263 = vpop.f32.mrf.mxu0
  %v2264 = vadd.f32 0.0, %v2263
  %v2265 = vpop.f32.mrf.mxu0
  %v2266 = vadd.f32 0.0, %v2265
  %2267 = vmatmul.bf16.gmra.mxu0 %v2128
  %v2268 = vpop.f32.mrf.mxu0
  %v2269 = vadd.f32 0.0, %v2268
  %v2270 = vpop.f32.mrf.mxu0
  %v2271 = vadd.f32 0.0, %v2270
  %2272 = vmatmul.bf16.gmra.mxu0 %v2131
  %v2273 = vpop.f32.mrf.mxu0
  %v2274 = vadd.f32 0.0, %v2273
  %v2275 = vpop.f32.mrf.mxu0
  %v2276 = vadd.f32 0.0, %v2275
  %2277 = vmatmul.bf16.gmra.mxu0 %v2134
  %v2278 = vpop.f32.mrf.mxu0
  %v2279 = vadd.f32 0.0, %v2278
  %v2280 = vpop.f32.mrf.mxu0
  %v2281 = vadd.f32 0.0, %v2280
  %2282 = vmatmul.bf16.gmra.mxu0 %v2137
  %v2283 = vpop.f32.mrf.mxu0
  %v2284 = vadd.f32 0.0, %v2283
  %v2285 = vpop.f32.mrf.mxu0
  %v2286 = vadd.f32 0.0, %v2285
  %2287 = vmatmul.bf16.gmra.mxu0 %v2140
  %v2288 = vpop.f32.mrf.mxu0
  %v2289 = vadd.f32 0.0, %v2288
  %v2290 = vpop.f32.mrf.mxu0
  %v2291 = vadd.f32 0.0, %v2290
  %2292 = vmatmul.bf16.gmra.mxu0 %v2143
  %v2293 = vpop.f32.mrf.mxu0
  %v2294 = vadd.f32 0.0, %v2293
  %v2295 = vpop.f32.mrf.mxu0
  %v2296 = vadd.f32 0.0, %v2295
  %2297 = vmatmul.bf16.gmra.mxu0 %v2146
  %v2298 = vpop.f32.mrf.mxu0
  %v2299 = vadd.f32 0.0, %v2298
  %v2300 = vpop.f32.mrf.mxu0
  %v2301 = vadd.f32 0.0, %v2300
  %2302 = vmatmul.bf16.gmra.mxu0 %v2149
  %v2303 = vpop.f32.mrf.mxu0
  %v2304 = vadd.f32 0.0, %v2303
  %v2305 = vpop.f32.mrf.mxu0
  %v2306 = vadd.f32 0.0, %v2305
  %2307 = vmatmul.bf16.gmra.mxu0 %v2152
  %v2308 = vpop.f32.mrf.mxu0
  %v2309 = vadd.f32 0.0, %v2308
  %v2310 = vpop.f32.mrf.mxu0
  %v2311 = vadd.f32 0.0, %v2310
  %2312 = vmatmul.bf16.gmra.mxu0 %v2155
  %v2313 = vpop.f32.mrf.mxu0
  %v2314 = vadd.f32 0.0, %v2313
  %v2315 = vpop.f32.mrf.mxu0
  %v2316 = vadd.f32 0.0, %v2315
  %2317 = vmatmul.bf16.gmra.mxu0 %v2158
  %v2318 = vpop.f32.mrf.mxu0
  %v2319 = vadd.f32 0.0, %v2318
  %v2320 = vpop.f32.mrf.mxu0
  %v2321 = vadd.f32 0.0, %v2320
  %2322 = vmatmul.bf16.gmra.mxu0 %v2161
  %v2323 = vpop.f32.mrf.mxu0
  %v2324 = vadd.f32 0.0, %v2323
  %v2325 = vpop.f32.mrf.mxu0
  %v2326 = vadd.f32 0.0, %v2325
  %2327 = vmatmul.bf16.gmra.mxu0 %v2164
  %v2328 = vpop.f32.mrf.mxu0
  %v2329 = vadd.f32 0.0, %v2328
  %v2330 = vpop.f32.mrf.mxu0
  %v2331 = vadd.f32 0.0, %v2330
  %2332 = vmatmul.bf16.gmra.mxu0 %v2167
  %v2333 = vpop.f32.mrf.mxu0
  %v2334 = vadd.f32 0.0, %v2333
  %v2335 = vpop.f32.mrf.mxu0
  %v2336 = vadd.f32 0.0, %v2335
  %2337 = vmatmul.bf16.gmra.mxu0 %v2170
  %v2338 = vpop.f32.mrf.mxu0
  %v2339 = vadd.f32 0.0, %v2338
  %v2340 = vpop.f32.mrf.mxu0
  %v2341 = vadd.f32 0.0, %v2340
  %2342 = vmatmul.bf16.gmra.mxu0 %v2173
  %v2343 = vpop.f32.mrf.mxu0
  %v2344 = vadd.f32 0.0, %v2343
  %v2345 = vpop.f32.mrf.mxu0
  %v2346 = vadd.f32 0.0, %v2345
  %2347 = vmatmul.bf16.gmra.mxu0 %v2176
  %v2348 = vpop.f32.mrf.mxu0
  %v2349 = vadd.f32 0.0, %v2348
  %v2350 = vpop.f32.mrf.mxu0
  %v2351 = vadd.f32 0.0, %v2350
  %2352 = vmatmul.bf16.gmra.mxu0 %v2179
  %v2353 = vpop.f32.mrf.mxu0
  %v2354 = vadd.f32 0.0, %v2353
  %v2355 = vpop.f32.mrf.mxu0
  %v2356 = vadd.f32 0.0, %v2355
  %2357 = vmatmul.bf16.gmra.mxu0 %v2182
  %v2358 = vpop.f32.mrf.mxu0
  %v2359 = vadd.f32 0.0, %v2358
  %v2360 = vpop.f32.mrf.mxu0
  %v2361 = vadd.f32 0.0, %v2360
  %2362 = vmatmul.bf16.gmra.mxu0 %v2185
  %v2363 = vpop.f32.mrf.mxu0
  %v2364 = vadd.f32 0.0, %v2363
  %v2365 = vpop.f32.mrf.mxu0
  %v2366 = vadd.f32 0.0, %v2365
  %2367 = vmatmul.bf16.gmra.mxu0 %v2188
  %v2368 = vpop.f32.mrf.mxu0
  %v2369 = vadd.f32 0.0, %v2368
  %v2370 = vpop.f32.mrf.mxu0
  %v2371 = vadd.f32 0.0, %v2370
  %2372 = vmatmul.bf16.gmra.mxu0 %v2191
  %v2373 = vpop.f32.mrf.mxu0
  %v2374 = vadd.f32 0.0, %v2373
  %v2375 = vpop.f32.mrf.mxu0
  %v2376 = vadd.f32 0.0, %v2375
  %2377 = vmatmul.bf16.gmra.mxu0 %v2194
  %v2378 = vpop.f32.mrf.mxu0
  %v2379 = vadd.f32 0.0, %v2378
  %v2380 = vpop.f32.mrf.mxu0
  %v2381 = vadd.f32 0.0, %v2380
  %2382 = vmatmul.bf16.gmra.mxu0 %v2197
  %v2383 = vpop.f32.mrf.mxu0
  %v2384 = vadd.f32 0.0, %v2383
  %v2385 = vpop.f32.mrf.mxu0
  %v2386 = vadd.f32 0.0, %v2385
  %2387 = vdwg.mxu0
  %v2388 = vpack.c.bf16 %v2209, %v2209
  %v2389 = vpack.c.bf16 %v2211, %v2211
  %v2390 = vpack.c.bf16 %v2214, %v2214
  %v2391 = vpack.c.bf16 %v2216, %v2216
  %v2392 = vpack.c.bf16 %v2219, %v2219
  %v2393 = vpack.c.bf16 %v2221, %v2221
  %v2394 = vpack.c.bf16 %v2224, %v2224
  %v2395 = vpack.c.bf16 %v2226, %v2226
  %v2396 = vpack.c.bf16 %v2229, %v2229
  %v2397 = vpack.c.bf16 %v2231, %v2231
  %v2398 = vpack.c.bf16 %v2234, %v2234
  %v2399 = vpack.c.bf16 %v2236, %v2236
  %v2400 = vpack.c.bf16 %v2239, %v2239
  %v2401 = vpack.c.bf16 %v2241, %v2241
  %v2402 = vpack.c.bf16 %v2244, %v2244
  %v2403 = vpack.c.bf16 %v2246, %v2246
  %v2404 = vpack.c.bf16 %v2249, %v2249
  %v2405 = vpack.c.bf16 %v2251, %v2251
  %v2406 = vpack.c.bf16 %v2254, %v2254
  %v2407 = vpack.c.bf16 %v2256, %v2256
  %v2408 = vpack.c.bf16 %v2259, %v2259
  %v2409 = vpack.c.bf16 %v2261, %v2261
  %v2410 = vpack.c.bf16 %v2264, %v2264
  %v2411 = vpack.c.bf16 %v2266, %v2266
  %v2412 = vpack.c.bf16 %v2269, %v2269
  %v2413 = vpack.c.bf16 %v2271, %v2271
  %v2414 = vpack.c.bf16 %v2274, %v2274
  %v2415 = vpack.c.bf16 %v2276, %v2276
  %v2416 = vpack.c.bf16 %v2279, %v2279
  %v2417 = vpack.c.bf16 %v2281, %v2281
  %v2418 = vpack.c.bf16 %v2284, %v2284
  %v2419 = vpack.c.bf16 %v2286, %v2286
  %v2420 = vpack.c.bf16 %v2289, %v2289
  %v2421 = vpack.c.bf16 %v2291, %v2291
  %v2422 = vpack.c.bf16 %v2294, %v2294
  %v2423 = vpack.c.bf16 %v2296, %v2296
  %v2424 = vpack.c.bf16 %v2299, %v2299
  %v2425 = vpack.c.bf16 %v2301, %v2301
  %v2426 = vpack.c.bf16 %v2304, %v2304
  %v2427 = vpack.c.bf16 %v2306, %v2306
  %v2428 = vpack.c.bf16 %v2309, %v2309
  %v2429 = vpack.c.bf16 %v2311, %v2311
  %v2430 = vpack.c.bf16 %v2314, %v2314
  %v2431 = vpack.c.bf16 %v2316, %v2316
  %v2432 = vpack.c.bf16 %v2319, %v2319
  %v2433 = vpack.c.bf16 %v2321, %v2321
  %v2434 = vpack.c.bf16 %v2324, %v2324
  %v2435 = vpack.c.bf16 %v2326, %v2326
  %v2436 = vpack.c.bf16 %v2329, %v2329
  %v2437 = vpack.c.bf16 %v2331, %v2331
  %v2438 = vpack.c.bf16 %v2334, %v2334
  %v2439 = vpack.c.bf16 %v2336, %v2336
  %v2440 = vpack.c.bf16 %v2339, %v2339
  %v2441 = vpack.c.bf16 %v2341, %v2341
  %v2442 = vpack.c.bf16 %v2344, %v2344
  %v2443 = vpack.c.bf16 %v2346, %v2346
  %v2444 = vpack.c.bf16 %v2349, %v2349
  %v2445 = vpack.c.bf16 %v2351, %v2351
  %v2446 = vpack.c.bf16 %v2354, %v2354
  %v2447 = vpack.c.bf16 %v2356, %v2356
  %v2448 = vpack.c.bf16 %v2359, %v2359
  %v2449 = vpack.c.bf16 %v2361, %v2361
  %v2450 = vpack.c.bf16 %v2364, %v2364
  %v2451 = vpack.c.bf16 %v2366, %v2366
  %v2452 = vpack.c.bf16 %v2369, %v2369
  %v2453 = vpack.c.bf16 %v2371, %v2371
  %v2454 = vpack.c.bf16 %v2374, %v2374
  %v2455 = vpack.c.bf16 %v2376, %v2376
  %v2456 = vpack.c.bf16 %v2379, %v2379
  %v2457 = vpack.c.bf16 %v2381, %v2381
  %v2458 = vpack.c.bf16 %v2384, %v2384
  %v2459 = vpack.c.bf16 %v2386, %v2386
  %v2468 = vunpack.c.l.b16 %v2388
  %v2469 = vunpack.c.l.b16 %v2389
  %v2470 = vunpack.c.l.b16 %v2390
  %v2471 = vunpack.c.l.b16 %v2391
  %v2472 = vunpack.c.l.b16 %v2392
  %v2473 = vunpack.c.l.b16 %v2393
  %v2474 = vunpack.c.l.b16 %v2394
  %v2475 = vunpack.c.l.b16 %v2395
  %v2476 = vpack.c.b16 %v2469, %v2468
  %v2477 = vpack.c.b16 %v2471, %v2470
  %v2478 = vpack.c.b16 %v2473, %v2472
  %v2479 = vpack.c.b16 %v2475, %v2474
  %v2488 = vunpack.c.l.b16 %v2396
  %v2489 = vunpack.c.l.b16 %v2397
  %v2490 = vunpack.c.l.b16 %v2398
  %v2491 = vunpack.c.l.b16 %v2399
  %v2492 = vunpack.c.l.b16 %v2400
  %v2493 = vunpack.c.l.b16 %v2401
  %v2494 = vunpack.c.l.b16 %v2402
  %v2495 = vunpack.c.l.b16 %v2403
  %v2496 = vpack.c.b16 %v2489, %v2488
  %v2497 = vpack.c.b16 %v2491, %v2490
  %v2498 = vpack.c.b16 %v2493, %v2492
  %v2499 = vpack.c.b16 %v2495, %v2494
  %2500 = vrot.lane.b32.xlu0 %v2496, 32
  %v2501 = vpop.permute.xlu0 %2500
  %2502 = vrot.lane.b32.xlu0 %v2497, 32
  %v2503 = vpop.permute.xlu0 %2502
  %2504 = vrot.lane.b32.xlu0 %v2498, 32
  %v2505 = vpop.permute.xlu0 %2504
  %2506 = vrot.lane.b32.xlu0 %v2499, 32
  %v2507 = vpop.permute.xlu0 %2506
  %v2516 = vunpack.c.l.b16 %v2404
  %v2517 = vunpack.c.l.b16 %v2405
  %v2518 = vunpack.c.l.b16 %v2406
  %v2519 = vunpack.c.l.b16 %v2407
  %v2520 = vunpack.c.l.b16 %v2408
  %v2521 = vunpack.c.l.b16 %v2409
  %v2522 = vunpack.c.l.b16 %v2410
  %v2523 = vunpack.c.l.b16 %v2411
  %v2524 = vpack.c.b16 %v2517, %v2516
  %v2525 = vpack.c.b16 %v2519, %v2518
  %v2526 = vpack.c.b16 %v2521, %v2520
  %v2527 = vpack.c.b16 %v2523, %v2522
  %2528 = vrot.lane.b32.xlu0 %v2524, 64
  %v2529 = vpop.permute.xlu0 %2528
  %2530 = vrot.lane.b32.xlu0 %v2525, 64
  %v2531 = vpop.permute.xlu0 %2530
  %2532 = vrot.lane.b32.xlu0 %v2526, 64
  %v2533 = vpop.permute.xlu0 %2532
  %2534 = vrot.lane.b32.xlu0 %v2527, 64
  %v2535 = vpop.permute.xlu0 %2534
  %v2544 = vunpack.c.l.b16 %v2412
  %v2545 = vunpack.c.l.b16 %v2413
  %v2546 = vunpack.c.l.b16 %v2414
  %v2547 = vunpack.c.l.b16 %v2415
  %v2548 = vunpack.c.l.b16 %v2416
  %v2549 = vunpack.c.l.b16 %v2417
  %v2550 = vunpack.c.l.b16 %v2418
  %v2551 = vunpack.c.l.b16 %v2419
  %v2552 = vpack.c.b16 %v2545, %v2544
  %v2553 = vpack.c.b16 %v2547, %v2546
  %v2554 = vpack.c.b16 %v2549, %v2548
  %v2555 = vpack.c.b16 %v2551, %v2550
  %2556 = vrot.lane.b32.xlu0 %v2552, 96
  %v2557 = vpop.permute.xlu0 %2556
  %2558 = vrot.lane.b32.xlu0 %v2553, 96
  %v2559 = vpop.permute.xlu0 %2558
  %2560 = vrot.lane.b32.xlu0 %v2554, 96
  %v2561 = vpop.permute.xlu0 %2560
  %2562 = vrot.lane.b32.xlu0 %v2555, 96
  %v2563 = vpop.permute.xlu0 %2562
  %v2572 = vunpack.c.l.b16 %v2420
  %v2573 = vunpack.c.l.b16 %v2421
  %v2574 = vunpack.c.l.b16 %v2422
  %v2575 = vunpack.c.l.b16 %v2423
  %v2576 = vunpack.c.l.b16 %v2424
  %v2577 = vunpack.c.l.b16 %v2425
  %v2578 = vunpack.c.l.b16 %v2426
  %v2579 = vunpack.c.l.b16 %v2427
  %v2580 = vpack.c.b16 %v2573, %v2572
  %v2581 = vpack.c.b16 %v2575, %v2574
  %v2582 = vpack.c.b16 %v2577, %v2576
  %v2583 = vpack.c.b16 %v2579, %v2578
  %v2592 = vunpack.c.l.b16 %v2428
  %v2593 = vunpack.c.l.b16 %v2429
  %v2594 = vunpack.c.l.b16 %v2430
  %v2595 = vunpack.c.l.b16 %v2431
  %v2596 = vunpack.c.l.b16 %v2432
  %v2597 = vunpack.c.l.b16 %v2433
  %v2598 = vunpack.c.l.b16 %v2434
  %v2599 = vunpack.c.l.b16 %v2435
  %v2600 = vpack.c.b16 %v2593, %v2592
  %v2601 = vpack.c.b16 %v2595, %v2594
  %v2602 = vpack.c.b16 %v2597, %v2596
  %v2603 = vpack.c.b16 %v2599, %v2598
  %2604 = vrot.lane.b32.xlu0 %v2600, 32
  %v2605 = vpop.permute.xlu0 %2604
  %2606 = vrot.lane.b32.xlu0 %v2601, 32
  %v2607 = vpop.permute.xlu0 %2606
  %2608 = vrot.lane.b32.xlu0 %v2602, 32
  %v2609 = vpop.permute.xlu0 %2608
  %2610 = vrot.lane.b32.xlu0 %v2603, 32
  %v2611 = vpop.permute.xlu0 %2610
  %v2620 = vunpack.c.l.b16 %v2436
  %v2621 = vunpack.c.l.b16 %v2437
  %v2622 = vunpack.c.l.b16 %v2438
  %v2623 = vunpack.c.l.b16 %v2439
  %v2624 = vunpack.c.l.b16 %v2440
  %v2625 = vunpack.c.l.b16 %v2441
  %v2626 = vunpack.c.l.b16 %v2442
  %v2627 = vunpack.c.l.b16 %v2443
  %v2628 = vpack.c.b16 %v2621, %v2620
  %v2629 = vpack.c.b16 %v2623, %v2622
  %v2630 = vpack.c.b16 %v2625, %v2624
  %v2631 = vpack.c.b16 %v2627, %v2626
  %2632 = vrot.lane.b32.xlu0 %v2628, 64
  %v2633 = vpop.permute.xlu0 %2632
  %2634 = vrot.lane.b32.xlu0 %v2629, 64
  %v2635 = vpop.permute.xlu0 %2634
  %2636 = vrot.lane.b32.xlu0 %v2630, 64
  %v2637 = vpop.permute.xlu0 %2636
  %2638 = vrot.lane.b32.xlu0 %v2631, 64
  %v2639 = vpop.permute.xlu0 %2638
  %v2648 = vunpack.c.l.b16 %v2444
  %v2649 = vunpack.c.l.b16 %v2445
  %v2650 = vunpack.c.l.b16 %v2446
  %v2651 = vunpack.c.l.b16 %v2447
  %v2652 = vunpack.c.l.b16 %v2448
  %v2653 = vunpack.c.l.b16 %v2449
  %v2654 = vunpack.c.l.b16 %v2450
  %v2655 = vunpack.c.l.b16 %v2451
  %v2656 = vpack.c.b16 %v2649, %v2648
  %v2657 = vpack.c.b16 %v2651, %v2650
  %v2658 = vpack.c.b16 %v2653, %v2652
  %v2659 = vpack.c.b16 %v2655, %v2654
  %2660 = vrot.lane.b32.xlu0 %v2656, 96
  %v2661 = vpop.permute.xlu0 %2660
  %2662 = vrot.lane.b32.xlu0 %v2657, 96
  %v2663 = vpop.permute.xlu0 %2662
  %2664 = vrot.lane.b32.xlu0 %v2658, 96
  %v2665 = vpop.permute.xlu0 %2664
  %2666 = vrot.lane.b32.xlu0 %v2659, 96
  %v2667 = vpop.permute.xlu0 %2666
  %v2676 = vunpack.c.l.b16 %v2452
  %v2677 = vunpack.c.l.b16 %v2453
  %v2678 = vunpack.c.l.b16 %v2454
  %v2679 = vunpack.c.l.b16 %v2455
  %v2680 = vunpack.c.l.b16 %v2456
  %v2681 = vunpack.c.l.b16 %v2457
  %v2682 = vunpack.c.l.b16 %v2458
  %v2683 = vunpack.c.l.b16 %v2459
  %v2684 = vpack.c.b16 %v2677, %v2676
  %v2685 = vpack.c.b16 %v2679, %v2678
  %v2686 = vpack.c.b16 %v2681, %v2680
  %v2687 = vpack.c.b16 %v2683, %v2682
  %v2690 = vsel %vm1513, %v2476, %v2501
  %v2693 = vsel %vm1513, %v2477, %v2503
  %v2696 = vsel %vm1513, %v2478, %v2505
  %v2699 = vsel %vm1513, %v2479, %v2507
  %v2701 = vsel %vm1526, %v2690, %v2529
  %v2703 = vsel %vm1526, %v2693, %v2531
  %v2705 = vsel %vm1526, %v2696, %v2533
  %v2707 = vsel %vm1526, %v2699, %v2535
  %v2709 = vsel %vm1535, %v2701, %v2557
  %v2712 = vsel %vm1535, %v2703, %v2559
  %v2715 = vsel %vm1535, %v2705, %v2561
  %v2718 = vsel %vm1535, %v2707, %v2563
  %v2722 = vsel %vm1513, %v2580, %v2605
  %v2725 = vsel %vm1513, %v2581, %v2607
  %v2728 = vsel %vm1513, %v2582, %v2609
  %v2731 = vsel %vm1513, %v2583, %v2611
  %v2733 = vsel %vm1526, %v2722, %v2633
  %v2735 = vsel %vm1526, %v2725, %v2635
  %v2737 = vsel %vm1526, %v2728, %v2637
  %v2739 = vsel %vm1526, %v2731, %v2639
  %v2741 = vsel %vm1535, %v2733, %v2661
  %v2744 = vsel %vm1535, %v2735, %v2663
  %v2747 = vsel %vm1535, %v2737, %v2665
  %v2750 = vsel %vm1535, %v2739, %v2667
  %v2752 = vld [vmem:[%s8] sm:$0xf]
  %v2753 = vld [vmem:[%s8 + $0x4] sm:$0xf]
  %v2754 = vld [vmem:[%s8 + $0x8] sm:$0xf]
  %v2755 = vld [vmem:[%s8 + $0xc] sm:$0xf]
  %v2756 = vld [vmem:[%s8 + $0x10] sm:$0xf]
  %v2757 = vld [vmem:[%s8 + $0x14] sm:$0xf]
  %v2758 = vld [vmem:[%s8 + $0x18] sm:$0xf]
  %v2759 = vld [vmem:[%s8 + $0x1c] sm:$0xf]
  %v2760 = vld [vmem:[%s8 + $0x20] sm:$0xf]
  %v2761 = vld [vmem:[%s8 + $0x24] sm:$0xf]
  %v2762 = vld [vmem:[%s8 + $0x28] sm:$0xf]
  %v2763 = vld [vmem:[%s8 + $0x2c] sm:$0xf]
  %v2764 = vld [vmem:[%s8 + $0x30] sm:$0xf]
  %v2765 = vld [vmem:[%s8 + $0x34] sm:$0xf]
  %v2766 = vld [vmem:[%s8 + $0x38] sm:$0xf]
  %v2767 = vld [vmem:[%s8 + $0x3c] sm:$0xf]
  %v2768 = vld [vmem:[%s8 + $0x40] sm:$0xf]
  %v2769 = vld [vmem:[%s8 + $0x44] sm:$0xf]
  %v2770 = vld [vmem:[%s8 + $0x48] sm:$0xf]
  %v2771 = vld [vmem:[%s8 + $0x4c] sm:$0xf]
  %v2772 = vld [vmem:[%s8 + $0x50] sm:$0xf]
  %v2773 = vld [vmem:[%s8 + $0x54] sm:$0xf]
  %v2774 = vld [vmem:[%s8 + $0x58] sm:$0xf]
  %v2775 = vld [vmem:[%s8 + $0x5c] sm:$0xf]
  %v2776 = vld [vmem:[%s8 + $0x60] sm:$0xf]
  %v2777 = vld [vmem:[%s8 + $0x64] sm:$0xf]
  %v2778 = vld [vmem:[%s8 + $0x68] sm:$0xf]
  %v2779 = vld [vmem:[%s8 + $0x6c] sm:$0xf]
  %v2780 = vld [vmem:[%s8 + $0x70] sm:$0xf]
  %v2781 = vld [vmem:[%s8 + $0x74] sm:$0xf]
  %v2782 = vld [vmem:[%s8 + $0x78] sm:$0xf]
  %v2783 = vld [vmem:[%s8 + $0x7c] sm:$0xf]
  %v2784 = vld [vmem:[%s8 + $0x80] sm:$0xf]
  %v2785 = vld [vmem:[%s8 + $0x84] sm:$0xf]
  %v2786 = vld [vmem:[%s8 + $0x88] sm:$0xf]
  %v2787 = vld [vmem:[%s8 + $0x8c] sm:$0xf]
  %v2788 = vld [vmem:[%s14] sm:$0x1]
  %v2790 = vperm.slane %v2788, 0
  %v2828 = vunpack.c.l.b16 %v2752
  %v2829 = vunpack.c.l.b16 %v2753
  %v2830 = vunpack.c.l.b16 %v2754
  %v2831 = vunpack.c.l.b16 %v2755
  %v2832 = vunpack.c.l.b16 %v2756
  %v2833 = vunpack.c.l.b16 %v2757
  %v2834 = vunpack.c.l.b16 %v2758
  %v2835 = vunpack.c.l.b16 %v2759
  %v2836 = vunpack.c.l.b16 %v2760
  %v2837 = vunpack.c.l.b16 %v2761
  %v2838 = vunpack.c.l.b16 %v2762
  %v2839 = vunpack.c.l.b16 %v2763
  %v2840 = vunpack.c.l.b16 %v2764
  %v2841 = vunpack.c.l.b16 %v2765
  %v2842 = vunpack.c.l.b16 %v2766
  %v2843 = vunpack.c.l.b16 %v2767
  %v2844 = vunpack.c.l.b16 %v2768
  %v2845 = vunpack.c.l.b16 %v2769
  %v2846 = vunpack.c.l.b16 %v2770
  %v2847 = vunpack.c.l.b16 %v2771
  %v2848 = vunpack.c.l.b16 %v2772
  %v2849 = vunpack.c.l.b16 %v2773
  %v2850 = vunpack.c.l.b16 %v2774
  %v2851 = vunpack.c.l.b16 %v2775
  %v2852 = vunpack.c.l.b16 %v2776
  %v2853 = vunpack.c.l.b16 %v2777
  %v2854 = vunpack.c.l.b16 %v2778
  %v2855 = vunpack.c.l.b16 %v2779
  %v2856 = vunpack.c.l.b16 %v2780
  %v2857 = vunpack.c.l.b16 %v2781
  %v2858 = vunpack.c.l.b16 %v2782
  %v2859 = vunpack.c.l.b16 %v2783
  %v2860 = vunpack.c.l.b16 %v2784
  %v2861 = vunpack.c.l.b16 %v2785
  %v2862 = vunpack.c.l.b16 %v2786
  %v2863 = vunpack.c.l.b16 %v2787
  %v2864 = vpack.c.b16 %v2829, %v2828
  %v2865 = vpack.c.b16 %v2831, %v2830
  %v2866 = vpack.c.b16 %v2833, %v2832
  %v2867 = vpack.c.b16 %v2835, %v2834
  %v2868 = vpack.c.b16 %v2837, %v2836
  %v2869 = vpack.c.b16 %v2839, %v2838
  %v2870 = vpack.c.b16 %v2841, %v2840
  %v2871 = vpack.c.b16 %v2843, %v2842
  %v2872 = vpack.c.b16 %v2845, %v2844
  %v2873 = vpack.c.b16 %v2847, %v2846
  %v2874 = vpack.c.b16 %v2849, %v2848
  %v2875 = vpack.c.b16 %v2851, %v2850
  %v2876 = vpack.c.b16 %v2853, %v2852
  %v2877 = vpack.c.b16 %v2855, %v2854
  %v2878 = vpack.c.b16 %v2857, %v2856
  %v2879 = vpack.c.b16 %v2859, %v2858
  %v2880 = vpack.c.b16 %v2861, %v2860
  %v2881 = vpack.c.b16 %v2863, %v2862
  %v2901 = vsel %vm1513, %v2684, 0
  %v2904 = vsel %vm1513, %v2685, 0
  %v2907 = vsel %vm1513, %v2686, 0
  %v2910 = vsel %vm1513, %v2687, 0
  %2912 = vmatpush.bf16.msra.mxu0 %v2871
  %2913 = vmatpush.bf16.msra.mxu0 %v2870
  %2914 = vmatpush.bf16.msra.mxu0 %v2869
  %2915 = vmatpush.bf16.msra.mxu0 %v2868
  %2916 = vmatpush.bf16.msra.mxu0 %v2867
  %2917 = vmatpush.bf16.msra.mxu0 %v2866
  %2918 = vmatpush.bf16.msra.mxu0 %v2865
  %2919 = vmatpush.bf16.msra.mxu0 %v2864
  %2920 = vmatmul.bf16.gmra.mxu0 %v2709
  %v2921 = vpop.f32.mrf.mxu0
  %v2922 = vadd.f32 %v2790, %v2921
  %v2923 = vpop.f32.mrf.mxu0
  %v2924 = vadd.f32 %v2790, %v2923
  %2925 = vmatmul.bf16.gmra.mxu0 %v2712
  %v2926 = vpop.f32.mrf.mxu0
  %v2927 = vadd.f32 %v2790, %v2926
  %v2928 = vpop.f32.mrf.mxu0
  %v2929 = vadd.f32 %v2790, %v2928
  %2930 = vmatmul.bf16.gmra.mxu0 %v2715
  %v2931 = vpop.f32.mrf.mxu0
  %v2932 = vadd.f32 %v2790, %v2931
  %v2933 = vpop.f32.mrf.mxu0
  %v2934 = vadd.f32 %v2790, %v2933
  %2935 = vmatmul.bf16.gmra.mxu0 %v2718
  %v2936 = vpop.f32.mrf.mxu0
  %v2937 = vadd.f32 %v2790, %v2936
  %v2938 = vpop.f32.mrf.mxu0
  %v2939 = vadd.f32 %v2790, %v2938
  %2940 = vdwg.mxu0
  %2941 = vmatpush.bf16.msra.mxu0 %v2879
  %2942 = vmatpush.bf16.msra.mxu0 %v2878
  %2943 = vmatpush.bf16.msra.mxu0 %v2877
  %2944 = vmatpush.bf16.msra.mxu0 %v2876
  %2945 = vmatpush.bf16.msra.mxu0 %v2875
  %2946 = vmatpush.bf16.msra.mxu0 %v2874
  %2947 = vmatpush.bf16.msra.mxu0 %v2873
  %2948 = vmatpush.bf16.msra.mxu0 %v2872
  %2949 = vmatmul.bf16.gmra.mxu0 %v2741
  %v2950 = vpop.f32.mrf.mxu0
  %v2951 = vadd.f32 %v2922, %v2950
  %v2952 = vpop.f32.mrf.mxu0
  %v2953 = vadd.f32 %v2924, %v2952
  %2954 = vmatmul.bf16.gmra.mxu0 %v2744
  %v2955 = vpop.f32.mrf.mxu0
  %v2956 = vadd.f32 %v2927, %v2955
  %v2957 = vpop.f32.mrf.mxu0
  %v2958 = vadd.f32 %v2929, %v2957
  %2959 = vmatmul.bf16.gmra.mxu0 %v2747
  %v2960 = vpop.f32.mrf.mxu0
  %v2961 = vadd.f32 %v2932, %v2960
  %v2962 = vpop.f32.mrf.mxu0
  %v2963 = vadd.f32 %v2934, %v2962
  %2964 = vmatmul.bf16.gmra.mxu0 %v2750
  %v2965 = vpop.f32.mrf.mxu0
  %v2966 = vadd.f32 %v2937, %v2965
  %v2967 = vpop.f32.mrf.mxu0
  %v2968 = vadd.f32 %v2939, %v2967
  %2969 = vdwg.mxu0
  %2970 = vmatpush.bf16.msra.mxu0 0
  %2971 = vmatpush.bf16.msra.mxu0 0
  %2972 = vmatpush.bf16.msra.mxu0 0
  %2973 = vmatpush.bf16.msra.mxu0 0
  %2974 = vmatpush.bf16.msra.mxu0 0
  %2975 = vmatpush.bf16.msra.mxu0 0
  %2976 = vmatpush.bf16.msra.mxu0 %v2881
  %2977 = vmatpush.bf16.msra.mxu0 %v2880
  %2978 = vmatmul.bf16.gmra.mxu0 %v2901
  %v2979 = vpop.f32.mrf.mxu0
  %v2980 = vadd.f32 %v2951, %v2979
  %v2981 = vpop.f32.mrf.mxu0
  %v2982 = vadd.f32 %v2953, %v2981
  %2983 = vmatmul.bf16.gmra.mxu0 %v2904
  %v2984 = vpop.f32.mrf.mxu0
  %v2985 = vadd.f32 %v2956, %v2984
  %v2986 = vpop.f32.mrf.mxu0
  %v2987 = vadd.f32 %v2958, %v2986
  %2988 = vmatmul.bf16.gmra.mxu0 %v2907
  %v2989 = vpop.f32.mrf.mxu0
  %v2990 = vadd.f32 %v2961, %v2989
  %v2991 = vpop.f32.mrf.mxu0
  %v2992 = vadd.f32 %v2963, %v2991
  %2993 = vmatmul.bf16.gmra.mxu0 %v2910
  %v2994 = vpop.f32.mrf.mxu0
  %v2995 = vadd.f32 %v2966, %v2994
  %v2996 = vpop.f32.mrf.mxu0
  %v2997 = vadd.f32 %v2968, %v2996
  %2998 = vdwg.mxu0
  %v2999 = vmax.f32 %v2980, 0.0
  %v3000 = vmax.f32 %v2982, 0.0
  %v3001 = vmax.f32 %v2985, 0.0
  %v3002 = vmax.f32 %v2987, 0.0
  %v3003 = vmax.f32 %v2990, 0.0
  %v3004 = vmax.f32 %v2992, 0.0
  %v3005 = vmax.f32 %v2995, 0.0
  %v3006 = vmax.f32 %v2997, 0.0
  %v3007 = vld [vmem:[%s3] sm:$0xf]
  %v3008 = vld [vmem:[%s3 + $0x4] sm:$0xf]
  %v3009 = vld [vmem:[%s3 + $0x8] sm:$0xf]
  %v3010 = vld [vmem:[%s3 + $0xc] sm:$0xf]
  %v3011 = vld [vmem:[%s3 + $0x10] sm:$0xf]
  %v3012 = vld [vmem:[%s3 + $0x14] sm:$0xf]
  %v3013 = vld [vmem:[%s3 + $0x18] sm:$0xf]
  %v3014 = vld [vmem:[%s3 + $0x1c] sm:$0xf]
  %v3015 = vld [vmem:[%s3 + $0x20] sm:$0xf]
  %v3016 = vld [vmem:[%s3 + $0x24] sm:$0xf]
  %v3017 = vld [vmem:[%s3 + $0x28] sm:$0xf]
  %v3018 = vld [vmem:[%s3 + $0x2c] sm:$0xf]
  %v3019 = vld [vmem:[%s3 + $0x30] sm:$0xf]
  %v3020 = vld [vmem:[%s3 + $0x34] sm:$0xf]
  %v3021 = vld [vmem:[%s3 + $0x38] sm:$0xf]
  %v3022 = vld [vmem:[%s3 + $0x3c] sm:$0xf]
  %v3023 = vld [vmem:[%s3 + $0x40] sm:$0xf]
  %v3024 = vld [vmem:[%s3 + $0x44] sm:$0xf]
  %v3025 = vpack.c.bf16 %v3000, %v2999
  %v3026 = vpack.c.bf16 %v3002, %v3001
  %v3027 = vpack.c.bf16 %v3004, %v3003
  %v3028 = vpack.c.bf16 %v3006, %v3005
  %v3047 = vunpack.c.l.b16 %v3007
  %v3048 = vunpack.c.l.b16 %v3008
  %v3049 = vunpack.c.l.b16 %v3009
  %v3050 = vunpack.c.l.b16 %v3010
  %v3051 = vunpack.c.l.b16 %v3011
  %v3052 = vunpack.c.l.b16 %v3012
  %v3053 = vunpack.c.l.b16 %v3013
  %v3054 = vunpack.c.l.b16 %v3014
  %v3055 = vunpack.c.l.b16 %v3015
  %v3056 = vunpack.c.l.b16 %v3016
  %v3057 = vunpack.c.l.b16 %v3017
  %v3058 = vunpack.c.l.b16 %v3018
  %v3059 = vunpack.c.l.b16 %v3019
  %v3060 = vunpack.c.l.b16 %v3020
  %v3061 = vunpack.c.l.b16 %v3021
  %v3062 = vunpack.c.l.b16 %v3022
  %v3063 = vunpack.c.l.b16 %v3023
  %v3064 = vunpack.c.l.b16 %v3024
  %v3065 = vpack.c.b16 %v3048, %v3047
  %v3066 = vpack.c.b16 %v3050, %v3049
  %v3067 = vpack.c.b16 %v3052, %v3051
  %v3068 = vpack.c.b16 %v3054, %v3053
  %v3069 = vpack.c.b16 %v3056, %v3055
  %v3070 = vpack.c.b16 %v3058, %v3057
  %v3071 = vpack.c.b16 %v3060, %v3059
  %v3072 = vpack.c.b16 %v3062, %v3061
  %v3073 = vpack.c.b16 %v3064, %v3063
  %v3075 = vsel %vm1526, %v3065, 0
  %v3078 = vsel %vm1526, %v3066, 0
  %v3081 = vsel %vm1526, %v3067, 0
  %v3084 = vsel %vm1526, %v3068, 0
  %v3087 = vsel %vm1526, %v3069, 0
  %v3090 = vsel %vm1526, %v3070, 0
  %v3093 = vsel %vm1526, %v3071, 0
  %v3096 = vsel %vm1526, %v3072, 0
  %v3099 = vsel %vm1526, %v3073, 0
  %3101 = vmatpush.bf16.msra.mxu0 0
  %3102 = vmatpush.bf16.msra.mxu0 0
  %3103 = vmatpush.bf16.msra.mxu0 0
  %3104 = vmatpush.bf16.msra.mxu0 0
  %3105 = vmatpush.bf16.msra.mxu0 %v3028
  %3106 = vmatpush.bf16.msra.mxu0 %v3027
  %3107 = vmatpush.bf16.msra.mxu0 %v3026
  %3108 = vmatpush.bf16.msra.mxu0 %v3025
  %3109 = vmatmul.bf16.gmra.mxu0 %v3075
  %v3110 = vpop.f32.mrf.mxu0
  %v3111 = vadd.f32 0.0, %v3110
  %v3112 = vpop.f32.mrf.mxu0
  %v3113 = vadd.f32 0.0, %v3112
  %3114 = vmatmul.bf16.gmra.mxu0 %v3078
  %v3115 = vpop.f32.mrf.mxu0
  %v3116 = vadd.f32 0.0, %v3115
  %v3117 = vpop.f32.mrf.mxu0
  %v3118 = vadd.f32 0.0, %v3117
  %3119 = vmatmul.bf16.gmra.mxu0 %v3081
  %v3120 = vpop.f32.mrf.mxu0
  %v3121 = vadd.f32 0.0, %v3120
  %v3122 = vpop.f32.mrf.mxu0
  %v3123 = vadd.f32 0.0, %v3122
  %3124 = vmatmul.bf16.gmra.mxu0 %v3084
  %v3125 = vpop.f32.mrf.mxu0
  %v3126 = vadd.f32 0.0, %v3125
  %v3127 = vpop.f32.mrf.mxu0
  %v3128 = vadd.f32 0.0, %v3127
  %3129 = vmatmul.bf16.gmra.mxu0 %v3087
  %v3130 = vpop.f32.mrf.mxu0
  %v3131 = vadd.f32 0.0, %v3130
  %v3132 = vpop.f32.mrf.mxu0
  %v3133 = vadd.f32 0.0, %v3132
  %3134 = vmatmul.bf16.gmra.mxu0 %v3090
  %v3135 = vpop.f32.mrf.mxu0
  %v3136 = vadd.f32 0.0, %v3135
  %v3137 = vpop.f32.mrf.mxu0
  %v3138 = vadd.f32 0.0, %v3137
  %3139 = vmatmul.bf16.gmra.mxu0 %v3093
  %v3140 = vpop.f32.mrf.mxu0
  %v3141 = vadd.f32 0.0, %v3140
  %v3142 = vpop.f32.mrf.mxu0
  %v3143 = vadd.f32 0.0, %v3142
  %3144 = vmatmul.bf16.gmra.mxu0 %v3096
  %v3145 = vpop.f32.mrf.mxu0
  %v3146 = vadd.f32 0.0, %v3145
  %v3147 = vpop.f32.mrf.mxu0
  %v3148 = vadd.f32 0.0, %v3147
  %3149 = vmatmul.bf16.gmra.mxu0 %v3099
  %v3150 = vpop.f32.mrf.mxu0
  %v3151 = vadd.f32 0.0, %v3150
  %v3152 = vpop.f32.mrf.mxu0
  %v3153 = vadd.f32 0.0, %v3152
  %3154 = vdwg.mxu0
  %v3155 = vpack.c.bf16 %v3111, %v3111
  %v3156 = vpack.c.bf16 %v3113, %v3113
  %v3157 = vpack.c.bf16 %v3116, %v3116
  %v3158 = vpack.c.bf16 %v3118, %v3118
  %v3159 = vpack.c.bf16 %v3121, %v3121
  %v3160 = vpack.c.bf16 %v3123, %v3123
  %v3161 = vpack.c.bf16 %v3126, %v3126
  %v3162 = vpack.c.bf16 %v3128, %v3128
  %v3163 = vpack.c.bf16 %v3131, %v3131
  %v3164 = vpack.c.bf16 %v3133, %v3133
  %v3165 = vpack.c.bf16 %v3136, %v3136
  %v3166 = vpack.c.bf16 %v3138, %v3138
  %v3167 = vpack.c.bf16 %v3141, %v3141
  %v3168 = vpack.c.bf16 %v3143, %v3143
  %v3169 = vpack.c.bf16 %v3146, %v3146
  %v3170 = vpack.c.bf16 %v3148, %v3148
  %v3171 = vpack.c.bf16 %v3151, %v3151
  %v3172 = vpack.c.bf16 %v3153, %v3153
  %v3175 = vunpack.c.l.b16 %v3155
  %v3176 = vunpack.c.l.b16 %v3156
  %v3177 = vpack.c.b16 %v3176, %v3175
  %v3180 = vunpack.c.l.b16 %v3157
  %v3181 = vunpack.c.l.b16 %v3158
  %v3182 = vpack.c.b16 %v3181, %v3180
  %3183 = vrot.lane.b32.xlu0 %v3182, 32
  %v3184 = vpop.permute.xlu0 %3183
  %v3187 = vunpack.c.l.b16 %v3159
  %v3188 = vunpack.c.l.b16 %v3160
  %v3189 = vpack.c.b16 %v3188, %v3187
  %3190 = vrot.lane.b32.xlu0 %v3189, 64
  %v3191 = vpop.permute.xlu0 %3190
  %v3194 = vunpack.c.l.b16 %v3161
  %v3195 = vunpack.c.l.b16 %v3162
  %v3196 = vpack.c.b16 %v3195, %v3194
  %3197 = vrot.lane.b32.xlu0 %v3196, 96
  %v3198 = vpop.permute.xlu0 %3197
  %v3201 = vunpack.c.l.b16 %v3163
  %v3202 = vunpack.c.l.b16 %v3164
  %v3203 = vpack.c.b16 %v3202, %v3201
  %v3206 = vunpack.c.l.b16 %v3165
  %v3207 = vunpack.c.l.b16 %v3166
  %v3208 = vpack.c.b16 %v3207, %v3206
  %3209 = vrot.lane.b32.xlu0 %v3208, 32
  %v3210 = vpop.permute.xlu0 %3209
  %v3213 = vunpack.c.l.b16 %v3167
  %v3214 = vunpack.c.l.b16 %v3168
  %v3215 = vpack.c.b16 %v3214, %v3213
  %3216 = vrot.lane.b32.xlu0 %v3215, 64
  %v3217 = vpop.permute.xlu0 %3216
  %v3220 = vunpack.c.l.b16 %v3169
  %v3221 = vunpack.c.l.b16 %v3170
  %v3222 = vpack.c.b16 %v3221, %v3220
  %3223 = vrot.lane.b32.xlu0 %v3222, 96
  %v3224 = vpop.permute.xlu0 %3223
  %v3227 = vunpack.c.l.b16 %v3171
  %v3228 = vunpack.c.l.b16 %v3172
  %v3229 = vpack.c.b16 %v3228, %v3227
  %v3232 = vsel %vm1513, %v3177, %v3184
  %v3234 = vsel %vm1526, %v3232, %v3191
  %v3236 = vsel %vm1535, %v3234, %v3198
  %v3240 = vsel %vm1513, %v3203, %v3210
  %v3242 = vsel %vm1526, %v3240, %v3217
  %v3244 = vsel %vm1535, %v3242, %v3224
  %v3246 = vld [vmem:[%s9] sm:$0xf]
  %v3247 = vld [vmem:[%s9 + $0x4] sm:$0xf]
  %v3248 = vld [vmem:[%s9 + $0x8] sm:$0xf]
  %v3249 = vld [vmem:[%s9 + $0xc] sm:$0xf]
  %v3250 = vld [vmem:[%s9 + $0x10] sm:$0xf]
  %v3251 = vld [vmem:[%s9 + $0x14] sm:$0xf]
  %v3252 = vld [vmem:[%s9 + $0x18] sm:$0xf]
  %v3253 = vld [vmem:[%s9 + $0x1c] sm:$0xf]
  %v3254 = vld [vmem:[%s9 + $0x20] sm:$0xf]
  %v3255 = vld [vmem:[%s9 + $0x24] sm:$0xf]
  %v3256 = vld [vmem:[%s9 + $0x28] sm:$0xf]
  %v3257 = vld [vmem:[%s9 + $0x2c] sm:$0xf]
  %v3258 = vld [vmem:[%s9 + $0x30] sm:$0xf]
  %v3259 = vld [vmem:[%s9 + $0x34] sm:$0xf]
  %v3260 = vld [vmem:[%s9 + $0x38] sm:$0xf]
  %v3261 = vld [vmem:[%s9 + $0x3c] sm:$0xf]
  %v3262 = vld [vmem:[%s9 + $0x40] sm:$0xf]
  %v3263 = vld [vmem:[%s9 + $0x44] sm:$0xf]
  %v3264 = vld [vmem:[%s9 + $0x48] sm:$0xf]
  %v3265 = vld [vmem:[%s9 + $0x4c] sm:$0xf]
  %v3266 = vld [vmem:[%s9 + $0x50] sm:$0xf]
  %v3267 = vld [vmem:[%s9 + $0x54] sm:$0xf]
  %v3268 = vld [vmem:[%s9 + $0x58] sm:$0xf]
  %v3269 = vld [vmem:[%s9 + $0x5c] sm:$0xf]
  %v3270 = vld [vmem:[%s9 + $0x60] sm:$0xf]
  %v3271 = vld [vmem:[%s9 + $0x64] sm:$0xf]
  %v3272 = vld [vmem:[%s9 + $0x68] sm:$0xf]
  %v3273 = vld [vmem:[%s9 + $0x6c] sm:$0xf]
  %v3274 = vld [vmem:[%s9 + $0x70] sm:$0xf]
  %v3275 = vld [vmem:[%s9 + $0x74] sm:$0xf]
  %v3276 = vld [vmem:[%s9 + $0x78] sm:$0xf]
  %v3277 = vld [vmem:[%s9 + $0x7c] sm:$0xf]
  %v3278 = vld [vmem:[%s9 + $0x80] sm:$0xf]
  %v3279 = vld [vmem:[%s9 + $0x84] sm:$0xf]
  %v3280 = vld [vmem:[%s9 + $0x88] sm:$0xf]
  %v3281 = vld [vmem:[%s9 + $0x8c] sm:$0xf]
  %v3282 = vld [vmem:[%s15] sm:$0x1]
  %v3284 = vperm.slane %v3282, 0
  %v3322 = vunpack.c.l.b16 %v3246
  %v3323 = vunpack.c.l.b16 %v3247
  %v3324 = vunpack.c.l.b16 %v3248
  %v3325 = vunpack.c.l.b16 %v3249
  %v3326 = vunpack.c.l.b16 %v3250
  %v3327 = vunpack.c.l.b16 %v3251
  %v3328 = vunpack.c.l.b16 %v3252
  %v3329 = vunpack.c.l.b16 %v3253
  %v3330 = vunpack.c.l.b16 %v3254
  %v3331 = vunpack.c.l.b16 %v3255
  %v3332 = vunpack.c.l.b16 %v3256
  %v3333 = vunpack.c.l.b16 %v3257
  %v3334 = vunpack.c.l.b16 %v3258
  %v3335 = vunpack.c.l.b16 %v3259
  %v3336 = vunpack.c.l.b16 %v3260
  %v3337 = vunpack.c.l.b16 %v3261
  %v3338 = vunpack.c.l.b16 %v3262
  %v3339 = vunpack.c.l.b16 %v3263
  %v3340 = vunpack.c.l.b16 %v3264
  %v3341 = vunpack.c.l.b16 %v3265
  %v3342 = vunpack.c.l.b16 %v3266
  %v3343 = vunpack.c.l.b16 %v3267
  %v3344 = vunpack.c.l.b16 %v3268
  %v3345 = vunpack.c.l.b16 %v3269
  %v3346 = vunpack.c.l.b16 %v3270
  %v3347 = vunpack.c.l.b16 %v3271
  %v3348 = vunpack.c.l.b16 %v3272
  %v3349 = vunpack.c.l.b16 %v3273
  %v3350 = vunpack.c.l.b16 %v3274
  %v3351 = vunpack.c.l.b16 %v3275
  %v3352 = vunpack.c.l.b16 %v3276
  %v3353 = vunpack.c.l.b16 %v3277
  %v3354 = vunpack.c.l.b16 %v3278
  %v3355 = vunpack.c.l.b16 %v3279
  %v3356 = vunpack.c.l.b16 %v3280
  %v3357 = vunpack.c.l.b16 %v3281
  %v3358 = vpack.c.b16 %v3323, %v3322
  %v3359 = vpack.c.b16 %v3325, %v3324
  %v3360 = vpack.c.b16 %v3327, %v3326
  %v3361 = vpack.c.b16 %v3329, %v3328
  %v3362 = vpack.c.b16 %v3331, %v3330
  %v3363 = vpack.c.b16 %v3333, %v3332
  %v3364 = vpack.c.b16 %v3335, %v3334
  %v3365 = vpack.c.b16 %v3337, %v3336
  %v3366 = vpack.c.b16 %v3339, %v3338
  %v3367 = vpack.c.b16 %v3341, %v3340
  %v3368 = vpack.c.b16 %v3343, %v3342
  %v3369 = vpack.c.b16 %v3345, %v3344
  %v3370 = vpack.c.b16 %v3347, %v3346
  %v3371 = vpack.c.b16 %v3349, %v3348
  %v3372 = vpack.c.b16 %v3351, %v3350
  %v3373 = vpack.c.b16 %v3353, %v3352
  %v3374 = vpack.c.b16 %v3355, %v3354
  %v3375 = vpack.c.b16 %v3357, %v3356
  %v3395 = vsel %vm1513, %v3229, 0
  %3397 = vmatpush.bf16.msra.mxu0 %v3365
  %3398 = vmatpush.bf16.msra.mxu0 %v3364
  %3399 = vmatpush.bf16.msra.mxu0 %v3363
  %3400 = vmatpush.bf16.msra.mxu0 %v3362
  %3401 = vmatpush.bf16.msra.mxu0 %v3361
  %3402 = vmatpush.bf16.msra.mxu0 %v3360
  %3403 = vmatpush.bf16.msra.mxu0 %v3359
  %3404 = vmatpush.bf16.msra.mxu0 %v3358
  %3405 = vmatmul.bf16.gmra.mxu0 %v3236
  %v3406 = vpop.f32.mrf.mxu0
  %v3407 = vadd.f32 %v3284, %v3406
  %v3408 = vpop.f32.mrf.mxu0
  %v3409 = vadd.f32 %v3284, %v3408
  %3410 = vdwg.mxu0
  %3411 = vmatpush.bf16.msra.mxu0 %v3373
  %3412 = vmatpush.bf16.msra.mxu0 %v3372
  %3413 = vmatpush.bf16.msra.mxu0 %v3371
  %3414 = vmatpush.bf16.msra.mxu0 %v3370
  %3415 = vmatpush.bf16.msra.mxu0 %v3369
  %3416 = vmatpush.bf16.msra.mxu0 %v3368
  %3417 = vmatpush.bf16.msra.mxu0 %v3367
  %3418 = vmatpush.bf16.msra.mxu0 %v3366
  %3419 = vmatmul.bf16.gmra.mxu0 %v3244
  %v3420 = vpop.f32.mrf.mxu0
  %v3421 = vadd.f32 %v3407, %v3420
  %v3422 = vpop.f32.mrf.mxu0
  %v3423 = vadd.f32 %v3409, %v3422
  %3424 = vdwg.mxu0
  %3425 = vmatpush.bf16.msra.mxu0 0
  %3426 = vmatpush.bf16.msra.mxu0 0
  %3427 = vmatpush.bf16.msra.mxu0 0
  %3428 = vmatpush.bf16.msra.mxu0 0
  %3429 = vmatpush.bf16.msra.mxu0 0
  %3430 = vmatpush.bf16.msra.mxu0 0
  %3431 = vmatpush.bf16.msra.mxu0 %v3375
  %3432 = vmatpush.bf16.msra.mxu0 %v3374
  %3433 = vmatmul.bf16.gmra.mxu0 %v3395
  %v3434 = vpop.f32.mrf.mxu0
  %v3435 = vadd.f32 %v3421, %v3434
  %v3436 = vpop.f32.mrf.mxu0
  %v3437 = vadd.f32 %v3423, %v3436
  %3438 = vdwg.mxu0
  %v3439 = vmax.f32 %v3435, 0.0
  %v3440 = vmax.f32 %v3437, 0.0
  %v3441 = vld [vmem:[%s4] sm:$0xf]
  %v3442 = vld [vmem:[%s4 + $0x4] sm:$0xf]
  %v3443 = vld [vmem:[%s4 + $0x8] sm:$0xf]
  %v3444 = vld [vmem:[%s4 + $0xc] sm:$0xf]
  %v3445 = vld [vmem:[%s4 + $0x10] sm:$0xf]
  %v3446 = vld [vmem:[%s4 + $0x14] sm:$0xf]
  %v3447 = vld [vmem:[%s4 + $0x18] sm:$0xf]
  %v3448 = vld [vmem:[%s4 + $0x1c] sm:$0xf]
  %v3449 = vld [vmem:[%s4 + $0x20] sm:$0xf]
  %v3450 = vpack.c.bf16 %v3440, %v3439
  %v3460 = vunpack.c.l.b16 %v3441
  %v3461 = vunpack.c.l.b16 %v3442
  %v3462 = vunpack.c.l.b16 %v3443
  %v3463 = vunpack.c.l.b16 %v3444
  %v3464 = vunpack.c.l.b16 %v3445
  %v3465 = vunpack.c.l.b16 %v3446
  %v3466 = vunpack.c.l.b16 %v3447
  %v3467 = vunpack.c.l.b16 %v3448
  %v3468 = vunpack.c.l.b16 %v3449
  %v3469 = vpack.c.b16 %v3461, %v3460
  %v3470 = vpack.c.b16 %v3463, %v3462
  %v3471 = vpack.c.b16 %v3465, %v3464
  %v3472 = vpack.c.b16 %v3467, %v3466
  %v3473 = vpack.c.b16 %v3468, %v3468
  %vm3474 = vcmask 130048
  %v3476 = vsel %vm3474, %v3469, 0
  %v3479 = vsel %vm3474, %v3470, 0
  %v3482 = vsel %vm3474, %v3471, 0
  %v3485 = vsel %vm3474, %v3472, 0
  %v3488 = vsel %vm3474, %v3473, 0
  %3490 = vmatpush.bf16.msra.mxu0 0
  %3491 = vmatpush.bf16.msra.mxu0 0
  %3492 = vmatpush.bf16.msra.mxu0 0
  %3493 = vmatpush.bf16.msra.mxu0 0
  %3494 = vmatpush.bf16.msra.mxu0 0
  %3495 = vmatpush.bf16.msra.mxu0 0
  %3496 = vmatpush.bf16.msra.mxu0 0
  %3497 = vmatpush.bf16.msra.mxu0 %v3450
  %3498 = vmatmul.bf16.gmra.mxu0 %v3476
  %v3499 = vpop.f32.mrf.mxu0
  %v3500 = vadd.f32 0.0, %v3499
  %v3501 = vpop.f32.mrf.mxu0
  %v3502 = vadd.f32 0.0, %v3501
  %3503 = vmatmul.bf16.gmra.mxu0 %v3479
  %v3504 = vpop.f32.mrf.mxu0
  %v3505 = vadd.f32 0.0, %v3504
  %v3506 = vpop.f32.mrf.mxu0
  %v3507 = vadd.f32 0.0, %v3506
  %3508 = vmatmul.bf16.gmra.mxu0 %v3482
  %v3509 = vpop.f32.mrf.mxu0
  %v3510 = vadd.f32 0.0, %v3509
  %v3511 = vpop.f32.mrf.mxu0
  %v3512 = vadd.f32 0.0, %v3511
  %3513 = vmatmul.bf16.gmra.mxu0 %v3485
  %v3514 = vpop.f32.mrf.mxu0
  %v3515 = vadd.f32 0.0, %v3514
  %v3516 = vpop.f32.mrf.mxu0
  %v3517 = vadd.f32 0.0, %v3516
  %3518 = vmatmul.bf16.gmra.mxu0 %v3488
  %v3519 = vpop.f32.mrf.mxu0
  %v3520 = vadd.f32 0.0, %v3519
  %v3521 = vpop.f32.mrf.mxu0
  %3522 = vdwg.mxu0
  %3524 = vrot.lane.b32.xlu0 %v3502, 64
  %v3525 = vpop.permute.xlu0 %3524
  %3528 = vrot.lane.b32.xlu0 %v3507, 64
  %v3529 = vpop.permute.xlu0 %3528
  %3532 = vrot.lane.b32.xlu0 %v3512, 64
  %v3533 = vpop.permute.xlu0 %3532
  %3536 = vrot.lane.b32.xlu0 %v3517, 64
  %v3537 = vpop.permute.xlu0 %3536
  %v3539 = vsel %vm1526, %v3500, %v3525
  %v3540 = vsel %vm1526, %v3505, %v3529
  %v3541 = vsel %vm1526, %v3510, %v3533
  %v3542 = vsel %vm1526, %v3515, %v3537
  %v3543 = vpack.c.bf16 %v3539, %v3539
  %v3544 = vpack.c.bf16 %v3540, %v3540
  %v3545 = vpack.c.bf16 %v3541, %v3541
  %v3546 = vpack.c.bf16 %v3542, %v3542
  %v3547 = vpack.c.bf16 %v3520, %v3520
  %v3548 = vld [vmem:[%s10] sm:$0xf]
  %v3549 = vld [vmem:[%s10 + $0x4] sm:$0xf]
  %v3550 = vld [vmem:[%s10 + $0x8] sm:$0xf]
  %v3551 = vld [vmem:[%s10 + $0xc] sm:$0xf]
  %v3552 = vld [vmem:[%s10 + $0x10] sm:$0xf]
  %v3553 = vld [vmem:[%s10 + $0x14] sm:$0xf]
  %v3554 = vld [vmem:[%s10 + $0x18] sm:$0xf]
  %v3555 = vld [vmem:[%s10 + $0x1c] sm:$0xf]
  %v3556 = vld [vmem:[%s10 + $0x20] sm:$0xf]
  %v3557 = vld [vmem:[%s10 + $0x24] sm:$0xf]
  %v3558 = vld [vmem:[%s10 + $0x28] sm:$0xf]
  %v3559 = vld [vmem:[%s10 + $0x2c] sm:$0xf]
  %v3560 = vld [vmem:[%s10 + $0x30] sm:$0xf]
  %v3561 = vld [vmem:[%s10 + $0x34] sm:$0xf]
  %v3562 = vld [vmem:[%s10 + $0x38] sm:$0xf]
  %v3563 = vld [vmem:[%s10 + $0x3c] sm:$0xf]
  %v3564 = vld [vmem:[%s10 + $0x40] sm:$0xf]
  %v3565 = vld [vmem:[%s10 + $0x44] sm:$0xf]
  %v3566 = vld [vmem:[%s10 + $0x48] sm:$0xf]
  %v3567 = vld [vmem:[%s10 + $0x4c] sm:$0xf]
  %v3568 = vld [vmem:[%s10 + $0x50] sm:$0xf]
  %v3569 = vld [vmem:[%s10 + $0x54] sm:$0xf]
  %v3570 = vld [vmem:[%s10 + $0x58] sm:$0xf]
  %v3571 = vld [vmem:[%s10 + $0x5c] sm:$0xf]
  %v3572 = vld [vmem:[%s10 + $0x60] sm:$0xf]
  %v3573 = vld [vmem:[%s10 + $0x64] sm:$0xf]
  %v3574 = vld [vmem:[%s10 + $0x68] sm:$0xf]
  %v3575 = vld [vmem:[%s10 + $0x6c] sm:$0xf]
  %v3576 = vld [vmem:[%s10 + $0x70] sm:$0xf]
  %v3577 = vld [vmem:[%s10 + $0x74] sm:$0xf]
  %v3578 = vld [vmem:[%s10 + $0x78] sm:$0xf]
  %v3579 = vld [vmem:[%s10 + $0x7c] sm:$0xf]
  %v3580 = vld [vmem:[%s10 + $0x80] sm:$0xf]
  %v3581 = vld [vmem:[%s10 + $0x84] sm:$0xf]
  %v3582 = vld [vmem:[%s10 + $0x88] sm:$0xf]
  %v3583 = vld [vmem:[%s10 + $0x8c] sm:$0xf]
  %v3584 = vld [vmem:[%s10 + $0x90] sm:$0xf]
  %v3585 = vld [vmem:[%s10 + $0x94] sm:$0xf]
  %v3586 = vld [vmem:[%s10 + $0x98] sm:$0xf]
  %v3587 = vld [vmem:[%s10 + $0x9c] sm:$0xf]
  %v3588 = vld [vmem:[%s10 + $0xa0] sm:$0xf]
  %v3589 = vld [vmem:[%s10 + $0xa4] sm:$0xf]
  %v3590 = vld [vmem:[%s10 + $0xa8] sm:$0xf]
  %v3591 = vld [vmem:[%s10 + $0xac] sm:$0xf]
  %v3592 = vld [vmem:[%s10 + $0xb0] sm:$0xf]
  %v3593 = vld [vmem:[%s10 + $0xb4] sm:$0xf]
  %v3594 = vld [vmem:[%s10 + $0xb8] sm:$0xf]
  %v3595 = vld [vmem:[%s10 + $0xbc] sm:$0xf]
  %v3596 = vld [vmem:[%s10 + $0xc0] sm:$0xf]
  %v3597 = vld [vmem:[%s10 + $0xc4] sm:$0xf]
  %v3598 = vld [vmem:[%s10 + $0xc8] sm:$0xf]
  %v3599 = vld [vmem:[%s10 + $0xcc] sm:$0xf]
  %v3600 = vld [vmem:[%s10 + $0xd0] sm:$0xf]
  %v3601 = vld [vmem:[%s10 + $0xd4] sm:$0xf]
  %v3602 = vld [vmem:[%s10 + $0xd8] sm:$0xf]
  %v3603 = vld [vmem:[%s10 + $0xdc] sm:$0xf]
  %v3604 = vld [vmem:[%s10 + $0xe0] sm:$0xf]
  %v3605 = vld [vmem:[%s10 + $0xe4] sm:$0xf]
  %v3606 = vld [vmem:[%s10 + $0xe8] sm:$0xf]
  %v3607 = vld [vmem:[%s10 + $0xec] sm:$0xf]
  %v3608 = vld [vmem:[%s10 + $0xf0] sm:$0xf]
  %v3609 = vld [vmem:[%s10 + $0xf4] sm:$0xf]
  %v3610 = vld [vmem:[%s10 + $0xf8] sm:$0xf]
  %v3611 = vld [vmem:[%s10 + $0xfc] sm:$0xf]
  %v3612 = vld [vmem:[%s10 + $0x100] sm:$0xf]
  %v3613 = vld [vmem:[%s10 + $0x104] sm:$0xf]
  %v3614 = vld [vmem:[%s10 + $0x108] sm:$0xf]
  %v3615 = vld [vmem:[%s10 + $0x10c] sm:$0xf]
  %v3616 = vld [vmem:[%s10 + $0x110] sm:$0xf]
  %v3617 = vld [vmem:[%s10 + $0x114] sm:$0xf]
  %v3618 = vld [vmem:[%s10 + $0x118] sm:$0xf]
  %v3619 = vld [vmem:[%s10 + $0x11c] sm:$0xf]
  %v3620 = vld [vmem:[%s16] sm:$0x1]
  %v3622 = vperm.slane %v3620, 0
  %v3696 = vunpack.c.l.b16 %v3548
  %v3697 = vunpack.c.l.b16 %v3549
  %v3698 = vunpack.c.l.b16 %v3550
  %v3699 = vunpack.c.l.b16 %v3551
  %v3700 = vunpack.c.l.b16 %v3552
  %v3701 = vunpack.c.l.b16 %v3553
  %v3702 = vunpack.c.l.b16 %v3554
  %v3703 = vunpack.c.l.b16 %v3555
  %v3704 = vunpack.c.l.b16 %v3556
  %v3705 = vunpack.c.l.b16 %v3557
  %v3706 = vunpack.c.l.b16 %v3558
  %v3707 = vunpack.c.l.b16 %v3559
  %v3708 = vunpack.c.l.b16 %v3560
  %v3709 = vunpack.c.l.b16 %v3561
  %v3710 = vunpack.c.l.b16 %v3562
  %v3711 = vunpack.c.l.b16 %v3563
  %v3712 = vunpack.c.l.b16 %v3564
  %v3713 = vunpack.c.l.b16 %v3565
  %v3714 = vunpack.c.l.b16 %v3566
  %v3715 = vunpack.c.l.b16 %v3567
  %v3716 = vunpack.c.l.b16 %v3568
  %v3717 = vunpack.c.l.b16 %v3569
  %v3718 = vunpack.c.l.b16 %v3570
  %v3719 = vunpack.c.l.b16 %v3571
  %v3720 = vunpack.c.l.b16 %v3572
  %v3721 = vunpack.c.l.b16 %v3573
  %v3722 = vunpack.c.l.b16 %v3574
  %v3723 = vunpack.c.l.b16 %v3575
  %v3724 = vunpack.c.l.b16 %v3576
  %v3725 = vunpack.c.l.b16 %v3577
  %v3726 = vunpack.c.l.b16 %v3578
  %v3727 = vunpack.c.l.b16 %v3579
  %v3728 = vunpack.c.l.b16 %v3580
  %v3729 = vunpack.c.l.b16 %v3581
  %v3730 = vunpack.c.l.b16 %v3582
  %v3731 = vunpack.c.l.b16 %v3583
  %v3732 = vunpack.c.l.b16 %v3584
  %v3733 = vunpack.c.l.b16 %v3585
  %v3734 = vunpack.c.l.b16 %v3586
  %v3735 = vunpack.c.l.b16 %v3587
  %v3736 = vunpack.c.l.b16 %v3588
  %v3737 = vunpack.c.l.b16 %v3589
  %v3738 = vunpack.c.l.b16 %v3590
  %v3739 = vunpack.c.l.b16 %v3591
  %v3740 = vunpack.c.l.b16 %v3592
  %v3741 = vunpack.c.l.b16 %v3593
  %v3742 = vunpack.c.l.b16 %v3594
  %v3743 = vunpack.c.l.b16 %v3595
  %v3744 = vunpack.c.l.b16 %v3596
  %v3745 = vunpack.c.l.b16 %v3597
  %v3746 = vunpack.c.l.b16 %v3598
  %v3747 = vunpack.c.l.b16 %v3599
  %v3748 = vunpack.c.l.b16 %v3600
  %v3749 = vunpack.c.l.b16 %v3601
  %v3750 = vunpack.c.l.b16 %v3602
  %v3751 = vunpack.c.l.b16 %v3603
  %v3752 = vunpack.c.l.b16 %v3604
  %v3753 = vunpack.c.l.b16 %v3605
  %v3754 = vunpack.c.l.b16 %v3606
  %v3755 = vunpack.c.l.b16 %v3607
  %v3756 = vunpack.c.l.b16 %v3608
  %v3757 = vunpack.c.l.b16 %v3609
  %v3758 = vunpack.c.l.b16 %v3610
  %v3759 = vunpack.c.l.b16 %v3611
  %v3760 = vunpack.c.l.b16 %v3612
  %v3761 = vunpack.c.l.b16 %v3613
  %v3762 = vunpack.c.l.b16 %v3614
  %v3763 = vunpack.c.l.b16 %v3615
  %v3764 = vunpack.c.l.b16 %v3616
  %v3765 = vunpack.c.l.b16 %v3617
  %v3766 = vunpack.c.l.b16 %v3618
  %v3767 = vunpack.c.l.b16 %v3619
  %v3768 = vpack.c.b16 %v3697, %v3696
  %v3769 = vpack.c.b16 %v3699, %v3698
  %v3770 = vpack.c.b16 %v3701, %v3700
  %v3771 = vpack.c.b16 %v3703, %v3702
  %v3772 = vpack.c.b16 %v3705, %v3704
  %v3773 = vpack.c.b16 %v3707, %v3706
  %v3774 = vpack.c.b16 %v3709, %v3708
  %v3775 = vpack.c.b16 %v3711, %v3710
  %v3776 = vpack.c.b16 %v3713, %v3712
  %v3777 = vpack.c.b16 %v3715, %v3714
  %v3778 = vpack.c.b16 %v3717, %v3716
  %v3779 = vpack.c.b16 %v3719, %v3718
  %v3780 = vpack.c.b16 %v3721, %v3720
  %v3781 = vpack.c.b16 %v3723, %v3722
  %v3782 = vpack.c.b16 %v3725, %v3724
  %v3783 = vpack.c.b16 %v3727, %v3726
  %v3784 = vpack.c.b16 %v3729, %v3728
  %v3785 = vpack.c.b16 %v3731, %v3730
  %v3786 = vpack.c.b16 %v3733, %v3732
  %v3787 = vpack.c.b16 %v3735, %v3734
  %v3788 = vpack.c.b16 %v3737, %v3736
  %v3789 = vpack.c.b16 %v3739, %v3738
  %v3790 = vpack.c.b16 %v3741, %v3740
  %v3791 = vpack.c.b16 %v3743, %v3742
  %v3792 = vpack.c.b16 %v3745, %v3744
  %v3793 = vpack.c.b16 %v3747, %v3746
  %v3794 = vpack.c.b16 %v3749, %v3748
  %v3795 = vpack.c.b16 %v3751, %v3750
  %v3796 = vpack.c.b16 %v3753, %v3752
  %v3797 = vpack.c.b16 %v3755, %v3754
  %v3798 = vpack.c.b16 %v3757, %v3756
  %v3799 = vpack.c.b16 %v3759, %v3758
  %v3800 = vpack.c.b16 %v3761, %v3760
  %v3801 = vpack.c.b16 %v3763, %v3762
  %v3802 = vpack.c.b16 %v3765, %v3764
  %v3803 = vpack.c.b16 %v3767, %v3766
  %v3841 = vsel %vm1526, %v3547, 0
  %3843 = vmatpush.bf16.msra.mxu0 %v3775
  %3844 = vmatpush.bf16.msra.mxu0 %v3774
  %3845 = vmatpush.bf16.msra.mxu0 %v3773
  %3846 = vmatpush.bf16.msra.mxu0 %v3772
  %3847 = vmatpush.bf16.msra.mxu0 %v3771
  %3848 = vmatpush.bf16.msra.mxu0 %v3770
  %3849 = vmatpush.bf16.msra.mxu0 %v3769
  %3850 = vmatpush.bf16.msra.mxu0 %v3768
  %3851 = vmatmul.bf16.gmra.mxu0 %v3543
  %v3852 = vpop.f32.mrf.mxu0
  %v3853 = vadd.f32 %v3622, %v3852
  %v3854 = vpop.f32.mrf.mxu0
  %3855 = vdwg.mxu0
  %3856 = vmatpush.bf16.msra.mxu0 %v3783
  %3857 = vmatpush.bf16.msra.mxu0 %v3782
  %3858 = vmatpush.bf16.msra.mxu0 %v3781
  %3859 = vmatpush.bf16.msra.mxu0 %v3780
  %3860 = vmatpush.bf16.msra.mxu0 %v3779
  %3861 = vmatpush.bf16.msra.mxu0 %v3778
  %3862 = vmatpush.bf16.msra.mxu0 %v3777
  %3863 = vmatpush.bf16.msra.mxu0 %v3776
  %3864 = vmatmul.bf16.gmra.mxu0 %v3544
  %v3865 = vpop.f32.mrf.mxu0
  %v3866 = vadd.f32 %v3853, %v3865
  %v3867 = vpop.f32.mrf.mxu0
  %3868 = vdwg.mxu0
  %3869 = vmatpush.bf16.msra.mxu0 %v3791
  %3870 = vmatpush.bf16.msra.mxu0 %v3790
  %3871 = vmatpush.bf16.msra.mxu0 %v3789
  %3872 = vmatpush.bf16.msra.mxu0 %v3788
  %3873 = vmatpush.bf16.msra.mxu0 %v3787
  %3874 = vmatpush.bf16.msra.mxu0 %v3786
  %3875 = vmatpush.bf16.msra.mxu0 %v3785
  %3876 = vmatpush.bf16.msra.mxu0 %v3784
  %3877 = vmatmul.bf16.gmra.mxu0 %v3545
  %v3878 = vpop.f32.mrf.mxu0
  %v3879 = vadd.f32 %v3866, %v3878
  %v3880 = vpop.f32.mrf.mxu0
  %3881 = vdwg.mxu0
  %3882 = vmatpush.bf16.msra.mxu0 %v3799
  %3883 = vmatpush.bf16.msra.mxu0 %v3798
  %3884 = vmatpush.bf16.msra.mxu0 %v3797
  %3885 = vmatpush.bf16.msra.mxu0 %v3796
  %3886 = vmatpush.bf16.msra.mxu0 %v3795
  %3887 = vmatpush.bf16.msra.mxu0 %v3794
  %3888 = vmatpush.bf16.msra.mxu0 %v3793
  %3889 = vmatpush.bf16.msra.mxu0 %v3792
  %3890 = vmatmul.bf16.gmra.mxu0 %v3546
  %v3891 = vpop.f32.mrf.mxu0
  %v3892 = vadd.f32 %v3879, %v3891
  %v3893 = vpop.f32.mrf.mxu0
  %3894 = vdwg.mxu0
  %3895 = vmatpush.bf16.msra.mxu0 0
  %3896 = vmatpush.bf16.msra.mxu0 0
  %3897 = vmatpush.bf16.msra.mxu0 0
  %3898 = vmatpush.bf16.msra.mxu0 0
  %3899 = vmatpush.bf16.msra.mxu0 %v3803
  %3900 = vmatpush.bf16.msra.mxu0 %v3802
  %3901 = vmatpush.bf16.msra.mxu0 %v3801
  %3902 = vmatpush.bf16.msra.mxu0 %v3800
  %3903 = vmatmul.bf16.gmra.mxu0 %v3841
  %v3904 = vpop.f32.mrf.mxu0
  %v3905 = vadd.f32 %v3892, %v3904
  %v3906 = vpop.f32.mrf.mxu0
  %3907 = vdwg.mxu0
  %v3908 = vmax.f32 %v3905, 0.0
  %v3909 = vld [vmem:[%s5] sm:$0xf]
  %v3910 = vld [vmem:[%s5 + $0x4] sm:$0xf]
  %v3911 = vld [vmem:[%s5 + $0x8] sm:$0xf]
  %v3912 = vld [vmem:[%s5 + $0xc] sm:$0xf]
  %v3913 = vld [vmem:[%s5 + $0x10] sm:$0xf]
  %v3914 = vld [vmem:[%s5 + $0x14] sm:$0xf]
  %v3915 = vld [vmem:[%s5 + $0x18] sm:$0xf]
  %v3916 = vld [vmem:[%s5 + $0x1c] sm:$0xf]
  %v3917 = vld [vmem:[%s5 + $0x20] sm:$0xf]
  %v3918 = vpack.c.bf16 %v3908, %v3908
  %v3928 = vunpack.c.l.b16 %v3909
  %v3929 = vunpack.c.l.b16 %v3910
  %v3930 = vunpack.c.l.b16 %v3911
  %v3931 = vunpack.c.l.b16 %v3912
  %v3932 = vunpack.c.l.b16 %v3913
  %v3933 = vunpack.c.l.b16 %v3914
  %v3934 = vunpack.c.l.b16 %v3915
  %v3935 = vunpack.c.l.b16 %v3916
  %v3936 = vunpack.c.l.b16 %v3917
  %v3937 = vpack.c.b16 %v3929, %v3928
  %v3938 = vpack.c.b16 %v3931, %v3930
  %v3939 = vpack.c.b16 %v3933, %v3932
  %v3940 = vpack.c.b16 %v3935, %v3934
  %v3941 = vpack.c.b16 %v3936, %v3936
  %vm3942 = vcmask 64512
  %v3944 = vsel %vm3942, %v3937, 0
  %v3947 = vsel %vm3942, %v3938, 0
  %v3950 = vsel %vm3942, %v3939, 0
  %v3953 = vsel %vm3942, %v3940, 0
  %v3956 = vsel %vm3942, %v3941, 0
  %vm3958 = vcmask 1043456
  %v3960 = vsel %vm3958, %v3918, 0
  %3962 = vmatpush.bf16.msra.mxu0 0
  %3963 = vmatpush.bf16.msra.mxu0 0
  %3964 = vmatpush.bf16.msra.mxu0 0
  %3965 = vmatpush.bf16.msra.mxu0 0
  %3966 = vmatpush.bf16.msra.mxu0 0
  %3967 = vmatpush.bf16.msra.mxu0 0
  %3968 = vmatpush.bf16.msra.mxu0 0
  %3969 = vmatpush.bf16.msra.mxu0 %v3960
  %3970 = vmatmul.bf16.gmra.mxu0 %v3944
  %v3971 = vpop.f32.mrf.mxu0
  %v3972 = vadd.f32 0.0, %v3971
  %v3973 = vpop.f32.mrf.mxu0
  %v3974 = vadd.f32 0.0, %v3973
  %3975 = vmatmul.bf16.gmra.mxu0 %v3947
  %v3976 = vpop.f32.mrf.mxu0
  %v3977 = vadd.f32 0.0, %v3976
  %v3978 = vpop.f32.mrf.mxu0
  %v3979 = vadd.f32 0.0, %v3978
  %3980 = vmatmul.bf16.gmra.mxu0 %v3950
  %v3981 = vpop.f32.mrf.mxu0
  %v3982 = vadd.f32 0.0, %v3981
  %v3983 = vpop.f32.mrf.mxu0
  %v3984 = vadd.f32 0.0, %v3983
  %3985 = vmatmul.bf16.gmra.mxu0 %v3953
  %v3986 = vpop.f32.mrf.mxu0
  %v3987 = vadd.f32 0.0, %v3986
  %v3988 = vpop.f32.mrf.mxu0
  %v3989 = vadd.f32 0.0, %v3988
  %3990 = vmatmul.bf16.gmra.mxu0 %v3956
  %v3991 = vpop.f32.mrf.mxu0
  %v3992 = vadd.f32 0.0, %v3991
  %v3993 = vpop.f32.mrf.mxu0
  %3994 = vdwg.mxu0
  %v3995 = vpack.c.bf16 %v3972, %v3972
  %v3996 = vpack.c.bf16 %v3974, %v3974
  %v3997 = vpack.c.bf16 %v3977, %v3977
  %v3998 = vpack.c.bf16 %v3979, %v3979
  %v3999 = vpack.c.bf16 %v3982, %v3982
  %v4000 = vpack.c.bf16 %v3984, %v3984
  %v4001 = vpack.c.bf16 %v3987, %v3987
  %v4002 = vpack.c.bf16 %v3989, %v3989
  %v4003 = vpack.c.bf16 %v3992, %v3992
  %v4004 = vld [vmem:[%s11] sm:$0xff]
  %v4005 = vld [vmem:[%s11 + $0x8] sm:$0xff]
  %v4006 = vld [vmem:[%s11 + $0x10] sm:$0xff]
  %v4007 = vld [vmem:[%s11 + $0x18] sm:$0xff]
  %v4008 = vld [vmem:[%s11 + $0x20] sm:$0xff]
  %v4009 = vld [vmem:[%s11 + $0x28] sm:$0xff]
  %v4010 = vld [vmem:[%s11 + $0x30] sm:$0xff]
  %v4011 = vld [vmem:[%s11 + $0x38] sm:$0xff]
  %v4012 = vld [vmem:[%s11 + $0x40] sm:$0xff]
  %v4013 = vld [vmem:[%s11 + $0x48] sm:$0xff]
  %v4014 = vld [vmem:[%s11 + $0x50] sm:$0xff]
  %v4015 = vld [vmem:[%s11 + $0x58] sm:$0xff]
  %v4016 = vld [vmem:[%s11 + $0x60] sm:$0xff]
  %v4017 = vld [vmem:[%s11 + $0x68] sm:$0xff]
  %v4018 = vld [vmem:[%s11 + $0x70] sm:$0xff]
  %v4019 = vld [vmem:[%s11 + $0x78] sm:$0xff]
  %v4020 = vld [vmem:[%s11 + $0x80] sm:$0xff]
  %v4021 = vld [vmem:[%s11 + $0x88] sm:$0xff]
  %v4022 = vld [vmem:[%s11 + $0x90] sm:$0xff]
  %v4023 = vld [vmem:[%s11 + $0x98] sm:$0xff]
  %v4024 = vld [vmem:[%s11 + $0xa0] sm:$0xff]
  %v4025 = vld [vmem:[%s11 + $0xa8] sm:$0xff]
  %v4026 = vld [vmem:[%s11 + $0xb0] sm:$0xff]
  %v4027 = vld [vmem:[%s11 + $0xb8] sm:$0xff]
  %v4028 = vld [vmem:[%s11 + $0xc0] sm:$0xff]
  %v4029 = vld [vmem:[%s11 + $0xc8] sm:$0xff]
  %v4030 = vld [vmem:[%s11 + $0xd0] sm:$0xff]
  %v4031 = vld [vmem:[%s11 + $0xd8] sm:$0xff]
  %v4032 = vld [vmem:[%s11 + $0xe0] sm:$0xff]
  %v4033 = vld [vmem:[%s11 + $0xe8] sm:$0xff]
  %v4034 = vld [vmem:[%s11 + $0xf0] sm:$0xff]
  %v4035 = vld [vmem:[%s11 + $0xf8] sm:$0xff]
  %v4036 = vld [vmem:[%s11 + $0x100] sm:$0xff]
  %v4037 = vld [vmem:[%s11 + $0x108] sm:$0xff]
  %v4038 = vld [vmem:[%s11 + $0x110] sm:$0xff]
  %v4039 = vld [vmem:[%s11 + $0x118] sm:$0xff]
  %v4040 = vld [vmem:[%s11 + $0x120] sm:$0xff]
  %v4041 = vld [vmem:[%s11 + $0x128] sm:$0xff]
  %v4042 = vld [vmem:[%s11 + $0x130] sm:$0xff]
  %v4043 = vld [vmem:[%s11 + $0x138] sm:$0xff]
  %v4044 = vld [vmem:[%s11 + $0x140] sm:$0xff]
  %v4045 = vld [vmem:[%s11 + $0x148] sm:$0xff]
  %v4046 = vld [vmem:[%s11 + $0x150] sm:$0xff]
  %v4047 = vld [vmem:[%s11 + $0x158] sm:$0xff]
  %v4048 = vld [vmem:[%s11 + $0x160] sm:$0xff]
  %v4049 = vld [vmem:[%s11 + $0x168] sm:$0xff]
  %v4050 = vld [vmem:[%s11 + $0x170] sm:$0xff]
  %v4051 = vld [vmem:[%s11 + $0x178] sm:$0xff]
  %v4052 = vld [vmem:[%s11 + $0x180] sm:$0xff]
  %v4053 = vld [vmem:[%s11 + $0x188] sm:$0xff]
  %v4054 = vld [vmem:[%s11 + $0x190] sm:$0xff]
  %v4055 = vld [vmem:[%s11 + $0x198] sm:$0xff]
  %v4056 = vld [vmem:[%s11 + $0x1a0] sm:$0xff]
  %v4057 = vld [vmem:[%s11 + $0x1a8] sm:$0xff]
  %v4058 = vld [vmem:[%s11 + $0x1b0] sm:$0xff]
  %v4059 = vld [vmem:[%s11 + $0x1b8] sm:$0xff]
  %v4060 = vld [vmem:[%s11 + $0x1c0] sm:$0xff]
  %v4061 = vld [vmem:[%s11 + $0x1c8] sm:$0xff]
  %v4062 = vld [vmem:[%s11 + $0x1d0] sm:$0xff]
  %v4063 = vld [vmem:[%s11 + $0x1d8] sm:$0xff]
  %v4064 = vld [vmem:[%s11 + $0x1e0] sm:$0xff]
  %v4065 = vld [vmem:[%s11 + $0x1e8] sm:$0xff]
  %v4066 = vld [vmem:[%s11 + $0x1f0] sm:$0xff]
  %v4067 = vld [vmem:[%s11 + $0x1f8] sm:$0xff]
  %v4068 = vld [vmem:[%s11 + $0x200] sm:$0xff]
  %v4069 = vld [vmem:[%s11 + $0x208] sm:$0xff]
  %v4070 = vld [vmem:[%s11 + $0x210] sm:$0xff]
  %v4071 = vld [vmem:[%s11 + $0x218] sm:$0xff]
  %v4072 = vld [vmem:[%s11 + $0x220] sm:$0xff]
  %v4073 = vld [vmem:[%s11 + $0x228] sm:$0xff]
  %v4074 = vld [vmem:[%s11 + $0x230] sm:$0xff]
  %v4075 = vld [vmem:[%s11 + $0x238] sm:$0xff]
  %v4076 = vld [vmem:[%s11 + $0x240] sm:$0xff]
  %v4077 = vld [vmem:[%s11 + $0x248] sm:$0xff]
  %v4078 = vld [vmem:[%s11 + $0x250] sm:$0xff]
  %v4079 = vld [vmem:[%s11 + $0x258] sm:$0xff]
  %v4080 = vld [vmem:[%s11 + $0x260] sm:$0xff]
  %v4081 = vld [vmem:[%s11 + $0x268] sm:$0xff]
  %v4082 = vld [vmem:[%s11 + $0x270] sm:$0xff]
  %v4083 = vld [vmem:[%s11 + $0x278] sm:$0xff]
  %v4084 = vld [vmem:[%s11 + $0x280] sm:$0xff]
  %v4085 = vld [vmem:[%s11 + $0x288] sm:$0xff]
  %v4086 = vld [vmem:[%s11 + $0x290] sm:$0xff]
  %v4087 = vld [vmem:[%s11 + $0x298] sm:$0xff]
  %v4088 = vld [vmem:[%s11 + $0x2a0] sm:$0xff]
  %v4089 = vld [vmem:[%s11 + $0x2a8] sm:$0xff]
  %v4090 = vld [vmem:[%s11 + $0x2b0] sm:$0xff]
  %v4091 = vld [vmem:[%s11 + $0x2b8] sm:$0xff]
  %v4092 = vld [vmem:[%s11 + $0x2c0] sm:$0xff]
  %v4093 = vld [vmem:[%s11 + $0x2c8] sm:$0xff]
  %v4094 = vld [vmem:[%s11 + $0x2d0] sm:$0xff]
  %v4095 = vld [vmem:[%s11 + $0x2d8] sm:$0xff]
  %v4096 = vld [vmem:[%s11 + $0x2e0] sm:$0xff]
  %v4097 = vld [vmem:[%s11 + $0x2e8] sm:$0xff]
  %v4098 = vld [vmem:[%s11 + $0x2f0] sm:$0xff]
  %v4099 = vld [vmem:[%s11 + $0x2f8] sm:$0xff]
  %v4100 = vld [vmem:[%s11 + $0x300] sm:$0xff]
  %v4101 = vld [vmem:[%s11 + $0x308] sm:$0xff]
  %v4102 = vld [vmem:[%s11 + $0x310] sm:$0xff]
  %v4103 = vld [vmem:[%s11 + $0x318] sm:$0xff]
  %v4104 = vld [vmem:[%s11 + $0x320] sm:$0xff]
  %v4105 = vld [vmem:[%s11 + $0x328] sm:$0xff]
  %v4106 = vld [vmem:[%s11 + $0x330] sm:$0xff]
  %v4107 = vld [vmem:[%s11 + $0x338] sm:$0xff]
  %v4108 = vld [vmem:[%s11 + $0x340] sm:$0xff]
  %v4109 = vld [vmem:[%s11 + $0x348] sm:$0xff]
  %v4110 = vld [vmem:[%s11 + $0x350] sm:$0xff]
  %v4111 = vld [vmem:[%s11 + $0x358] sm:$0xff]
  %v4112 = vld [vmem:[%s11 + $0x360] sm:$0xff]
  %v4113 = vld [vmem:[%s11 + $0x368] sm:$0xff]
  %v4114 = vld [vmem:[%s11 + $0x370] sm:$0xff]
  %v4115 = vld [vmem:[%s11 + $0x378] sm:$0xff]
  %v4116 = vld [vmem:[%s11 + $0x380] sm:$0xff]
  %v4117 = vld [vmem:[%s11 + $0x388] sm:$0xff]
  %v4118 = vld [vmem:[%s11 + $0x390] sm:$0xff]
  %v4119 = vld [vmem:[%s11 + $0x398] sm:$0xff]
  %v4120 = vld [vmem:[%s11 + $0x3a0] sm:$0xff]
  %v4121 = vld [vmem:[%s11 + $0x3a8] sm:$0xff]
  %v4122 = vld [vmem:[%s11 + $0x3b0] sm:$0xff]
  %v4123 = vld [vmem:[%s11 + $0x3b8] sm:$0xff]
  %v4124 = vld [vmem:[%s11 + $0x3c0] sm:$0xff]
  %v4125 = vld [vmem:[%s11 + $0x3c8] sm:$0xff]
  %v4126 = vld [vmem:[%s11 + $0x3d0] sm:$0xff]
  %v4127 = vld [vmem:[%s11 + $0x3d8] sm:$0xff]
  %v4128 = vld [vmem:[%s11 + $0x3e0] sm:$0xff]
  %v4129 = vld [vmem:[%s11 + $0x3e8] sm:$0xff]
  %v4130 = vld [vmem:[%s11 + $0x3f0] sm:$0xff]
  %v4131 = vld [vmem:[%s11 + $0x3f8] sm:$0xff]
  %v4132 = vld [vmem:[%s11 + $0x400] sm:$0xff]
  %v4133 = vld [vmem:[%s11 + $0x408] sm:$0xff]
  %v4134 = vld [vmem:[%s11 + $0x410] sm:$0xff]
  %v4135 = vld [vmem:[%s11 + $0x418] sm:$0xff]
  %v4136 = vld [vmem:[%s11 + $0x420] sm:$0xff]
  %v4137 = vld [vmem:[%s11 + $0x428] sm:$0xff]
  %v4138 = vld [vmem:[%s11 + $0x430] sm:$0xff]
  %v4139 = vld [vmem:[%s11 + $0x438] sm:$0xff]
  %v4140 = vld [vmem:[%s11 + $0x440] sm:$0xff]
  %v4141 = vld [vmem:[%s11 + $0x448] sm:$0xff]
  %v4142 = vld [vmem:[%s11 + $0x450] sm:$0xff]
  %v4143 = vld [vmem:[%s11 + $0x458] sm:$0xff]
  %v4144 = vld [vmem:[%s11 + $0x460] sm:$0xff]
  %v4145 = vld [vmem:[%s11 + $0x468] sm:$0xff]
  %v4146 = vld [vmem:[%s11 + $0x470] sm:$0xff]
  %v4147 = vld [vmem:[%s11 + $0x478] sm:$0xff]
  %v4148 = vld [vmem:[%s17] sm:$0x3]
  %v4150 = vperm.slane %v4148, 0
  %v4151 = vperm.slane %v4148, 1
  %v4298 = vunpack.c.l.b16 %v4004
  %v4299 = vunpack.c.h.b16 %v4004
  %v4300 = vunpack.c.l.b16 %v4005
  %v4301 = vunpack.c.h.b16 %v4005
  %v4302 = vunpack.c.l.b16 %v4006
  %v4303 = vunpack.c.h.b16 %v4006
  %v4304 = vunpack.c.l.b16 %v4007
  %v4305 = vunpack.c.h.b16 %v4007
  %v4306 = vunpack.c.l.b16 %v4008
  %v4307 = vunpack.c.h.b16 %v4008
  %v4308 = vunpack.c.l.b16 %v4009
  %v4309 = vunpack.c.h.b16 %v4009
  %v4310 = vunpack.c.l.b16 %v4010
  %v4311 = vunpack.c.h.b16 %v4010
  %v4312 = vunpack.c.l.b16 %v4011
  %v4313 = vunpack.c.h.b16 %v4011
  %v4314 = vunpack.c.l.b16 %v4012
  %v4315 = vunpack.c.h.b16 %v4012
  %v4316 = vunpack.c.l.b16 %v4013
  %v4317 = vunpack.c.h.b16 %v4013
  %v4318 = vunpack.c.l.b16 %v4014
  %v4319 = vunpack.c.h.b16 %v4014
  %v4320 = vunpack.c.l.b16 %v4015
  %v4321 = vunpack.c.h.b16 %v4015
  %v4322 = vunpack.c.l.b16 %v4016
  %v4323 = vunpack.c.h.b16 %v4016
  %v4324 = vunpack.c.l.b16 %v4017
  %v4325 = vunpack.c.h.b16 %v4017
  %v4326 = vunpack.c.l.b16 %v4018
  %v4327 = vunpack.c.h.b16 %v4018
  %v4328 = vunpack.c.l.b16 %v4019
  %v4329 = vunpack.c.h.b16 %v4019
  %v4330 = vunpack.c.l.b16 %v4020
  %v4331 = vunpack.c.h.b16 %v4020
  %v4332 = vunpack.c.l.b16 %v4021
  %v4333 = vunpack.c.h.b16 %v4021
  %v4334 = vunpack.c.l.b16 %v4022
  %v4335 = vunpack.c.h.b16 %v4022
  %v4336 = vunpack.c.l.b16 %v4023
  %v4337 = vunpack.c.h.b16 %v4023
  %v4338 = vunpack.c.l.b16 %v4024
  %v4339 = vunpack.c.h.b16 %v4024
  %v4340 = vunpack.c.l.b16 %v4025
  %v4341 = vunpack.c.h.b16 %v4025
  %v4342 = vunpack.c.l.b16 %v4026
  %v4343 = vunpack.c.h.b16 %v4026
  %v4344 = vunpack.c.l.b16 %v4027
  %v4345 = vunpack.c.h.b16 %v4027
  %v4346 = vunpack.c.l.b16 %v4028
  %v4347 = vunpack.c.h.b16 %v4028
  %v4348 = vunpack.c.l.b16 %v4029
  %v4349 = vunpack.c.h.b16 %v4029
  %v4350 = vunpack.c.l.b16 %v4030
  %v4351 = vunpack.c.h.b16 %v4030
  %v4352 = vunpack.c.l.b16 %v4031
  %v4353 = vunpack.c.h.b16 %v4031
  %v4354 = vunpack.c.l.b16 %v4032
  %v4355 = vunpack.c.h.b16 %v4032
  %v4356 = vunpack.c.l.b16 %v4033
  %v4357 = vunpack.c.h.b16 %v4033
  %v4358 = vunpack.c.l.b16 %v4034
  %v4359 = vunpack.c.h.b16 %v4034
  %v4360 = vunpack.c.l.b16 %v4035
  %v4361 = vunpack.c.h.b16 %v4035
  %v4362 = vunpack.c.l.b16 %v4036
  %v4363 = vunpack.c.h.b16 %v4036
  %v4364 = vunpack.c.l.b16 %v4037
  %v4365 = vunpack.c.h.b16 %v4037
  %v4366 = vunpack.c.l.b16 %v4038
  %v4367 = vunpack.c.h.b16 %v4038
  %v4368 = vunpack.c.l.b16 %v4039
  %v4369 = vunpack.c.h.b16 %v4039
  %v4370 = vunpack.c.l.b16 %v4040
  %v4371 = vunpack.c.h.b16 %v4040
  %v4372 = vunpack.c.l.b16 %v4041
  %v4373 = vunpack.c.h.b16 %v4041
  %v4374 = vunpack.c.l.b16 %v4042
  %v4375 = vunpack.c.h.b16 %v4042
  %v4376 = vunpack.c.l.b16 %v4043
  %v4377 = vunpack.c.h.b16 %v4043
  %v4378 = vunpack.c.l.b16 %v4044
  %v4379 = vunpack.c.h.b16 %v4044
  %v4380 = vunpack.c.l.b16 %v4045
  %v4381 = vunpack.c.h.b16 %v4045
  %v4382 = vunpack.c.l.b16 %v4046
  %v4383 = vunpack.c.h.b16 %v4046
  %v4384 = vunpack.c.l.b16 %v4047
  %v4385 = vunpack.c.h.b16 %v4047
  %v4386 = vunpack.c.l.b16 %v4048
  %v4387 = vunpack.c.h.b16 %v4048
  %v4388 = vunpack.c.l.b16 %v4049
  %v4389 = vunpack.c.h.b16 %v4049
  %v4390 = vunpack.c.l.b16 %v4050
  %v4391 = vunpack.c.h.b16 %v4050
  %v4392 = vunpack.c.l.b16 %v4051
  %v4393 = vunpack.c.h.b16 %v4051
  %v4394 = vunpack.c.l.b16 %v4052
  %v4395 = vunpack.c.h.b16 %v4052
  %v4396 = vunpack.c.l.b16 %v4053
  %v4397 = vunpack.c.h.b16 %v4053
  %v4398 = vunpack.c.l.b16 %v4054
  %v4399 = vunpack.c.h.b16 %v4054
  %v4400 = vunpack.c.l.b16 %v4055
  %v4401 = vunpack.c.h.b16 %v4055
  %v4402 = vunpack.c.l.b16 %v4056
  %v4403 = vunpack.c.h.b16 %v4056
  %v4404 = vunpack.c.l.b16 %v4057
  %v4405 = vunpack.c.h.b16 %v4057
  %v4406 = vunpack.c.l.b16 %v4058
  %v4407 = vunpack.c.h.b16 %v4058
  %v4408 = vunpack.c.l.b16 %v4059
  %v4409 = vunpack.c.h.b16 %v4059
  %v4410 = vunpack.c.l.b16 %v4060
  %v4411 = vunpack.c.h.b16 %v4060
  %v4412 = vunpack.c.l.b16 %v4061
  %v4413 = vunpack.c.h.b16 %v4061
  %v4414 = vunpack.c.l.b16 %v4062
  %v4415 = vunpack.c.h.b16 %v4062
  %v4416 = vunpack.c.l.b16 %v4063
  %v4417 = vunpack.c.h.b16 %v4063
  %v4418 = vunpack.c.l.b16 %v4064
  %v4419 = vunpack.c.h.b16 %v4064
  %v4420 = vunpack.c.l.b16 %v4065
  %v4421 = vunpack.c.h.b16 %v4065
  %v4422 = vunpack.c.l.b16 %v4066
  %v4423 = vunpack.c.h.b16 %v4066
  %v4424 = vunpack.c.l.b16 %v4067
  %v4425 = vunpack.c.h.b16 %v4067
  %v4426 = vunpack.c.l.b16 %v4068
  %v4427 = vunpack.c.h.b16 %v4068
  %v4428 = vunpack.c.l.b16 %v4069
  %v4429 = vunpack.c.h.b16 %v4069
  %v4430 = vunpack.c.l.b16 %v4070
  %v4431 = vunpack.c.h.b16 %v4070
  %v4432 = vunpack.c.l.b16 %v4071
  %v4433 = vunpack.c.h.b16 %v4071
  %v4434 = vunpack.c.l.b16 %v4072
  %v4435 = vunpack.c.h.b16 %v4072
  %v4436 = vunpack.c.l.b16 %v4073
  %v4437 = vunpack.c.h.b16 %v4073
  %v4438 = vunpack.c.l.b16 %v4074
  %v4439 = vunpack.c.h.b16 %v4074
  %v4440 = vunpack.c.l.b16 %v4075
  %v4441 = vunpack.c.h.b16 %v4075
  %v4442 = vunpack.c.l.b16 %v4076
  %v4443 = vunpack.c.h.b16 %v4076
  %v4444 = vunpack.c.l.b16 %v4077
  %v4445 = vunpack.c.h.b16 %v4077
  %v4446 = vunpack.c.l.b16 %v4078
  %v4447 = vunpack.c.h.b16 %v4078
  %v4448 = vunpack.c.l.b16 %v4079
  %v4449 = vunpack.c.h.b16 %v4079
  %v4450 = vunpack.c.l.b16 %v4080
  %v4451 = vunpack.c.h.b16 %v4080
  %v4452 = vunpack.c.l.b16 %v4081
  %v4453 = vunpack.c.h.b16 %v4081
  %v4454 = vunpack.c.l.b16 %v4082
  %v4455 = vunpack.c.h.b16 %v4082
  %v4456 = vunpack.c.l.b16 %v4083
  %v4457 = vunpack.c.h.b16 %v4083
  %v4458 = vunpack.c.l.b16 %v4084
  %v4459 = vunpack.c.h.b16 %v4084
  %v4460 = vunpack.c.l.b16 %v4085
  %v4461 = vunpack.c.h.b16 %v4085
  %v4462 = vunpack.c.l.b16 %v4086
  %v4463 = vunpack.c.h.b16 %v4086
  %v4464 = vunpack.c.l.b16 %v4087
  %v4465 = vunpack.c.h.b16 %v4087
  %v4466 = vunpack.c.l.b16 %v4088
  %v4467 = vunpack.c.h.b16 %v4088
  %v4468 = vunpack.c.l.b16 %v4089
  %v4469 = vunpack.c.h.b16 %v4089
  %v4470 = vunpack.c.l.b16 %v4090
  %v4471 = vunpack.c.h.b16 %v4090
  %v4472 = vunpack.c.l.b16 %v4091
  %v4473 = vunpack.c.h.b16 %v4091
  %v4474 = vunpack.c.l.b16 %v4092
  %v4475 = vunpack.c.h.b16 %v4092
  %v4476 = vunpack.c.l.b16 %v4093
  %v4477 = vunpack.c.h.b16 %v4093
  %v4478 = vunpack.c.l.b16 %v4094
  %v4479 = vunpack.c.h.b16 %v4094
  %v4480 = vunpack.c.l.b16 %v4095
  %v4481 = vunpack.c.h.b16 %v4095
  %v4482 = vunpack.c.l.b16 %v4096
  %v4483 = vunpack.c.h.b16 %v4096
  %v4484 = vunpack.c.l.b16 %v4097
  %v4485 = vunpack.c.h.b16 %v4097
  %v4486 = vunpack.c.l.b16 %v4098
  %v4487 = vunpack.c.h.b16 %v4098
  %v4488 = vunpack.c.l.b16 %v4099
  %v4489 = vunpack.c.h.b16 %v4099
  %v4490 = vunpack.c.l.b16 %v4100
  %v4491 = vunpack.c.h.b16 %v4100
  %v4492 = vunpack.c.l.b16 %v4101
  %v4493 = vunpack.c.h.b16 %v4101
  %v4494 = vunpack.c.l.b16 %v4102
  %v4495 = vunpack.c.h.b16 %v4102
  %v4496 = vunpack.c.l.b16 %v4103
  %v4497 = vunpack.c.h.b16 %v4103
  %v4498 = vunpack.c.l.b16 %v4104
  %v4499 = vunpack.c.h.b16 %v4104
  %v4500 = vunpack.c.l.b16 %v4105
  %v4501 = vunpack.c.h.b16 %v4105
  %v4502 = vunpack.c.l.b16 %v4106
  %v4503 = vunpack.c.h.b16 %v4106
  %v4504 = vunpack.c.l.b16 %v4107
  %v4505 = vunpack.c.h.b16 %v4107
  %v4506 = vunpack.c.l.b16 %v4108
  %v4507 = vunpack.c.h.b16 %v4108
  %v4508 = vunpack.c.l.b16 %v4109
  %v4509 = vunpack.c.h.b16 %v4109
  %v4510 = vunpack.c.l.b16 %v4110
  %v4511 = vunpack.c.h.b16 %v4110
  %v4512 = vunpack.c.l.b16 %v4111
  %v4513 = vunpack.c.h.b16 %v4111
  %v4514 = vunpack.c.l.b16 %v4112
  %v4515 = vunpack.c.h.b16 %v4112
  %v4516 = vunpack.c.l.b16 %v4113
  %v4517 = vunpack.c.h.b16 %v4113
  %v4518 = vunpack.c.l.b16 %v4114
  %v4519 = vunpack.c.h.b16 %v4114
  %v4520 = vunpack.c.l.b16 %v4115
  %v4521 = vunpack.c.h.b16 %v4115
  %v4522 = vunpack.c.l.b16 %v4116
  %v4523 = vunpack.c.h.b16 %v4116
  %v4524 = vunpack.c.l.b16 %v4117
  %v4525 = vunpack.c.h.b16 %v4117
  %v4526 = vunpack.c.l.b16 %v4118
  %v4527 = vunpack.c.h.b16 %v4118
  %v4528 = vunpack.c.l.b16 %v4119
  %v4529 = vunpack.c.h.b16 %v4119
  %v4530 = vunpack.c.l.b16 %v4120
  %v4531 = vunpack.c.h.b16 %v4120
  %v4532 = vunpack.c.l.b16 %v4121
  %v4533 = vunpack.c.h.b16 %v4121
  %v4534 = vunpack.c.l.b16 %v4122
  %v4535 = vunpack.c.h.b16 %v4122
  %v4536 = vunpack.c.l.b16 %v4123
  %v4537 = vunpack.c.h.b16 %v4123
  %v4538 = vunpack.c.l.b16 %v4124
  %v4539 = vunpack.c.h.b16 %v4124
  %v4540 = vunpack.c.l.b16 %v4125
  %v4541 = vunpack.c.h.b16 %v4125
  %v4542 = vunpack.c.l.b16 %v4126
  %v4543 = vunpack.c.h.b16 %v4126
  %v4544 = vunpack.c.l.b16 %v4127
  %v4545 = vunpack.c.h.b16 %v4127
  %v4546 = vunpack.c.l.b16 %v4128
  %v4547 = vunpack.c.h.b16 %v4128
  %v4548 = vunpack.c.l.b16 %v4129
  %v4549 = vunpack.c.h.b16 %v4129
  %v4550 = vunpack.c.l.b16 %v4130
  %v4551 = vunpack.c.h.b16 %v4130
  %v4552 = vunpack.c.l.b16 %v4131
  %v4553 = vunpack.c.h.b16 %v4131
  %v4554 = vunpack.c.l.b16 %v4132
  %v4555 = vunpack.c.h.b16 %v4132
  %v4556 = vunpack.c.l.b16 %v4133
  %v4557 = vunpack.c.h.b16 %v4133
  %v4558 = vunpack.c.l.b16 %v4134
  %v4559 = vunpack.c.h.b16 %v4134
  %v4560 = vunpack.c.l.b16 %v4135
  %v4561 = vunpack.c.h.b16 %v4135
  %v4562 = vunpack.c.l.b16 %v4136
  %v4563 = vunpack.c.h.b16 %v4136
  %v4564 = vunpack.c.l.b16 %v4137
  %v4565 = vunpack.c.h.b16 %v4137
  %v4566 = vunpack.c.l.b16 %v4138
  %v4567 = vunpack.c.h.b16 %v4138
  %v4568 = vunpack.c.l.b16 %v4139
  %v4569 = vunpack.c.h.b16 %v4139
  %v4570 = vunpack.c.l.b16 %v4140
  %v4571 = vunpack.c.h.b16 %v4140
  %v4572 = vunpack.c.l.b16 %v4141
  %v4573 = vunpack.c.h.b16 %v4141
  %v4574 = vunpack.c.l.b16 %v4142
  %v4575 = vunpack.c.h.b16 %v4142
  %v4576 = vunpack.c.l.b16 %v4143
  %v4577 = vunpack.c.h.b16 %v4143
  %v4578 = vunpack.c.l.b16 %v4144
  %v4579 = vunpack.c.h.b16 %v4144
  %v4580 = vunpack.c.l.b16 %v4145
  %v4581 = vunpack.c.h.b16 %v4145
  %v4582 = vunpack.c.l.b16 %v4146
  %v4583 = vunpack.c.h.b16 %v4146
  %v4584 = vunpack.c.l.b16 %v4147
  %v4585 = vunpack.c.h.b16 %v4147
  %v4586 = vpack.c.b16 %v4300, %v4298
  %v4587 = vpack.c.b16 %v4301, %v4299
  %v4588 = vpack.c.b16 %v4304, %v4302
  %v4589 = vpack.c.b16 %v4305, %v4303
  %v4590 = vpack.c.b16 %v4308, %v4306
  %v4591 = vpack.c.b16 %v4309, %v4307
  %v4592 = vpack.c.b16 %v4312, %v4310
  %v4593 = vpack.c.b16 %v4313, %v4311
  %v4594 = vpack.c.b16 %v4316, %v4314
  %v4595 = vpack.c.b16 %v4317, %v4315
  %v4596 = vpack.c.b16 %v4320, %v4318
  %v4597 = vpack.c.b16 %v4321, %v4319
  %v4598 = vpack.c.b16 %v4324, %v4322
  %v4599 = vpack.c.b16 %v4325, %v4323
  %v4600 = vpack.c.b16 %v4328, %v4326
  %v4601 = vpack.c.b16 %v4329, %v4327
  %v4602 = vpack.c.b16 %v4332, %v4330
  %v4603 = vpack.c.b16 %v4333, %v4331
  %v4604 = vpack.c.b16 %v4336, %v4334
  %v4605 = vpack.c.b16 %v4337, %v4335
  %v4606 = vpack.c.b16 %v4340, %v4338
  %v4607 = vpack.c.b16 %v4341, %v4339
  %v4608 = vpack.c.b16 %v4344, %v4342
  %v4609 = vpack.c.b16 %v4345, %v4343
  %v4610 = vpack.c.b16 %v4348, %v4346
  %v4611 = vpack.c.b16 %v4349, %v4347
  %v4612 = vpack.c.b16 %v4352, %v4350
  %v4613 = vpack.c.b16 %v4353, %v4351
  %v4614 = vpack.c.b16 %v4356, %v4354
  %v4615 = vpack.c.b16 %v4357, %v4355
  %v4616 = vpack.c.b16 %v4360, %v4358
  %v4617 = vpack.c.b16 %v4361, %v4359
  %v4618 = vpack.c.b16 %v4364, %v4362
  %v4619 = vpack.c.b16 %v4365, %v4363
  %v4620 = vpack.c.b16 %v4368, %v4366
  %v4621 = vpack.c.b16 %v4369, %v4367
  %v4622 = vpack.c.b16 %v4372, %v4370
  %v4623 = vpack.c.b16 %v4373, %v4371
  %v4624 = vpack.c.b16 %v4376, %v4374
  %v4625 = vpack.c.b16 %v4377, %v4375
  %v4626 = vpack.c.b16 %v4380, %v4378
  %v4627 = vpack.c.b16 %v4381, %v4379
  %v4628 = vpack.c.b16 %v4384, %v4382
  %v4629 = vpack.c.b16 %v4385, %v4383
  %v4630 = vpack.c.b16 %v4388, %v4386
  %v4631 = vpack.c.b16 %v4389, %v4387
  %v4632 = vpack.c.b16 %v4392, %v4390
  %v4633 = vpack.c.b16 %v4393, %v4391
  %v4634 = vpack.c.b16 %v4396, %v4394
  %v4635 = vpack.c.b16 %v4397, %v4395
  %v4636 = vpack.c.b16 %v4400, %v4398
  %v4637 = vpack.c.b16 %v4401, %v4399
  %v4638 = vpack.c.b16 %v4404, %v4402
  %v4639 = vpack.c.b16 %v4405, %v4403
  %v4640 = vpack.c.b16 %v4408, %v4406
  %v4641 = vpack.c.b16 %v4409, %v4407
  %v4642 = vpack.c.b16 %v4412, %v4410
  %v4643 = vpack.c.b16 %v4413, %v4411
  %v4644 = vpack.c.b16 %v4416, %v4414
  %v4645 = vpack.c.b16 %v4417, %v4415
  %v4646 = vpack.c.b16 %v4420, %v4418
  %v4647 = vpack.c.b16 %v4421, %v4419
  %v4648 = vpack.c.b16 %v4424, %v4422
  %v4649 = vpack.c.b16 %v4425, %v4423
  %v4650 = vpack.c.b16 %v4428, %v4426
  %v4651 = vpack.c.b16 %v4429, %v4427
  %v4652 = vpack.c.b16 %v4432, %v4430
  %v4653 = vpack.c.b16 %v4433, %v4431
  %v4654 = vpack.c.b16 %v4436, %v4434
  %v4655 = vpack.c.b16 %v4437, %v4435
  %v4656 = vpack.c.b16 %v4440, %v4438
  %v4657 = vpack.c.b16 %v4441, %v4439
  %v4658 = vpack.c.b16 %v4444, %v4442
  %v4659 = vpack.c.b16 %v4445, %v4443
  %v4660 = vpack.c.b16 %v4448, %v4446
  %v4661 = vpack.c.b16 %v4449, %v4447
  %v4662 = vpack.c.b16 %v4452, %v4450
  %v4663 = vpack.c.b16 %v4453, %v4451
  %v4664 = vpack.c.b16 %v4456, %v4454
  %v4665 = vpack.c.b16 %v4457, %v4455
  %v4666 = vpack.c.b16 %v4460, %v4458
  %v4667 = vpack.c.b16 %v4461, %v4459
  %v4668 = vpack.c.b16 %v4464, %v4462
  %v4669 = vpack.c.b16 %v4465, %v4463
  %v4670 = vpack.c.b16 %v4468, %v4466
  %v4671 = vpack.c.b16 %v4469, %v4467
  %v4672 = vpack.c.b16 %v4472, %v4470
  %v4673 = vpack.c.b16 %v4473, %v4471
  %v4674 = vpack.c.b16 %v4476, %v4474
  %v4675 = vpack.c.b16 %v4477, %v4475
  %v4676 = vpack.c.b16 %v4480, %v4478
  %v4677 = vpack.c.b16 %v4481, %v4479
  %v4678 = vpack.c.b16 %v4484, %v4482
  %v4679 = vpack.c.b16 %v4485, %v4483
  %v4680 = vpack.c.b16 %v4488, %v4486
  %v4681 = vpack.c.b16 %v4489, %v4487
  %v4682 = vpack.c.b16 %v4492, %v4490
  %v4683 = vpack.c.b16 %v4493, %v4491
  %v4684 = vpack.c.b16 %v4496, %v4494
  %v4685 = vpack.c.b16 %v4497, %v4495
  %v4686 = vpack.c.b16 %v4500, %v4498
  %v4687 = vpack.c.b16 %v4501, %v4499
  %v4688 = vpack.c.b16 %v4504, %v4502
  %v4689 = vpack.c.b16 %v4505, %v4503
  %v4690 = vpack.c.b16 %v4508, %v4506
  %v4691 = vpack.c.b16 %v4509, %v4507
  %v4692 = vpack.c.b16 %v4512, %v4510
  %v4693 = vpack.c.b16 %v4513, %v4511
  %v4694 = vpack.c.b16 %v4516, %v4514
  %v4695 = vpack.c.b16 %v4517, %v4515
  %v4696 = vpack.c.b16 %v4520, %v4518
  %v4697 = vpack.c.b16 %v4521, %v4519
  %v4698 = vpack.c.b16 %v4524, %v4522
  %v4699 = vpack.c.b16 %v4525, %v4523
  %v4700 = vpack.c.b16 %v4528, %v4526
  %v4701 = vpack.c.b16 %v4529, %v4527
  %v4702 = vpack.c.b16 %v4532, %v4530
  %v4703 = vpack.c.b16 %v4533, %v4531
  %v4704 = vpack.c.b16 %v4536, %v4534
  %v4705 = vpack.c.b16 %v4537, %v4535
  %v4706 = vpack.c.b16 %v4540, %v4538
  %v4707 = vpack.c.b16 %v4541, %v4539
  %v4708 = vpack.c.b16 %v4544, %v4542
  %v4709 = vpack.c.b16 %v4545, %v4543
  %v4710 = vpack.c.b16 %v4548, %v4546
  %v4711 = vpack.c.b16 %v4549, %v4547
  %v4712 = vpack.c.b16 %v4552, %v4550
  %v4713 = vpack.c.b16 %v4553, %v4551
  %v4714 = vpack.c.b16 %v4556, %v4554
  %v4715 = vpack.c.b16 %v4557, %v4555
  %v4716 = vpack.c.b16 %v4560, %v4558
  %v4717 = vpack.c.b16 %v4561, %v4559
  %v4718 = vpack.c.b16 %v4564, %v4562
  %v4719 = vpack.c.b16 %v4565, %v4563
  %v4720 = vpack.c.b16 %v4568, %v4566
  %v4721 = vpack.c.b16 %v4569, %v4567
  %v4722 = vpack.c.b16 %v4572, %v4570
  %v4723 = vpack.c.b16 %v4573, %v4571
  %v4724 = vpack.c.b16 %v4576, %v4574
  %v4725 = vpack.c.b16 %v4577, %v4575
  %v4726 = vpack.c.b16 %v4580, %v4578
  %v4727 = vpack.c.b16 %v4581, %v4579
  %v4728 = vpack.c.b16 %v4584, %v4582
  %v4729 = vpack.c.b16 %v4585, %v4583
  %4874 = vmatpush.bf16.msra.mxu0 %v4600
  %4875 = vmatpush.bf16.msra.mxu0 %v4598
  %4876 = vmatpush.bf16.msra.mxu0 %v4596
  %4877 = vmatpush.bf16.msra.mxu0 %v4594
  %4878 = vmatpush.bf16.msra.mxu0 %v4592
  %4879 = vmatpush.bf16.msra.mxu0 %v4590
  %4880 = vmatpush.bf16.msra.mxu0 %v4588
  %4881 = vmatpush.bf16.msra.mxu0 %v4586
  %4882 = vmatmul.bf16.gmra.mxu0 %v3995
  %v4883 = vpop.f32.mrf.mxu0
  %v4884 = vadd.f32 %v4150, %v4883
  %v4885 = vpop.f32.mrf.mxu0
  %4886 = vdwg.mxu0
  %4887 = vmatpush.bf16.msra.mxu0 %v4616
  %4888 = vmatpush.bf16.msra.mxu0 %v4614
  %4889 = vmatpush.bf16.msra.mxu0 %v4612
  %4890 = vmatpush.bf16.msra.mxu0 %v4610
  %4891 = vmatpush.bf16.msra.mxu0 %v4608
  %4892 = vmatpush.bf16.msra.mxu0 %v4606
  %4893 = vmatpush.bf16.msra.mxu0 %v4604
  %4894 = vmatpush.bf16.msra.mxu0 %v4602
  %4895 = vmatmul.bf16.gmra.mxu0 %v3996
  %v4896 = vpop.f32.mrf.mxu0
  %v4897 = vadd.f32 %v4884, %v4896
  %v4898 = vpop.f32.mrf.mxu0
  %4899 = vdwg.mxu0
  %4900 = vmatpush.bf16.msra.mxu0 %v4632
  %4901 = vmatpush.bf16.msra.mxu0 %v4630
  %4902 = vmatpush.bf16.msra.mxu0 %v4628
  %4903 = vmatpush.bf16.msra.mxu0 %v4626
  %4904 = vmatpush.bf16.msra.mxu0 %v4624
  %4905 = vmatpush.bf16.msra.mxu0 %v4622
  %4906 = vmatpush.bf16.msra.mxu0 %v4620
  %4907 = vmatpush.bf16.msra.mxu0 %v4618
  %4908 = vmatmul.bf16.gmra.mxu0 %v3997
  %v4909 = vpop.f32.mrf.mxu0
  %v4910 = vadd.f32 %v4897, %v4909
  %v4911 = vpop.f32.mrf.mxu0
  %4912 = vdwg.mxu0
  %4913 = vmatpush.bf16.msra.mxu0 %v4648
  %4914 = vmatpush.bf16.msra.mxu0 %v4646
  %4915 = vmatpush.bf16.msra.mxu0 %v4644
  %4916 = vmatpush.bf16.msra.mxu0 %v4642
  %4917 = vmatpush.bf16.msra.mxu0 %v4640
  %4918 = vmatpush.bf16.msra.mxu0 %v4638
  %4919 = vmatpush.bf16.msra.mxu0 %v4636
  %4920 = vmatpush.bf16.msra.mxu0 %v4634
  %4921 = vmatmul.bf16.gmra.mxu0 %v3998
  %v4922 = vpop.f32.mrf.mxu0
  %v4923 = vadd.f32 %v4910, %v4922
  %v4924 = vpop.f32.mrf.mxu0
  %4925 = vdwg.mxu0
  %4926 = vmatpush.bf16.msra.mxu0 %v4664
  %4927 = vmatpush.bf16.msra.mxu0 %v4662
  %4928 = vmatpush.bf16.msra.mxu0 %v4660
  %4929 = vmatpush.bf16.msra.mxu0 %v4658
  %4930 = vmatpush.bf16.msra.mxu0 %v4656
  %4931 = vmatpush.bf16.msra.mxu0 %v4654
  %4932 = vmatpush.bf16.msra.mxu0 %v4652
  %4933 = vmatpush.bf16.msra.mxu0 %v4650
  %4934 = vmatmul.bf16.gmra.mxu0 %v3999
  %v4935 = vpop.f32.mrf.mxu0
  %v4936 = vadd.f32 %v4923, %v4935
  %v4937 = vpop.f32.mrf.mxu0
  %4938 = vdwg.mxu0
  %4939 = vmatpush.bf16.msra.mxu0 %v4680
  %4940 = vmatpush.bf16.msra.mxu0 %v4678
  %4941 = vmatpush.bf16.msra.mxu0 %v4676
  %4942 = vmatpush.bf16.msra.mxu0 %v4674
  %4943 = vmatpush.bf16.msra.mxu0 %v4672
  %4944 = vmatpush.bf16.msra.mxu0 %v4670
  %4945 = vmatpush.bf16.msra.mxu0 %v4668
  %4946 = vmatpush.bf16.msra.mxu0 %v4666
  %4947 = vmatmul.bf16.gmra.mxu0 %v4000
  %v4948 = vpop.f32.mrf.mxu0
  %v4949 = vadd.f32 %v4936, %v4948
  %v4950 = vpop.f32.mrf.mxu0
  %4951 = vdwg.mxu0
  %4952 = vmatpush.bf16.msra.mxu0 %v4696
  %4953 = vmatpush.bf16.msra.mxu0 %v4694
  %4954 = vmatpush.bf16.msra.mxu0 %v4692
  %4955 = vmatpush.bf16.msra.mxu0 %v4690
  %4956 = vmatpush.bf16.msra.mxu0 %v4688
  %4957 = vmatpush.bf16.msra.mxu0 %v4686
  %4958 = vmatpush.bf16.msra.mxu0 %v4684
  %4959 = vmatpush.bf16.msra.mxu0 %v4682
  %4960 = vmatmul.bf16.gmra.mxu0 %v4001
  %v4961 = vpop.f32.mrf.mxu0
  %v4962 = vadd.f32 %v4949, %v4961
  %v4963 = vpop.f32.mrf.mxu0
  %4964 = vdwg.mxu0
  %4965 = vmatpush.bf16.msra.mxu0 %v4712
  %4966 = vmatpush.bf16.msra.mxu0 %v4710
  %4967 = vmatpush.bf16.msra.mxu0 %v4708
  %4968 = vmatpush.bf16.msra.mxu0 %v4706
  %4969 = vmatpush.bf16.msra.mxu0 %v4704
  %4970 = vmatpush.bf16.msra.mxu0 %v4702
  %4971 = vmatpush.bf16.msra.mxu0 %v4700
  %4972 = vmatpush.bf16.msra.mxu0 %v4698
  %4973 = vmatmul.bf16.gmra.mxu0 %v4002
  %v4974 = vpop.f32.mrf.mxu0
  %v4975 = vadd.f32 %v4962, %v4974
  %v4976 = vpop.f32.mrf.mxu0
  %4977 = vdwg.mxu0
  %4978 = vmatpush.bf16.msra.mxu0 %v4728
  %4979 = vmatpush.bf16.msra.mxu0 %v4726
  %4980 = vmatpush.bf16.msra.mxu0 %v4724
  %4981 = vmatpush.bf16.msra.mxu0 %v4722
  %4982 = vmatpush.bf16.msra.mxu0 %v4720
  %4983 = vmatpush.bf16.msra.mxu0 %v4718
  %4984 = vmatpush.bf16.msra.mxu0 %v4716
  %4985 = vmatpush.bf16.msra.mxu0 %v4714
  %4986 = vmatmul.bf16.gmra.mxu0 %v4003
  %v4987 = vpop.f32.mrf.mxu0
  %v4988 = vadd.f32 %v4975, %v4987
  %v4989 = vpop.f32.mrf.mxu0
  %4990 = vdwg.mxu0
  %4991 = vmatpush.bf16.msra.mxu0 %v4601
  %4992 = vmatpush.bf16.msra.mxu0 %v4599
  %4993 = vmatpush.bf16.msra.mxu0 %v4597
  %4994 = vmatpush.bf16.msra.mxu0 %v4595
  %4995 = vmatpush.bf16.msra.mxu0 %v4593
  %4996 = vmatpush.bf16.msra.mxu0 %v4591
  %4997 = vmatpush.bf16.msra.mxu0 %v4589
  %4998 = vmatpush.bf16.msra.mxu0 %v4587
  %4999 = vmatmul.bf16.gmra.mxu0 %v3995
  %v5000 = vpop.f32.mrf.mxu0
  %v5001 = vadd.f32 %v4151, %v5000
  %v5002 = vpop.f32.mrf.mxu0
  %5003 = vdwg.mxu0
  %5004 = vmatpush.bf16.msra.mxu0 %v4617
  %5005 = vmatpush.bf16.msra.mxu0 %v4615
  %5006 = vmatpush.bf16.msra.mxu0 %v4613
  %5007 = vmatpush.bf16.msra.mxu0 %v4611
  %5008 = vmatpush.bf16.msra.mxu0 %v4609
  %5009 = vmatpush.bf16.msra.mxu0 %v4607
  %5010 = vmatpush.bf16.msra.mxu0 %v4605
  %5011 = vmatpush.bf16.msra.mxu0 %v4603
  %5012 = vmatmul.bf16.gmra.mxu0 %v3996
  %v5013 = vpop.f32.mrf.mxu0
  %v5014 = vadd.f32 %v5001, %v5013
  %v5015 = vpop.f32.mrf.mxu0
  %5016 = vdwg.mxu0
  %5017 = vmatpush.bf16.msra.mxu0 %v4633
  %5018 = vmatpush.bf16.msra.mxu0 %v4631
  %5019 = vmatpush.bf16.msra.mxu0 %v4629
  %5020 = vmatpush.bf16.msra.mxu0 %v4627
  %5021 = vmatpush.bf16.msra.mxu0 %v4625
  %5022 = vmatpush.bf16.msra.mxu0 %v4623
  %5023 = vmatpush.bf16.msra.mxu0 %v4621
  %5024 = vmatpush.bf16.msra.mxu0 %v4619
  %5025 = vmatmul.bf16.gmra.mxu0 %v3997
  %v5026 = vpop.f32.mrf.mxu0
  %v5027 = vadd.f32 %v5014, %v5026
  %v5028 = vpop.f32.mrf.mxu0
  %5029 = vdwg.mxu0
  %5030 = vmatpush.bf16.msra.mxu0 %v4649
  %5031 = vmatpush.bf16.msra.mxu0 %v4647
  %5032 = vmatpush.bf16.msra.mxu0 %v4645
  %5033 = vmatpush.bf16.msra.mxu0 %v4643
  %5034 = vmatpush.bf16.msra.mxu0 %v4641
  %5035 = vmatpush.bf16.msra.mxu0 %v4639
  %5036 = vmatpush.bf16.msra.mxu0 %v4637
  %5037 = vmatpush.bf16.msra.mxu0 %v4635
  %5038 = vmatmul.bf16.gmra.mxu0 %v3998
  %v5039 = vpop.f32.mrf.mxu0
  %v5040 = vadd.f32 %v5027, %v5039
  %v5041 = vpop.f32.mrf.mxu0
  %5042 = vdwg.mxu0
  %5043 = vmatpush.bf16.msra.mxu0 %v4665
  %5044 = vmatpush.bf16.msra.mxu0 %v4663
  %5045 = vmatpush.bf16.msra.mxu0 %v4661
  %5046 = vmatpush.bf16.msra.mxu0 %v4659
  %5047 = vmatpush.bf16.msra.mxu0 %v4657
  %5048 = vmatpush.bf16.msra.mxu0 %v4655
  %5049 = vmatpush.bf16.msra.mxu0 %v4653
  %5050 = vmatpush.bf16.msra.mxu0 %v4651
  %5051 = vmatmul.bf16.gmra.mxu0 %v3999
  %v5052 = vpop.f32.mrf.mxu0
  %v5053 = vadd.f32 %v5040, %v5052
  %v5054 = vpop.f32.mrf.mxu0
  %5055 = vdwg.mxu0
  %5056 = vmatpush.bf16.msra.mxu0 %v4681
  %5057 = vmatpush.bf16.msra.mxu0 %v4679
  %5058 = vmatpush.bf16.msra.mxu0 %v4677
  %5059 = vmatpush.bf16.msra.mxu0 %v4675
  %5060 = vmatpush.bf16.msra.mxu0 %v4673
  %5061 = vmatpush.bf16.msra.mxu0 %v4671
  %5062 = vmatpush.bf16.msra.mxu0 %v4669
  %5063 = vmatpush.bf16.msra.mxu0 %v4667
  %5064 = vmatmul.bf16.gmra.mxu0 %v4000
  %v5065 = vpop.f32.mrf.mxu0
  %v5066 = vadd.f32 %v5053, %v5065
  %v5067 = vpop.f32.mrf.mxu0
  %5068 = vdwg.mxu0
  %5069 = vmatpush.bf16.msra.mxu0 %v4697
  %5070 = vmatpush.bf16.msra.mxu0 %v4695
  %5071 = vmatpush.bf16.msra.mxu0 %v4693
  %5072 = vmatpush.bf16.msra.mxu0 %v4691
  %5073 = vmatpush.bf16.msra.mxu0 %v4689
  %5074 = vmatpush.bf16.msra.mxu0 %v4687
  %5075 = vmatpush.bf16.msra.mxu0 %v4685
  %5076 = vmatpush.bf16.msra.mxu0 %v4683
  %5077 = vmatmul.bf16.gmra.mxu0 %v4001
  %v5078 = vpop.f32.mrf.mxu0
  %v5079 = vadd.f32 %v5066, %v5078
  %v5080 = vpop.f32.mrf.mxu0
  %5081 = vdwg.mxu0
  %5082 = vmatpush.bf16.msra.mxu0 %v4713
  %5083 = vmatpush.bf16.msra.mxu0 %v4711
  %5084 = vmatpush.bf16.msra.mxu0 %v4709
  %5085 = vmatpush.bf16.msra.mxu0 %v4707
  %5086 = vmatpush.bf16.msra.mxu0 %v4705
  %5087 = vmatpush.bf16.msra.mxu0 %v4703
  %5088 = vmatpush.bf16.msra.mxu0 %v4701
  %5089 = vmatpush.bf16.msra.mxu0 %v4699
  %5090 = vmatmul.bf16.gmra.mxu0 %v4002
  %v5091 = vpop.f32.mrf.mxu0
  %v5092 = vadd.f32 %v5079, %v5091
  %v5093 = vpop.f32.mrf.mxu0
  %5094 = vdwg.mxu0
  %5095 = vmatpush.bf16.msra.mxu0 %v4729
  %5096 = vmatpush.bf16.msra.mxu0 %v4727
  %5097 = vmatpush.bf16.msra.mxu0 %v4725
  %5098 = vmatpush.bf16.msra.mxu0 %v4723
  %5099 = vmatpush.bf16.msra.mxu0 %v4721
  %5100 = vmatpush.bf16.msra.mxu0 %v4719
  %5101 = vmatpush.bf16.msra.mxu0 %v4717
  %5102 = vmatpush.bf16.msra.mxu0 %v4715
  %5103 = vmatmul.bf16.gmra.mxu0 %v4003
  %v5104 = vpop.f32.mrf.mxu0
  %v5105 = vadd.f32 %v5092, %v5104
  %v5106 = vpop.f32.mrf.mxu0
  %5107 = vdwg.mxu0
  %v5108 = vmax.f32 %v4988, 0.0
  %v5109 = vmax.f32 %v5105, 0.0
  %v5110 = vld [vmem:[%s18] sm:$0xff]
  %5112 = vset.pattern.permute.xlu0 0
  %5113 = vperm.xlu0 %5112, %v5110
  %v5114 = vpop.permute.xlu0 %5113
  %v5116 = vmul.f32 %v5108, %v5114
  %v5117 = vmul.f32 %v5109, %v5114
  %v5118 = vrot.slane %v5116, 4
  %v5119 = vadd.f32 %v5116, %v5118
  %v5120 = vrot.slane %v5119, 2
  %v5121 = vadd.f32 %v5119, %v5120
  %v5122 = vrot.slane %v5121, 1
  %v5123 = vadd.f32 %v5121, %v5122
  %v5124 = vrot.slane %v5117, 4
  %v5125 = vadd.f32 %v5117, %v5124
  %v5126 = vrot.slane %v5125, 2
  %v5127 = vadd.f32 %v5125, %v5126
  %v5128 = vrot.slane %v5127, 1
  %v5129 = vadd.f32 %v5127, %v5128
  %v5130 = vpack.c.bf16 %v5123, %v5123
  %v5131 = vpack.c.bf16 %v5129, %v5129
  %v5132 = vld [vmem:[%s19] sm:$0xf]
  %v5133 = vld [vmem:[%s19 + $0x4] sm:$0xf]
  %v5134 = vld [vmem:[%s19 + $0x8] sm:$0xf]
  %v5135 = vld [vmem:[%s19 + $0xc] sm:$0xf]
  %v5136 = vld [vmem:[%s19 + $0x10] sm:$0xf]
  %v5137 = vld [vmem:[%s19 + $0x14] sm:$0xf]
  %v5138 = vld [vmem:[%s19 + $0x18] sm:$0xf]
  %v5139 = vld [vmem:[%s19 + $0x1c] sm:$0xf]
  %v5140 = vld [vmem:[%s19 + $0x20] sm:$0xf]
  %v5141 = vld [vmem:[%s19 + $0x24] sm:$0xf]
  %v5142 = vld [vmem:[%s19 + $0x28] sm:$0xf]
  %v5143 = vld [vmem:[%s19 + $0x2c] sm:$0xf]
  %v5144 = vld [vmem:[%s19 + $0x30] sm:$0xf]
  %v5145 = vld [vmem:[%s19 + $0x34] sm:$0xf]
  %v5146 = vld [vmem:[%s19 + $0x38] sm:$0xf]
  %v5147 = vld [vmem:[%s19 + $0x3c] sm:$0xf]
  %v5148 = vld [vmem:[%s19 + $0x40] sm:$0xf]
  %v5149 = vld [vmem:[%s19 + $0x44] sm:$0xf]
  %v5150 = vld [vmem:[%s19 + $0x48] sm:$0xf]
  %v5151 = vld [vmem:[%s19 + $0x4c] sm:$0xf]
  %v5152 = vld [vmem:[%s19 + $0x50] sm:$0xf]
  %v5153 = vld [vmem:[%s19 + $0x54] sm:$0xf]
  %v5154 = vld [vmem:[%s19 + $0x58] sm:$0xf]
  %v5155 = vld [vmem:[%s19 + $0x5c] sm:$0xf]
  %v5156 = vld [vmem:[%s19 + $0x60] sm:$0xf]
  %v5157 = vld [vmem:[%s19 + $0x64] sm:$0xf]
  %v5158 = vld [vmem:[%s19 + $0x68] sm:$0xf]
  %v5159 = vld [vmem:[%s19 + $0x6c] sm:$0xf]
  %v5160 = vld [vmem:[%s19 + $0x70] sm:$0xf]
  %v5161 = vld [vmem:[%s19 + $0x74] sm:$0xf]
  %v5162 = vld [vmem:[%s19 + $0x78] sm:$0xf]
  %v5163 = vld [vmem:[%s19 + $0x7c] sm:$0xf]
  %v5164 = vld [vmem:[%s20] sm:$0x1]
  %v5197 = vunpack.c.l.b16 %v5132
  %v5198 = vunpack.c.l.b16 %v5133
  %v5199 = vunpack.c.l.b16 %v5134
  %v5200 = vunpack.c.l.b16 %v5135
  %v5201 = vunpack.c.l.b16 %v5136
  %v5202 = vunpack.c.l.b16 %v5137
  %v5203 = vunpack.c.l.b16 %v5138
  %v5204 = vunpack.c.l.b16 %v5139
  %v5205 = vunpack.c.l.b16 %v5140
  %v5206 = vunpack.c.l.b16 %v5141
  %v5207 = vunpack.c.l.b16 %v5142
  %v5208 = vunpack.c.l.b16 %v5143
  %v5209 = vunpack.c.l.b16 %v5144
  %v5210 = vunpack.c.l.b16 %v5145
  %v5211 = vunpack.c.l.b16 %v5146
  %v5212 = vunpack.c.l.b16 %v5147
  %v5213 = vunpack.c.l.b16 %v5148
  %v5214 = vunpack.c.l.b16 %v5149
  %v5215 = vunpack.c.l.b16 %v5150
  %v5216 = vunpack.c.l.b16 %v5151
  %v5217 = vunpack.c.l.b16 %v5152
  %v5218 = vunpack.c.l.b16 %v5153
  %v5219 = vunpack.c.l.b16 %v5154
  %v5220 = vunpack.c.l.b16 %v5155
  %v5221 = vunpack.c.l.b16 %v5156
  %v5222 = vunpack.c.l.b16 %v5157
  %v5223 = vunpack.c.l.b16 %v5158
  %v5224 = vunpack.c.l.b16 %v5159
  %v5225 = vunpack.c.l.b16 %v5160
  %v5226 = vunpack.c.l.b16 %v5161
  %v5227 = vunpack.c.l.b16 %v5162
  %v5228 = vunpack.c.l.b16 %v5163
  %v5229 = vpack.c.b16 %v5198, %v5197
  %v5230 = vpack.c.b16 %v5200, %v5199
  %v5231 = vpack.c.b16 %v5202, %v5201
  %v5232 = vpack.c.b16 %v5204, %v5203
  %v5233 = vpack.c.b16 %v5206, %v5205
  %v5234 = vpack.c.b16 %v5208, %v5207
  %v5235 = vpack.c.b16 %v5210, %v5209
  %v5236 = vpack.c.b16 %v5212, %v5211
  %v5237 = vpack.c.b16 %v5214, %v5213
  %v5238 = vpack.c.b16 %v5216, %v5215
  %v5239 = vpack.c.b16 %v5218, %v5217
  %v5240 = vpack.c.b16 %v5220, %v5219
  %v5241 = vpack.c.b16 %v5222, %v5221
  %v5242 = vpack.c.b16 %v5224, %v5223
  %v5243 = vpack.c.b16 %v5226, %v5225
  %v5244 = vpack.c.b16 %v5228, %v5227
  %5261 = vmatpush.bf16.msra.mxu0 %v5236
  %5262 = vmatpush.bf16.msra.mxu0 %v5235
  %5263 = vmatpush.bf16.msra.mxu0 %v5234
  %5264 = vmatpush.bf16.msra.mxu0 %v5233
  %5265 = vmatpush.bf16.msra.mxu0 %v5232
  %5266 = vmatpush.bf16.msra.mxu0 %v5231
  %5267 = vmatpush.bf16.msra.mxu0 %v5230
  %5268 = vmatpush.bf16.msra.mxu0 %v5229
  %5269 = vmatmul.bf16.gmra.mxu0 %v5130
  %v5270 = vpop.f32.mrf.mxu0
  %v5271 = vadd.f32 %v5164, %v5270
  %v5272 = vpop.f32.mrf.mxu0
  %5273 = vdwg.mxu0
  %5274 = vmatpush.bf16.msra.mxu0 %v5244
  %5275 = vmatpush.bf16.msra.mxu0 %v5243
  %5276 = vmatpush.bf16.msra.mxu0 %v5242
  %5277 = vmatpush.bf16.msra.mxu0 %v5241
  %5278 = vmatpush.bf16.msra.mxu0 %v5240
  %5279 = vmatpush.bf16.msra.mxu0 %v5239
  %5280 = vmatpush.bf16.msra.mxu0 %v5238
  %5281 = vmatpush.bf16.msra.mxu0 %v5237
  %5282 = vmatmul.bf16.gmra.mxu0 %v5131
  %v5283 = vpop.f32.mrf.mxu0
  %v5284 = vadd.f32 %v5271, %v5283
  %v5285 = vpop.f32.mrf.mxu0
  %5286 = vdwg.mxu0
  %vm5287 = vcmask 253952
  %5288 = vst.msk [vmem:[%s21] sm:$0x1] %vm5287, %v5284
  // Predicated region
  $region86: #{mobileone_forward.1} parent=0 // pred_check
    _
  $region87: #{mobileone_forward.1} parent=0 // pred_check_branch
    %5290 = sbr.rel (0) target = $region89
  $region88: #{mobileone_forward.1} parent=0 // pred_region
    _
  $region89: #{mobileone_forward.1} parent=0 // pred_fallthru
    _
  // Predicated region
  $region90: #{mobileone_forward.1} parent=0 // pred_check
    _
  $region91: #{mobileone_forward.1} parent=0 // pred_check_branch
    %5292 = sbr.rel (0) target = $region93
  $region92: #{mobileone_forward.1} parent=0 // pred_region
    _
  $region93: #{mobileone_forward.1} parent=0 // pred_fallthru
    _

</llo_original>
